<compile_context>
chip_gen: v7x
topology: tpu7x:2x2x1
jax: 0.10.0
libtpu: 0.0.40
codegen_flags: <defaults>
</compile_context>

<pallas_src>
import functools
import numpy as np
import jax
import jax.numpy as jnp
from jax.experimental import pallas as pl
from jax.experimental.pallas import tpu as pltpu


# ----------------------------------------------------------------------------
# Fused kernel: embedding + positional encoding + all encoder-layer applications
# ----------------------------------------------------------------------------
def _saits_fused_kernel(x_ref, m_ref, w_emb_ref, b_emb_ref, pos_ref,
                        w_qkv_ref, w_o_ref, w1_ref, b1_ref, w2_ref, vecs_ref,
                        out_ref, attn_ref, *,
                        d_feature, n_head, d_k, d_v,
                        n_layers, n_group_inner_layers, diag_mask):
    x = x_ref[0]                       # (T, F)
    m = m_ref[0]                       # (T, F)
    w_emb = w_emb_ref[...]             # (2F, D)
    T = x.shape[0]
    F = d_feature
    H = n_head

    # ---- embedding_1(concat(X, mask)) + positional table
    # concat(X, mask) @ W == X @ W[:F] + mask @ W[F:]
    h = (jnp.dot(x, w_emb[:F, :], preferred_element_type=jnp.float32)
         + jnp.dot(m, w_emb[F:, :], preferred_element_type=jnp.float32)
         + b_emb_ref[...] + pos_ref[...])                       # (T, D)

    # ---- diagonal attention mask as an additive bias, hoisted (shared by all
    # heads / layers / applications):  masked_fill(eye(T)==1, -1e9)
    if diag_mask:
        row = jax.lax.broadcasted_iota(jnp.int32, (T, T), 0)
        col = jax.lax.broadcasted_iota(jnp.int32, (T, T), 1)
        diag_bias = jnp.where(row == col, jnp.float32(-1e9), jnp.float32(0.0))
    else:
        diag_bias = jnp.zeros((T, T), jnp.float32)

    scale = 1.0 / (d_k ** 0.5)         # ScaledDotProductAttention temperature
    n_apps = n_layers * n_group_inner_layers
    app = 0
    for l in range(n_layers):          # static unroll over stacked layers
        w_qkv = w_qkv_ref[l]           # (D, H*(2*d_k + d_v))
        w_o = w_o_ref[l]               # (H, d_v, D)
        w1 = w1_ref[l]                 # (D, d_inner)
        b1 = b1_ref[l]                 # (1, d_inner)
        w2 = w2_ref[l]                 # (d_inner, D)
        vecs = vecs_ref[l]             # (5, D): ln1_g, ln1_b, ln2_g, ln2_b, b2
        ln1_g, ln1_b = vecs[0:1, :], vecs[1:2, :]
        ln2_g, ln2_b = vecs[2:3, :], vecs[3:4, :]
        b2 = vecs[4:5, :]

        for _ in range(n_group_inner_layers):       # weight-shared applications
            is_last_app = (app == n_apps - 1)

            # ---- pre-LN before attention (nn.LayerNorm default eps=1e-5)
            mu = jnp.mean(h, axis=-1, keepdims=True)
            var = jnp.mean((h - mu) ** 2, axis=-1, keepdims=True)
            h_ln = (h - mu) * jax.lax.rsqrt(var + 1e-5) * ln1_g + ln1_b

            # ---- fused Q/K/V projection (no bias), then split per head
            qkv = jnp.dot(h_ln, w_qkv, preferred_element_type=jnp.float32)
            q = qkv[:, :H * d_k]
            k = qkv[:, H * d_k:2 * H * d_k]
            v = qkv[:, 2 * H * d_k:2 * H * d_k + H * d_v]
            qh = jnp.stack([q[:, i * d_k:(i + 1) * d_k] for i in range(H)], 0)  # (H,T,dk)
            kh = jnp.stack([k[:, i * d_k:(i + 1) * d_k] for i in range(H)], 0)  # (H,T,dk)
            vh = jnp.stack([v[:, i * d_v:(i + 1) * d_v] for i in range(H)], 0)  # (H,T,dv)

            # ---- head-batched scaled-dot-product attention with diagonal mask
            scores = jnp.einsum('htd,hsd->hts', qh * scale, kh,
                                preferred_element_type=jnp.float32)
            scores = scores + diag_bias
            scores = scores - jnp.max(scores, axis=-1, keepdims=True)
            p = jnp.exp(scores)
            p = p * pl.reciprocal(jnp.sum(p, axis=-1, keepdims=True), approx=True)

            # Only the final application's attention weights are returned by SAITS.
            if is_last_app:
                attn_ref[0] = p                      # (H, T, T)

            ctx = jnp.einsum('hts,hsd->htd', p, vh,
                             preferred_element_type=jnp.float32)        # (H,T,dv)
            # Output projection (concat-then-fc): w_o stored as (H, d_v, D), so the
            # head ordering matches slicing wo[h*d_v:(h+1)*d_v] of the flat weight.
            proj = jnp.einsum('htd,hdm->htm', ctx, w_o,
                              preferred_element_type=jnp.float32)       # (H,T,D)
            y = jnp.sum(proj, axis=0) + h            # residual around attention

            # ---- position-wise FFN with pre-LN (SAITS uses eps=1e-6 here)
            mu2 = jnp.mean(y, axis=-1, keepdims=True)
            var2 = jnp.mean((y - mu2) ** 2, axis=-1, keepdims=True)
            y_ln = (y - mu2) * jax.lax.rsqrt(var2 + 1e-6) * ln2_g + ln2_b
            h1 = jnp.maximum(
                jnp.dot(y_ln, w1, preferred_element_type=jnp.float32) + b1, 0.0)
            h = jnp.dot(h1, w2, preferred_element_type=jnp.float32) + b2 + y
            app += 1

    out_ref[0] = h


def saits_forward(X, missing_mask, params, pos_table, *, n_head, d_k, d_v,
                  n_group_inner_layers, diag_mask=True):
    B, T, F = X.shape
    D = params["w_emb"].shape[1]
    L = params["w_qkv"].shape[0]
    n_qkv = params["w_qkv"].shape[2]
    d_inner = params["w1"].shape[2]

    kernel = functools.partial(
        _saits_fused_kernel, d_feature=F, n_head=n_head, d_k=d_k, d_v=d_v,
        n_layers=L, n_group_inner_layers=n_group_inner_layers, diag_mask=diag_mask)

    full = lambda nd: (lambda b: (0,) * nd)   # whole-array block, fetched once

    out, attn = pl.pallas_call(
        kernel,
        out_shape=(jax.ShapeDtypeStruct((B, T, D), jnp.float32),
                   jax.ShapeDtypeStruct((B, n_head, T, T), jnp.float32)),
        grid=(B,),
        in_specs=[
            pl.BlockSpec((1, T, F), lambda b: (b, 0, 0)),          # X
            pl.BlockSpec((1, T, F), lambda b: (b, 0, 0)),          # missing_mask
            pl.BlockSpec((2 * F, D), full(2)),                     # W_emb
            pl.BlockSpec((1, D), full(2)),                         # b_emb
            pl.BlockSpec((T, D), full(2)),                         # pos table
            pl.BlockSpec((L, D, n_qkv), full(3)),                  # stacked Wq|Wk|Wv
            pl.BlockSpec((L, n_head, d_v, D), full(4)),            # stacked W_o
            pl.BlockSpec((L, D, d_inner), full(3)),                # stacked W1
            pl.BlockSpec((L, 1, d_inner), full(3)),                # stacked b1
            pl.BlockSpec((L, d_inner, D), full(3)),                # stacked W2
            pl.BlockSpec((L, 5, D), full(3)),                      # packed LN/b2 vecs
        ],
        out_specs=(pl.BlockSpec((1, T, D), lambda b: (b, 0, 0)),
                   pl.BlockSpec((1, n_head, T, T), lambda b: (b, 0, 0, 0))),
        compiler_params=pltpu.CompilerParams(dimension_semantics=("parallel",)),
    )(X, missing_mask, params["w_emb"], params["b_emb"], pos_table,
      params["w_qkv"], params["w_o"], params["w1"], params["b1"],
      params["w2"], params["vecs"])
    return out, attn


# ----------------------------------------------------------------------------
# Parameter init (stacked layout) + sinusoidal positional table
# ----------------------------------------------------------------------------
def sinusoid_table(n_position, d_hid):
    pos = np.arange(n_position, dtype=np.float64)[:, None]
    hid = np.arange(d_hid)[None, :]
    angle = pos / np.power(10000.0, 2.0 * (hid // 2) / d_hid)
    table = np.array(angle)
    table[:, 0::2] = np.sin(table[:, 0::2])
    table[:, 1::2] = np.cos(table[:, 1::2])
    return jnp.asarray(table, dtype=jnp.float32)


def init_params(key, *, d_feature, d_model, d_inner, n_head, d_k, d_v, n_layers):
    actual_d_feature = 2 * d_feature
    ks = jax.random.split(key, 1 + 6 * n_layers)
    dense = lambda k, s: 0.02 * jax.random.normal(k, s, dtype=jnp.float32)

    w_qkv, w_o, w1, b1, w2, vecs = [], [], [], [], [], []
    for i in range(n_layers):
        kk = ks[1 + 6 * i: 1 + 6 * (i + 1)]
        wq = dense(kk[0], (d_model, n_head * d_k))
        wk = dense(kk[1], (d_model, n_head * d_k))
        wv = dense(kk[2], (d_model, n_head * d_v))
        w_qkv.append(jnp.concatenate([wq, wk, wv], axis=1))
        w_o.append(dense(kk[3], (n_head * d_v, d_model)).reshape(n_head, d_v, d_model))
        w1.append(dense(kk[4], (d_model, d_inner)))
        b1.append(jnp.zeros((1, d_inner), jnp.float32))
        w2.append(dense(kk[5], (d_inner, d_model)))
        # packed per-layer D-width vectors: ln1_g, ln1_b, ln2_g, ln2_b, b2
        vecs.append(jnp.stack([jnp.ones(d_model, jnp.float32),
                               jnp.zeros(d_model, jnp.float32),
                               jnp.ones(d_model, jnp.float32),
                               jnp.zeros(d_model, jnp.float32),
                               jnp.zeros(d_model, jnp.float32)], axis=0))
    return {
        "w_emb": dense(ks[0], (actual_d_feature, d_model)),
        "b_emb": jnp.zeros((1, d_model), jnp.float32),
        "w_qkv": jnp.stack(w_qkv),      # (L, D, H*(2*d_k+d_v))
        "w_o":   jnp.stack(w_o),        # (L, H, d_v, D)
        "w1":    jnp.stack(w1),         # (L, D, d_inner)
        "b1":    jnp.stack(b1),         # (L, 1, d_inner)
        "w2":    jnp.stack(w2),         # (L, d_inner, D)
        "vecs":  jnp.stack(vecs),       # (L, 5, D)
    }


if __name__ == "__main__":
    # Small, SAITS-consistent shapes
    B, d_time, d_feature = 2, 16, 4
    d_model, d_inner = 32, 64
    n_head, d_k, d_v = 2, 16, 16
    n_group_inner_layers = 2            # 2 stacked layers, each applied 2x

    key = jax.random.PRNGKey(0)
    k_x, k_m, k_p = jax.random.split(key, 3)
    X = jax.random.normal(k_x, (B, d_time, d_feature), dtype=jnp.float32)
    missing_mask = (jax.random.uniform(k_m, (B, d_time, d_feature)) > 0.3).astype(jnp.float32)
    X = X * missing_mask                # zero-out missing values as in SAITS preprocessing

    params = init_params(k_p, d_feature=d_feature, d_model=d_model, d_inner=d_inner,
                         n_head=n_head, d_k=d_k, d_v=d_v,
                         n_layers=n_group_inner_layers)
    pos_table = sinusoid_table(d_time, d_model)

    X_tilde_1, attn_weights = saits_forward(
        X, missing_mask, params, pos_table,
        n_head=n_head, d_k=d_k, d_v=d_v,
        n_group_inner_layers=n_group_inner_layers, diag_mask=True)

    jax.block_until_ready((X_tilde_1, attn_weights))
    assert X_tilde_1.shape == (B, d_time, d_model)
    assert attn_weights.shape == (B, n_head, d_time, d_time)
    assert bool(jnp.all(jnp.isfinite(X_tilde_1))) and bool(jnp.all(jnp.isfinite(attn_weights)))
    print("KERNEL_OK")
</pallas_src>

<mosaic_0001>
module attributes {stable_mosaic.version = 11 : i64} {
  func.func @_saits_fused_kernel(%arg0: i32, %arg1: memref<1x16x4xf32, #tpu.memory_space<vmem>>, %arg2: memref<1x16x4xf32, #tpu.memory_space<vmem>>, %arg3: memref<8x32xf32, #tpu.memory_space<vmem>>, %arg4: memref<1x32xf32, #tpu.memory_space<vmem>>, %arg5: memref<16x32xf32, #tpu.memory_space<vmem>>, %arg6: memref<2x32x96xf32, #tpu.memory_space<vmem>>, %arg7: memref<2x2x16x32xf32, #tpu.memory_space<vmem>>, %arg8: memref<2x32x64xf32, #tpu.memory_space<vmem>>, %arg9: memref<2x1x64xf32, #tpu.memory_space<vmem>>, %arg10: memref<2x64x32xf32, #tpu.memory_space<vmem>>, %arg11: memref<2x5x32xf32, #tpu.memory_space<vmem>>, %arg12: memref<1x16x32xf32, #tpu.memory_space<vmem>>, %arg13: memref<1x2x16x16xf32, #tpu.memory_space<vmem>>) attributes {dimension_semantics = [#tpu.dimension_semantics<parallel>], iteration_bounds = array<i64: 2>, scalar_prefetch = 0 : i64, scratch_operands = 0 : i64, tpu.core_type = #tpu.core_type<tc>, window_params = [{transform_indices = @transform_0, window_bounds = array<i64: 1, 16, 4>}, {transform_indices = @transform_1, window_bounds = array<i64: 1, 16, 4>}, {pipeline_mode = #tpu.pipeline_mode<synchronous>, transform_indices = @transform_2, window_bounds = array<i64: 8, 32>}, {pipeline_mode = #tpu.pipeline_mode<synchronous>, transform_indices = @transform_3, window_bounds = array<i64: 1, 32>}, {pipeline_mode = #tpu.pipeline_mode<synchronous>, transform_indices = @transform_4, window_bounds = array<i64: 16, 32>}, {pipeline_mode = #tpu.pipeline_mode<synchronous>, transform_indices = @transform_5, window_bounds = array<i64: 2, 32, 96>}, {pipeline_mode = #tpu.pipeline_mode<synchronous>, transform_indices = @transform_6, window_bounds = array<i64: 2, 2, 16, 32>}, {pipeline_mode = #tpu.pipeline_mode<synchronous>, transform_indices = @transform_7, window_bounds = array<i64: 2, 32, 64>}, {pipeline_mode = #tpu.pipeline_mode<synchronous>, transform_indices = @transform_8, window_bounds = array<i64: 2, 1, 64>}, {pipeline_mode = #tpu.pipeline_mode<synchronous>, transform_indices = @transform_9, window_bounds = array<i64: 2, 64, 32>}, {pipeline_mode = #tpu.pipeline_mode<synchronous>, transform_indices = @transform_10, window_bounds = array<i64: 2, 5, 32>}, {transform_indices = @transform_11, window_bounds = array<i64: 1, 16, 32>}, {transform_indices = @transform_12, window_bounds = array<i64: 1, 2, 16, 16>}]} {
    %c0 = arith.constant 0 : index
    %c0_0 = arith.constant 0 : index
    %c0_1 = arith.constant 0 : index
    %0 = vector.load %arg1[%c0, %c0_0, %c0_1] : memref<1x16x4xf32, #tpu.memory_space<vmem>>, vector<1x16x4xf32>
    %1 = vector.shape_cast %0 : vector<1x16x4xf32> to vector<16x4xf32>
    %c0_2 = arith.constant 0 : index
    %c0_3 = arith.constant 0 : index
    %c0_4 = arith.constant 0 : index
    %2 = vector.load %arg2[%c0_2, %c0_3, %c0_4] : memref<1x16x4xf32, #tpu.memory_space<vmem>>, vector<1x16x4xf32>
    %3 = vector.shape_cast %2 : vector<1x16x4xf32> to vector<16x4xf32>
    %c0_5 = arith.constant 0 : index
    %c0_6 = arith.constant 0 : index
    %4 = vector.load %arg3[%c0_5, %c0_6] : memref<8x32xf32, #tpu.memory_space<vmem>>, vector<8x32xf32>
    %5 = vector.extract_strided_slice %4 {offsets = [0, 0], sizes = [4, 32], strides = [1, 1]} : vector<8x32xf32> to vector<4x32xf32>
    %cst = arith.constant dense<0.000000e+00> : vector<16x32xf32>
    %6 = tpu.matmul %1, %5, %cst {dimension_numbers = #tpu.dot_dimension_numbers<[1], [0], [0], [1], [0, 0, 1, 1], [], []>} : vector<16x4xf32>, vector<4x32xf32>, vector<16x32xf32> -> vector<16x32xf32>
    %7 = vector.extract_strided_slice %4 {offsets = [4, 0], sizes = [4, 32], strides = [1, 1]} : vector<8x32xf32> to vector<4x32xf32>
    %cst_7 = arith.constant dense<0.000000e+00> : vector<16x32xf32>
    %8 = tpu.matmul %3, %7, %cst_7 {dimension_numbers = #tpu.dot_dimension_numbers<[1], [0], [0], [1], [0, 0, 1, 1], [], []>} : vector<16x4xf32>, vector<4x32xf32>, vector<16x32xf32> -> vector<16x32xf32>
    %9 = arith.addf %6, %8 : vector<16x32xf32>
    %c0_8 = arith.constant 0 : index
    %c0_9 = arith.constant 0 : index
    %10 = vector.load %arg4[%c0_8, %c0_9] : memref<1x32xf32, #tpu.memory_space<vmem>>, vector<1x32xf32>
    %11 = vector.broadcast %10 : vector<1x32xf32> to vector<16x32xf32>
    %12 = arith.addf %9, %11 : vector<16x32xf32>
    %c0_10 = arith.constant 0 : index
    %c0_11 = arith.constant 0 : index
    %13 = vector.load %arg5[%c0_10, %c0_11] : memref<16x32xf32, #tpu.memory_space<vmem>>, vector<16x32xf32>
    %14 = arith.addf %12, %13 : vector<16x32xf32>
    %15 = tpu.iota {dimensions = array<i32: 0>} : vector<16x16xi32>
    %16 = tpu.iota {dimensions = array<i32: 1>} : vector<16x16xi32>
    %17 = arith.cmpi eq, %15, %16 : vector<16x16xi32>
    %cst_12 = arith.constant -1.000000e+09 : f32
    %cst_13 = arith.constant 0.000000e+00 : f32
    %18 = vector.broadcast %cst_12 : f32 to vector<16x16xf32>
    %19 = vector.broadcast %cst_13 : f32 to vector<16x16xf32>
    %20 = arith.select %17, %18, %19 : vector<16x16xi1>, vector<16x16xf32>
    %c0_14 = arith.constant 0 : index
    %c0_15 = arith.constant 0 : index
    %c0_16 = arith.constant 0 : index
    %21 = vector.load %arg6[%c0_14, %c0_15, %c0_16] : memref<2x32x96xf32, #tpu.memory_space<vmem>>, vector<1x32x96xf32>
    %22 = vector.shape_cast %21 : vector<1x32x96xf32> to vector<32x96xf32>
    %c0_17 = arith.constant 0 : index
    %c0_18 = arith.constant 0 : index
    %c0_19 = arith.constant 0 : index
    %c0_20 = arith.constant 0 : index
    %23 = vector.load %arg7[%c0_17, %c0_18, %c0_19, %c0_20] : memref<2x2x16x32xf32, #tpu.memory_space<vmem>>, vector<1x2x16x32xf32>
    %24 = vector.shape_cast %23 : vector<1x2x16x32xf32> to vector<2x16x32xf32>
    %c0_21 = arith.constant 0 : index
    %c0_22 = arith.constant 0 : index
    %c0_23 = arith.constant 0 : index
    %25 = vector.load %arg8[%c0_21, %c0_22, %c0_23] : memref<2x32x64xf32, #tpu.memory_space<vmem>>, vector<1x32x64xf32>
    %26 = vector.shape_cast %25 : vector<1x32x64xf32> to vector<32x64xf32>
    %c0_24 = arith.constant 0 : index
    %c0_25 = arith.constant 0 : index
    %c0_26 = arith.constant 0 : index
    %27 = vector.load %arg9[%c0_24, %c0_25, %c0_26] : memref<2x1x64xf32, #tpu.memory_space<vmem>>, vector<1x1x64xf32>
    %28 = vector.shape_cast %27 : vector<1x1x64xf32> to vector<1x64xf32>
    %c0_27 = arith.constant 0 : index
    %c0_28 = arith.constant 0 : index
    %c0_29 = arith.constant 0 : index
    %29 = vector.load %arg10[%c0_27, %c0_28, %c0_29] : memref<2x64x32xf32, #tpu.memory_space<vmem>>, vector<1x64x32xf32>
    %30 = vector.shape_cast %29 : vector<1x64x32xf32> to vector<64x32xf32>
    %c0_30 = arith.constant 0 : index
    %c0_31 = arith.constant 0 : index
    %c0_32 = arith.constant 0 : index
    %31 = vector.load %arg11[%c0_30, %c0_31, %c0_32] : memref<2x5x32xf32, #tpu.memory_space<vmem>>, vector<1x5x32xf32>
    %32 = vector.shape_cast %31 : vector<1x5x32xf32> to vector<5x32xf32>
    %33 = vector.extract_strided_slice %32 {offsets = [0, 0], sizes = [1, 32], strides = [1, 1]} : vector<5x32xf32> to vector<1x32xf32>
    %34 = vector.extract_strided_slice %32 {offsets = [1, 0], sizes = [1, 32], strides = [1, 1]} : vector<5x32xf32> to vector<1x32xf32>
    %35 = vector.extract_strided_slice %32 {offsets = [2, 0], sizes = [1, 32], strides = [1, 1]} : vector<5x32xf32> to vector<1x32xf32>
    %36 = vector.extract_strided_slice %32 {offsets = [3, 0], sizes = [1, 32], strides = [1, 1]} : vector<5x32xf32> to vector<1x32xf32>
    %37 = vector.extract_strided_slice %32 {offsets = [4, 0], sizes = [1, 32], strides = [1, 1]} : vector<5x32xf32> to vector<1x32xf32>
    %cst_33 = arith.constant dense<0.000000e+00> : vector<16xf32>
    %38 = vector.multi_reduction <add>, %14, %cst_33 [1] : vector<16x32xf32> to vector<16xf32>
    %39 = vector.shape_cast %38 : vector<16xf32> to vector<16x1xf32>
    %cst_34 = arith.constant 3.200000e+01 : f32
    %40 = vector.broadcast %cst_34 : f32 to vector<16x1xf32>
    %41 = arith.divf %39, %40 : vector<16x1xf32>
    %42 = vector.broadcast %41 : vector<16x1xf32> to vector<16x32xf32>
    %43 = arith.subf %14, %42 : vector<16x32xf32>
    %44 = arith.mulf %43, %43 : vector<16x32xf32>
    %cst_35 = arith.constant dense<0.000000e+00> : vector<16xf32>
    %45 = vector.multi_reduction <add>, %44, %cst_35 [1] : vector<16x32xf32> to vector<16xf32>
    %46 = vector.shape_cast %45 : vector<16xf32> to vector<16x1xf32>
    %cst_36 = arith.constant 3.200000e+01 : f32
    %47 = vector.broadcast %cst_36 : f32 to vector<16x1xf32>
    %48 = arith.divf %46, %47 : vector<16x1xf32>
    %49 = vector.broadcast %41 : vector<16x1xf32> to vector<16x32xf32>
    %50 = arith.subf %14, %49 : vector<16x32xf32>
    %cst_37 = arith.constant 9.99999974E-6 : f32
    %51 = vector.broadcast %cst_37 : f32 to vector<16x1xf32>
    %52 = arith.addf %48, %51 : vector<16x1xf32>
    %53 = math.rsqrt %52 : vector<16x1xf32>
    %54 = vector.broadcast %53 : vector<16x1xf32> to vector<16x32xf32>
    %55 = arith.mulf %50, %54 : vector<16x32xf32>
    %56 = vector.broadcast %33 : vector<1x32xf32> to vector<16x32xf32>
    %57 = arith.mulf %55, %56 : vector<16x32xf32>
    %58 = vector.broadcast %34 : vector<1x32xf32> to vector<16x32xf32>
    %59 = arith.addf %57, %58 : vector<16x32xf32>
    %cst_38 = arith.constant dense<0.000000e+00> : vector<16x96xf32>
    %60 = tpu.matmul %59, %22, %cst_38 {dimension_numbers = #tpu.dot_dimension_numbers<[1], [0], [0], [1], [0, 0, 1, 1], [], []>} : vector<16x32xf32>, vector<32x96xf32>, vector<16x96xf32> -> vector<16x96xf32>
    %61 = vector.extract_strided_slice %60 {offsets = [0, 0], sizes = [16, 32], strides = [1, 1]} : vector<16x96xf32> to vector<16x32xf32>
    %62 = vector.extract_strided_slice %60 {offsets = [0, 32], sizes = [16, 32], strides = [1, 1]} : vector<16x96xf32> to vector<16x32xf32>
    %63 = vector.extract_strided_slice %60 {offsets = [0, 64], sizes = [16, 32], strides = [1, 1]} : vector<16x96xf32> to vector<16x32xf32>
    %64 = vector.extract_strided_slice %61 {offsets = [0, 0], sizes = [16, 16], strides = [1, 1]} : vector<16x32xf32> to vector<16x16xf32>
    %65 = vector.extract_strided_slice %61 {offsets = [0, 16], sizes = [16, 16], strides = [1, 1]} : vector<16x32xf32> to vector<16x16xf32>
    %66 = vector.shape_cast %64 : vector<16x16xf32> to vector<1x16x16xf32>
    %67 = vector.shape_cast %65 : vector<16x16xf32> to vector<1x16x16xf32>
    %68 = tpu.concatenate %66, %67 in 0 : vector<1x16x16xf32>, vector<1x16x16xf32> -> vector<2x16x16xf32>
    %69 = vector.extract_strided_slice %62 {offsets = [0, 0], sizes = [16, 16], strides = [1, 1]} : vector<16x32xf32> to vector<16x16xf32>
    %70 = vector.extract_strided_slice %62 {offsets = [0, 16], sizes = [16, 16], strides = [1, 1]} : vector<16x32xf32> to vector<16x16xf32>
    %71 = vector.shape_cast %69 : vector<16x16xf32> to vector<1x16x16xf32>
    %72 = vector.shape_cast %70 : vector<16x16xf32> to vector<1x16x16xf32>
    %73 = tpu.concatenate %71, %72 in 0 : vector<1x16x16xf32>, vector<1x16x16xf32> -> vector<2x16x16xf32>
    %74 = vector.extract_strided_slice %63 {offsets = [0, 0], sizes = [16, 16], strides = [1, 1]} : vector<16x32xf32> to vector<16x16xf32>
    %75 = vector.extract_strided_slice %63 {offsets = [0, 16], sizes = [16, 16], strides = [1, 1]} : vector<16x32xf32> to vector<16x16xf32>
    %76 = vector.shape_cast %74 : vector<16x16xf32> to vector<1x16x16xf32>
    %77 = vector.shape_cast %75 : vector<16x16xf32> to vector<1x16x16xf32>
    %78 = tpu.concatenate %76, %77 in 0 : vector<1x16x16xf32>, vector<1x16x16xf32> -> vector<2x16x16xf32>
    %cst_39 = arith.constant 2.500000e-01 : f32
    %79 = vector.broadcast %cst_39 : f32 to vector<2x16x16xf32>
    %80 = arith.mulf %68, %79 : vector<2x16x16xf32>
    "tpu.trace_start"() <{level = 10 : i32, message = "htd,hsd->hts"}> : () -> ()
    %cst_40 = arith.constant dense<0.000000e+00> : vector<2x16x16xf32>
    %81 = tpu.matmul %80, %73, %cst_40 {dimension_numbers = #tpu.dot_dimension_numbers<[2], [2], [1], [1], [0, 0, 0, 1, 1, 1], [0], [0]>} : vector<2x16x16xf32>, vector<2x16x16xf32>, vector<2x16x16xf32> -> vector<2x16x16xf32>
    "tpu.trace_stop"() : () -> ()
    %82 = vector.shape_cast %20 : vector<16x16xf32> to vector<1x16x16xf32>
    %83 = vector.broadcast %82 : vector<1x16x16xf32> to vector<2x16x16xf32>
    %84 = arith.addf %81, %83 : vector<2x16x16xf32>
    %cst_41 = arith.constant dense<0xFF800000> : vector<2x16xf32>
    %85 = vector.multi_reduction <maximumf>, %84, %cst_41 [2] : vector<2x16x16xf32> to vector<2x16xf32>
    %86 = vector.shape_cast %85 : vector<2x16xf32> to vector<2x16x1xf32>
    %87 = vector.broadcast %86 : vector<2x16x1xf32> to vector<2x16x16xf32>
    %88 = arith.subf %84, %87 : vector<2x16x16xf32>
    %89 = math.exp %88 : vector<2x16x16xf32>
    %cst_42 = arith.constant dense<0.000000e+00> : vector<2x16xf32>
    %90 = vector.multi_reduction <add>, %89, %cst_42 [2] : vector<2x16x16xf32> to vector<2x16xf32>
    %91 = vector.shape_cast %90 : vector<2x16xf32> to vector<2x16x1xf32>
    %92 = tpu.reciprocal %91 {approx = true} : vector<2x16x1xf32> -> vector<2x16x1xf32>
    %93 = vector.broadcast %92 : vector<2x16x1xf32> to vector<2x16x16xf32>
    %94 = arith.mulf %89, %93 : vector<2x16x16xf32>
    "tpu.trace_start"() <{level = 10 : i32, message = "hts,hsd->htd"}> : () -> ()
    %cst_43 = arith.constant dense<0.000000e+00> : vector<2x16x16xf32>
    %95 = tpu.matmul %94, %78, %cst_43 {dimension_numbers = #tpu.dot_dimension_numbers<[2], [1], [1], [2], [0, 0, 0, 1, 1, 2], [0], [0]>} : vector<2x16x16xf32>, vector<2x16x16xf32>, vector<2x16x16xf32> -> vector<2x16x16xf32>
    "tpu.trace_stop"() : () -> ()
    "tpu.trace_start"() <{level = 10 : i32, message = "htd,hdm->htm"}> : () -> ()
    %cst_44 = arith.constant dense<0.000000e+00> : vector<2x16x32xf32>
    %96 = tpu.matmul %95, %24, %cst_44 {dimension_numbers = #tpu.dot_dimension_numbers<[2], [1], [1], [2], [0, 0, 0, 1, 1, 2], [0], [0]>} : vector<2x16x16xf32>, vector<2x16x32xf32>, vector<2x16x32xf32> -> vector<2x16x32xf32>
    "tpu.trace_stop"() : () -> ()
    %cst_45 = arith.constant dense<0.000000e+00> : vector<16x32xf32>
    %97 = vector.multi_reduction <add>, %96, %cst_45 [0] : vector<2x16x32xf32> to vector<16x32xf32>
    %98 = arith.addf %97, %14 : vector<16x32xf32>
    %cst_46 = arith.constant dense<0.000000e+00> : vector<16xf32>
    %99 = vector.multi_reduction <add>, %98, %cst_46 [1] : vector<16x32xf32> to vector<16xf32>
    %100 = vector.shape_cast %99 : vector<16xf32> to vector<16x1xf32>
    %cst_47 = arith.constant 3.200000e+01 : f32
    %101 = vector.broadcast %cst_47 : f32 to vector<16x1xf32>
    %102 = arith.divf %100, %101 : vector<16x1xf32>
    %103 = vector.broadcast %102 : vector<16x1xf32> to vector<16x32xf32>
    %104 = arith.subf %98, %103 : vector<16x32xf32>
    %105 = arith.mulf %104, %104 : vector<16x32xf32>
    %cst_48 = arith.constant dense<0.000000e+00> : vector<16xf32>
    %106 = vector.multi_reduction <add>, %105, %cst_48 [1] : vector<16x32xf32> to vector<16xf32>
    %107 = vector.shape_cast %106 : vector<16xf32> to vector<16x1xf32>
    %cst_49 = arith.constant 3.200000e+01 : f32
    %108 = vector.broadcast %cst_49 : f32 to vector<16x1xf32>
    %109 = arith.divf %107, %108 : vector<16x1xf32>
    %110 = vector.broadcast %102 : vector<16x1xf32> to vector<16x32xf32>
    %111 = arith.subf %98, %110 : vector<16x32xf32>
    %cst_50 = arith.constant 9.99999997E-7 : f32
    %112 = vector.broadcast %cst_50 : f32 to vector<16x1xf32>
    %113 = arith.addf %109, %112 : vector<16x1xf32>
    %114 = math.rsqrt %113 : vector<16x1xf32>
    %115 = vector.broadcast %114 : vector<16x1xf32> to vector<16x32xf32>
    %116 = arith.mulf %111, %115 : vector<16x32xf32>
    %117 = vector.broadcast %35 : vector<1x32xf32> to vector<16x32xf32>
    %118 = arith.mulf %116, %117 : vector<16x32xf32>
    %119 = vector.broadcast %36 : vector<1x32xf32> to vector<16x32xf32>
    %120 = arith.addf %118, %119 : vector<16x32xf32>
    %cst_51 = arith.constant dense<0.000000e+00> : vector<16x64xf32>
    %121 = tpu.matmul %120, %26, %cst_51 {dimension_numbers = #tpu.dot_dimension_numbers<[1], [0], [0], [1], [0, 0, 1, 1], [], []>} : vector<16x32xf32>, vector<32x64xf32>, vector<16x64xf32> -> vector<16x64xf32>
    %122 = vector.broadcast %28 : vector<1x64xf32> to vector<16x64xf32>
    %123 = arith.addf %121, %122 : vector<16x64xf32>
    %cst_52 = arith.constant 0.000000e+00 : f32
    %124 = vector.broadcast %cst_52 : f32 to vector<16x64xf32>
    %125 = arith.maximumf %123, %124 : vector<16x64xf32>
    %cst_53 = arith.constant dense<0.000000e+00> : vector<16x32xf32>
    %126 = tpu.matmul %125, %30, %cst_53 {dimension_numbers = #tpu.dot_dimension_numbers<[1], [0], [0], [1], [0, 0, 1, 1], [], []>} : vector<16x64xf32>, vector<64x32xf32>, vector<16x32xf32> -> vector<16x32xf32>
    %127 = vector.broadcast %37 : vector<1x32xf32> to vector<16x32xf32>
    %128 = arith.addf %126, %127 : vector<16x32xf32>
    %129 = arith.addf %128, %98 : vector<16x32xf32>
    %cst_54 = arith.constant dense<0.000000e+00> : vector<16xf32>
    %130 = vector.multi_reduction <add>, %129, %cst_54 [1] : vector<16x32xf32> to vector<16xf32>
    %131 = vector.shape_cast %130 : vector<16xf32> to vector<16x1xf32>
    %cst_55 = arith.constant 3.200000e+01 : f32
    %132 = vector.broadcast %cst_55 : f32 to vector<16x1xf32>
    %133 = arith.divf %131, %132 : vector<16x1xf32>
    %134 = vector.broadcast %133 : vector<16x1xf32> to vector<16x32xf32>
    %135 = arith.subf %129, %134 : vector<16x32xf32>
    %136 = arith.mulf %135, %135 : vector<16x32xf32>
    %cst_56 = arith.constant dense<0.000000e+00> : vector<16xf32>
    %137 = vector.multi_reduction <add>, %136, %cst_56 [1] : vector<16x32xf32> to vector<16xf32>
    %138 = vector.shape_cast %137 : vector<16xf32> to vector<16x1xf32>
    %cst_57 = arith.constant 3.200000e+01 : f32
    %139 = vector.broadcast %cst_57 : f32 to vector<16x1xf32>
    %140 = arith.divf %138, %139 : vector<16x1xf32>
    %141 = vector.broadcast %133 : vector<16x1xf32> to vector<16x32xf32>
    %142 = arith.subf %129, %141 : vector<16x32xf32>
    %cst_58 = arith.constant 9.99999974E-6 : f32
    %143 = vector.broadcast %cst_58 : f32 to vector<16x1xf32>
    %144 = arith.addf %140, %143 : vector<16x1xf32>
    %145 = math.rsqrt %144 : vector<16x1xf32>
    %146 = vector.broadcast %145 : vector<16x1xf32> to vector<16x32xf32>
    %147 = arith.mulf %142, %146 : vector<16x32xf32>
    %148 = vector.broadcast %33 : vector<1x32xf32> to vector<16x32xf32>
    %149 = arith.mulf %147, %148 : vector<16x32xf32>
    %150 = vector.broadcast %34 : vector<1x32xf32> to vector<16x32xf32>
    %151 = arith.addf %149, %150 : vector<16x32xf32>
    %cst_59 = arith.constant dense<0.000000e+00> : vector<16x96xf32>
    %152 = tpu.matmul %151, %22, %cst_59 {dimension_numbers = #tpu.dot_dimension_numbers<[1], [0], [0], [1], [0, 0, 1, 1], [], []>} : vector<16x32xf32>, vector<32x96xf32>, vector<16x96xf32> -> vector<16x96xf32>
    %153 = vector.extract_strided_slice %152 {offsets = [0, 0], sizes = [16, 32], strides = [1, 1]} : vector<16x96xf32> to vector<16x32xf32>
    %154 = vector.extract_strided_slice %152 {offsets = [0, 32], sizes = [16, 32], strides = [1, 1]} : vector<16x96xf32> to vector<16x32xf32>
    %155 = vector.extract_strided_slice %152 {offsets = [0, 64], sizes = [16, 32], strides = [1, 1]} : vector<16x96xf32> to vector<16x32xf32>
    %156 = vector.extract_strided_slice %153 {offsets = [0, 0], sizes = [16, 16], strides = [1, 1]} : vector<16x32xf32> to vector<16x16xf32>
    %157 = vector.extract_strided_slice %153 {offsets = [0, 16], sizes = [16, 16], strides = [1, 1]} : vector<16x32xf32> to vector<16x16xf32>
    %158 = vector.shape_cast %156 : vector<16x16xf32> to vector<1x16x16xf32>
    %159 = vector.shape_cast %157 : vector<16x16xf32> to vector<1x16x16xf32>
    %160 = tpu.concatenate %158, %159 in 0 : vector<1x16x16xf32>, vector<1x16x16xf32> -> vector<2x16x16xf32>
    %161 = vector.extract_strided_slice %154 {offsets = [0, 0], sizes = [16, 16], strides = [1, 1]} : vector<16x32xf32> to vector<16x16xf32>
    %162 = vector.extract_strided_slice %154 {offsets = [0, 16], sizes = [16, 16], strides = [1, 1]} : vector<16x32xf32> to vector<16x16xf32>
    %163 = vector.shape_cast %161 : vector<16x16xf32> to vector<1x16x16xf32>
    %164 = vector.shape_cast %162 : vector<16x16xf32> to vector<1x16x16xf32>
    %165 = tpu.concatenate %163, %164 in 0 : vector<1x16x16xf32>, vector<1x16x16xf32> -> vector<2x16x16xf32>
    %166 = vector.extract_strided_slice %155 {offsets = [0, 0], sizes = [16, 16], strides = [1, 1]} : vector<16x32xf32> to vector<16x16xf32>
    %167 = vector.extract_strided_slice %155 {offsets = [0, 16], sizes = [16, 16], strides = [1, 1]} : vector<16x32xf32> to vector<16x16xf32>
    %168 = vector.shape_cast %166 : vector<16x16xf32> to vector<1x16x16xf32>
    %169 = vector.shape_cast %167 : vector<16x16xf32> to vector<1x16x16xf32>
    %170 = tpu.concatenate %168, %169 in 0 : vector<1x16x16xf32>, vector<1x16x16xf32> -> vector<2x16x16xf32>
    %cst_60 = arith.constant 2.500000e-01 : f32
    %171 = vector.broadcast %cst_60 : f32 to vector<2x16x16xf32>
    %172 = arith.mulf %160, %171 : vector<2x16x16xf32>
    "tpu.trace_start"() <{level = 10 : i32, message = "htd,hsd->hts"}> : () -> ()
    %cst_61 = arith.constant dense<0.000000e+00> : vector<2x16x16xf32>
    %173 = tpu.matmul %172, %165, %cst_61 {dimension_numbers = #tpu.dot_dimension_numbers<[2], [2], [1], [1], [0, 0, 0, 1, 1, 1], [0], [0]>} : vector<2x16x16xf32>, vector<2x16x16xf32>, vector<2x16x16xf32> -> vector<2x16x16xf32>
    "tpu.trace_stop"() : () -> ()
    %174 = vector.shape_cast %20 : vector<16x16xf32> to vector<1x16x16xf32>
    %175 = vector.broadcast %174 : vector<1x16x16xf32> to vector<2x16x16xf32>
    %176 = arith.addf %173, %175 : vector<2x16x16xf32>
    %cst_62 = arith.constant dense<0xFF800000> : vector<2x16xf32>
    %177 = vector.multi_reduction <maximumf>, %176, %cst_62 [2] : vector<2x16x16xf32> to vector<2x16xf32>
    %178 = vector.shape_cast %177 : vector<2x16xf32> to vector<2x16x1xf32>
    %179 = vector.broadcast %178 : vector<2x16x1xf32> to vector<2x16x16xf32>
    %180 = arith.subf %176, %179 : vector<2x16x16xf32>
    %181 = math.exp %180 : vector<2x16x16xf32>
    %cst_63 = arith.constant dense<0.000000e+00> : vector<2x16xf32>
    %182 = vector.multi_reduction <add>, %181, %cst_63 [2] : vector<2x16x16xf32> to vector<2x16xf32>
    %183 = vector.shape_cast %182 : vector<2x16xf32> to vector<2x16x1xf32>
    %184 = tpu.reciprocal %183 {approx = true} : vector<2x16x1xf32> -> vector<2x16x1xf32>
    %185 = vector.broadcast %184 : vector<2x16x1xf32> to vector<2x16x16xf32>
    %186 = arith.mulf %181, %185 : vector<2x16x16xf32>
    "tpu.trace_start"() <{level = 10 : i32, message = "hts,hsd->htd"}> : () -> ()
    %cst_64 = arith.constant dense<0.000000e+00> : vector<2x16x16xf32>
    %187 = tpu.matmul %186, %170, %cst_64 {dimension_numbers = #tpu.dot_dimension_numbers<[2], [1], [1], [2], [0, 0, 0, 1, 1, 2], [0], [0]>} : vector<2x16x16xf32>, vector<2x16x16xf32>, vector<2x16x16xf32> -> vector<2x16x16xf32>
    "tpu.trace_stop"() : () -> ()
    "tpu.trace_start"() <{level = 10 : i32, message = "htd,hdm->htm"}> : () -> ()
    %cst_65 = arith.constant dense<0.000000e+00> : vector<2x16x32xf32>
    %188 = tpu.matmul %187, %24, %cst_65 {dimension_numbers = #tpu.dot_dimension_numbers<[2], [1], [1], [2], [0, 0, 0, 1, 1, 2], [0], [0]>} : vector<2x16x16xf32>, vector<2x16x32xf32>, vector<2x16x32xf32> -> vector<2x16x32xf32>
    "tpu.trace_stop"() : () -> ()
    %cst_66 = arith.constant dense<0.000000e+00> : vector<16x32xf32>
    %189 = vector.multi_reduction <add>, %188, %cst_66 [0] : vector<2x16x32xf32> to vector<16x32xf32>
    %190 = arith.addf %189, %129 : vector<16x32xf32>
    %cst_67 = arith.constant dense<0.000000e+00> : vector<16xf32>
    %191 = vector.multi_reduction <add>, %190, %cst_67 [1] : vector<16x32xf32> to vector<16xf32>
    %192 = vector.shape_cast %191 : vector<16xf32> to vector<16x1xf32>
    %cst_68 = arith.constant 3.200000e+01 : f32
    %193 = vector.broadcast %cst_68 : f32 to vector<16x1xf32>
    %194 = arith.divf %192, %193 : vector<16x1xf32>
    %195 = vector.broadcast %194 : vector<16x1xf32> to vector<16x32xf32>
    %196 = arith.subf %190, %195 : vector<16x32xf32>
    %197 = arith.mulf %196, %196 : vector<16x32xf32>
    %cst_69 = arith.constant dense<0.000000e+00> : vector<16xf32>
    %198 = vector.multi_reduction <add>, %197, %cst_69 [1] : vector<16x32xf32> to vector<16xf32>
    %199 = vector.shape_cast %198 : vector<16xf32> to vector<16x1xf32>
    %cst_70 = arith.constant 3.200000e+01 : f32
    %200 = vector.broadcast %cst_70 : f32 to vector<16x1xf32>
    %201 = arith.divf %199, %200 : vector<16x1xf32>
    %202 = vector.broadcast %194 : vector<16x1xf32> to vector<16x32xf32>
    %203 = arith.subf %190, %202 : vector<16x32xf32>
    %cst_71 = arith.constant 9.99999997E-7 : f32
    %204 = vector.broadcast %cst_71 : f32 to vector<16x1xf32>
    %205 = arith.addf %201, %204 : vector<16x1xf32>
    %206 = math.rsqrt %205 : vector<16x1xf32>
    %207 = vector.broadcast %206 : vector<16x1xf32> to vector<16x32xf32>
    %208 = arith.mulf %203, %207 : vector<16x32xf32>
    %209 = vector.broadcast %35 : vector<1x32xf32> to vector<16x32xf32>
    %210 = arith.mulf %208, %209 : vector<16x32xf32>
    %211 = vector.broadcast %36 : vector<1x32xf32> to vector<16x32xf32>
    %212 = arith.addf %210, %211 : vector<16x32xf32>
    %cst_72 = arith.constant dense<0.000000e+00> : vector<16x64xf32>
    %213 = tpu.matmul %212, %26, %cst_72 {dimension_numbers = #tpu.dot_dimension_numbers<[1], [0], [0], [1], [0, 0, 1, 1], [], []>} : vector<16x32xf32>, vector<32x64xf32>, vector<16x64xf32> -> vector<16x64xf32>
    %214 = vector.broadcast %28 : vector<1x64xf32> to vector<16x64xf32>
    %215 = arith.addf %213, %214 : vector<16x64xf32>
    %cst_73 = arith.constant 0.000000e+00 : f32
    %216 = vector.broadcast %cst_73 : f32 to vector<16x64xf32>
    %217 = arith.maximumf %215, %216 : vector<16x64xf32>
    %cst_74 = arith.constant dense<0.000000e+00> : vector<16x32xf32>
    %218 = tpu.matmul %217, %30, %cst_74 {dimension_numbers = #tpu.dot_dimension_numbers<[1], [0], [0], [1], [0, 0, 1, 1], [], []>} : vector<16x64xf32>, vector<64x32xf32>, vector<16x32xf32> -> vector<16x32xf32>
    %219 = vector.broadcast %37 : vector<1x32xf32> to vector<16x32xf32>
    %220 = arith.addf %218, %219 : vector<16x32xf32>
    %221 = arith.addf %220, %190 : vector<16x32xf32>
    %c1 = arith.constant 1 : index
    %c0_75 = arith.constant 0 : index
    %c0_76 = arith.constant 0 : index
    %222 = vector.load %arg6[%c1, %c0_75, %c0_76] : memref<2x32x96xf32, #tpu.memory_space<vmem>>, vector<1x32x96xf32>
    %223 = vector.shape_cast %222 : vector<1x32x96xf32> to vector<32x96xf32>
    %c1_77 = arith.constant 1 : index
    %c0_78 = arith.constant 0 : index
    %c0_79 = arith.constant 0 : index
    %c0_80 = arith.constant 0 : index
    %224 = vector.load %arg7[%c1_77, %c0_78, %c0_79, %c0_80] : memref<2x2x16x32xf32, #tpu.memory_space<vmem>>, vector<1x2x16x32xf32>
    %225 = vector.shape_cast %224 : vector<1x2x16x32xf32> to vector<2x16x32xf32>
    %c1_81 = arith.constant 1 : index
    %c0_82 = arith.constant 0 : index
    %c0_83 = arith.constant 0 : index
    %226 = vector.load %arg8[%c1_81, %c0_82, %c0_83] : memref<2x32x64xf32, #tpu.memory_space<vmem>>, vector<1x32x64xf32>
    %227 = vector.shape_cast %226 : vector<1x32x64xf32> to vector<32x64xf32>
    %c1_84 = arith.constant 1 : index
    %c0_85 = arith.constant 0 : index
    %c0_86 = arith.constant 0 : index
    %228 = vector.load %arg9[%c1_84, %c0_85, %c0_86] : memref<2x1x64xf32, #tpu.memory_space<vmem>>, vector<1x1x64xf32>
    %229 = vector.shape_cast %228 : vector<1x1x64xf32> to vector<1x64xf32>
    %c1_87 = arith.constant 1 : index
    %c0_88 = arith.constant 0 : index
    %c0_89 = arith.constant 0 : index
    %230 = vector.load %arg10[%c1_87, %c0_88, %c0_89] : memref<2x64x32xf32, #tpu.memory_space<vmem>>, vector<1x64x32xf32>
    %231 = vector.shape_cast %230 : vector<1x64x32xf32> to vector<64x32xf32>
    %c1_90 = arith.constant 1 : index
    %c0_91 = arith.constant 0 : index
    %c0_92 = arith.constant 0 : index
    %232 = vector.load %arg11[%c1_90, %c0_91, %c0_92] : memref<2x5x32xf32, #tpu.memory_space<vmem>>, vector<1x5x32xf32>
    %233 = vector.shape_cast %232 : vector<1x5x32xf32> to vector<5x32xf32>
    %234 = vector.extract_strided_slice %233 {offsets = [0, 0], sizes = [1, 32], strides = [1, 1]} : vector<5x32xf32> to vector<1x32xf32>
    %235 = vector.extract_strided_slice %233 {offsets = [1, 0], sizes = [1, 32], strides = [1, 1]} : vector<5x32xf32> to vector<1x32xf32>
    %236 = vector.extract_strided_slice %233 {offsets = [2, 0], sizes = [1, 32], strides = [1, 1]} : vector<5x32xf32> to vector<1x32xf32>
    %237 = vector.extract_strided_slice %233 {offsets = [3, 0], sizes = [1, 32], strides = [1, 1]} : vector<5x32xf32> to vector<1x32xf32>
    %238 = vector.extract_strided_slice %233 {offsets = [4, 0], sizes = [1, 32], strides = [1, 1]} : vector<5x32xf32> to vector<1x32xf32>
    %cst_93 = arith.constant dense<0.000000e+00> : vector<16xf32>
    %239 = vector.multi_reduction <add>, %221, %cst_93 [1] : vector<16x32xf32> to vector<16xf32>
    %240 = vector.shape_cast %239 : vector<16xf32> to vector<16x1xf32>
    %cst_94 = arith.constant 3.200000e+01 : f32
    %241 = vector.broadcast %cst_94 : f32 to vector<16x1xf32>
    %242 = arith.divf %240, %241 : vector<16x1xf32>
    %243 = vector.broadcast %242 : vector<16x1xf32> to vector<16x32xf32>
    %244 = arith.subf %221, %243 : vector<16x32xf32>
    %245 = arith.mulf %244, %244 : vector<16x32xf32>
    %cst_95 = arith.constant dense<0.000000e+00> : vector<16xf32>
    %246 = vector.multi_reduction <add>, %245, %cst_95 [1] : vector<16x32xf32> to vector<16xf32>
    %247 = vector.shape_cast %246 : vector<16xf32> to vector<16x1xf32>
    %cst_96 = arith.constant 3.200000e+01 : f32
    %248 = vector.broadcast %cst_96 : f32 to vector<16x1xf32>
    %249 = arith.divf %247, %248 : vector<16x1xf32>
    %250 = vector.broadcast %242 : vector<16x1xf32> to vector<16x32xf32>
    %251 = arith.subf %221, %250 : vector<16x32xf32>
    %cst_97 = arith.constant 9.99999974E-6 : f32
    %252 = vector.broadcast %cst_97 : f32 to vector<16x1xf32>
    %253 = arith.addf %249, %252 : vector<16x1xf32>
    %254 = math.rsqrt %253 : vector<16x1xf32>
    %255 = vector.broadcast %254 : vector<16x1xf32> to vector<16x32xf32>
    %256 = arith.mulf %251, %255 : vector<16x32xf32>
    %257 = vector.broadcast %234 : vector<1x32xf32> to vector<16x32xf32>
    %258 = arith.mulf %256, %257 : vector<16x32xf32>
    %259 = vector.broadcast %235 : vector<1x32xf32> to vector<16x32xf32>
    %260 = arith.addf %258, %259 : vector<16x32xf32>
    %cst_98 = arith.constant dense<0.000000e+00> : vector<16x96xf32>
    %261 = tpu.matmul %260, %223, %cst_98 {dimension_numbers = #tpu.dot_dimension_numbers<[1], [0], [0], [1], [0, 0, 1, 1], [], []>} : vector<16x32xf32>, vector<32x96xf32>, vector<16x96xf32> -> vector<16x96xf32>
    %262 = vector.extract_strided_slice %261 {offsets = [0, 0], sizes = [16, 32], strides = [1, 1]} : vector<16x96xf32> to vector<16x32xf32>
    %263 = vector.extract_strided_slice %261 {offsets = [0, 32], sizes = [16, 32], strides = [1, 1]} : vector<16x96xf32> to vector<16x32xf32>
    %264 = vector.extract_strided_slice %261 {offsets = [0, 64], sizes = [16, 32], strides = [1, 1]} : vector<16x96xf32> to vector<16x32xf32>
    %265 = vector.extract_strided_slice %262 {offsets = [0, 0], sizes = [16, 16], strides = [1, 1]} : vector<16x32xf32> to vector<16x16xf32>
    %266 = vector.extract_strided_slice %262 {offsets = [0, 16], sizes = [16, 16], strides = [1, 1]} : vector<16x32xf32> to vector<16x16xf32>
    %267 = vector.shape_cast %265 : vector<16x16xf32> to vector<1x16x16xf32>
    %268 = vector.shape_cast %266 : vector<16x16xf32> to vector<1x16x16xf32>
    %269 = tpu.concatenate %267, %268 in 0 : vector<1x16x16xf32>, vector<1x16x16xf32> -> vector<2x16x16xf32>
    %270 = vector.extract_strided_slice %263 {offsets = [0, 0], sizes = [16, 16], strides = [1, 1]} : vector<16x32xf32> to vector<16x16xf32>
    %271 = vector.extract_strided_slice %263 {offsets = [0, 16], sizes = [16, 16], strides = [1, 1]} : vector<16x32xf32> to vector<16x16xf32>
    %272 = vector.shape_cast %270 : vector<16x16xf32> to vector<1x16x16xf32>
    %273 = vector.shape_cast %271 : vector<16x16xf32> to vector<1x16x16xf32>
    %274 = tpu.concatenate %272, %273 in 0 : vector<1x16x16xf32>, vector<1x16x16xf32> -> vector<2x16x16xf32>
    %275 = vector.extract_strided_slice %264 {offsets = [0, 0], sizes = [16, 16], strides = [1, 1]} : vector<16x32xf32> to vector<16x16xf32>
    %276 = vector.extract_strided_slice %264 {offsets = [0, 16], sizes = [16, 16], strides = [1, 1]} : vector<16x32xf32> to vector<16x16xf32>
    %277 = vector.shape_cast %275 : vector<16x16xf32> to vector<1x16x16xf32>
    %278 = vector.shape_cast %276 : vector<16x16xf32> to vector<1x16x16xf32>
    %279 = tpu.concatenate %277, %278 in 0 : vector<1x16x16xf32>, vector<1x16x16xf32> -> vector<2x16x16xf32>
    %cst_99 = arith.constant 2.500000e-01 : f32
    %280 = vector.broadcast %cst_99 : f32 to vector<2x16x16xf32>
    %281 = arith.mulf %269, %280 : vector<2x16x16xf32>
    "tpu.trace_start"() <{level = 10 : i32, message = "htd,hsd->hts"}> : () -> ()
    %cst_100 = arith.constant dense<0.000000e+00> : vector<2x16x16xf32>
    %282 = tpu.matmul %281, %274, %cst_100 {dimension_numbers = #tpu.dot_dimension_numbers<[2], [2], [1], [1], [0, 0, 0, 1, 1, 1], [0], [0]>} : vector<2x16x16xf32>, vector<2x16x16xf32>, vector<2x16x16xf32> -> vector<2x16x16xf32>
    "tpu.trace_stop"() : () -> ()
    %283 = vector.shape_cast %20 : vector<16x16xf32> to vector<1x16x16xf32>
    %284 = vector.broadcast %283 : vector<1x16x16xf32> to vector<2x16x16xf32>
    %285 = arith.addf %282, %284 : vector<2x16x16xf32>
    %cst_101 = arith.constant dense<0xFF800000> : vector<2x16xf32>
    %286 = vector.multi_reduction <maximumf>, %285, %cst_101 [2] : vector<2x16x16xf32> to vector<2x16xf32>
    %287 = vector.shape_cast %286 : vector<2x16xf32> to vector<2x16x1xf32>
    %288 = vector.broadcast %287 : vector<2x16x1xf32> to vector<2x16x16xf32>
    %289 = arith.subf %285, %288 : vector<2x16x16xf32>
    %290 = math.exp %289 : vector<2x16x16xf32>
    %cst_102 = arith.constant dense<0.000000e+00> : vector<2x16xf32>
    %291 = vector.multi_reduction <add>, %290, %cst_102 [2] : vector<2x16x16xf32> to vector<2x16xf32>
    %292 = vector.shape_cast %291 : vector<2x16xf32> to vector<2x16x1xf32>
    %293 = tpu.reciprocal %292 {approx = true} : vector<2x16x1xf32> -> vector<2x16x1xf32>
    %294 = vector.broadcast %293 : vector<2x16x1xf32> to vector<2x16x16xf32>
    %295 = arith.mulf %290, %294 : vector<2x16x16xf32>
    "tpu.trace_start"() <{level = 10 : i32, message = "hts,hsd->htd"}> : () -> ()
    %cst_103 = arith.constant dense<0.000000e+00> : vector<2x16x16xf32>
    %296 = tpu.matmul %295, %279, %cst_103 {dimension_numbers = #tpu.dot_dimension_numbers<[2], [1], [1], [2], [0, 0, 0, 1, 1, 2], [0], [0]>} : vector<2x16x16xf32>, vector<2x16x16xf32>, vector<2x16x16xf32> -> vector<2x16x16xf32>
    "tpu.trace_stop"() : () -> ()
    "tpu.trace_start"() <{level = 10 : i32, message = "htd,hdm->htm"}> : () -> ()
    %cst_104 = arith.constant dense<0.000000e+00> : vector<2x16x32xf32>
    %297 = tpu.matmul %296, %225, %cst_104 {dimension_numbers = #tpu.dot_dimension_numbers<[2], [1], [1], [2], [0, 0, 0, 1, 1, 2], [0], [0]>} : vector<2x16x16xf32>, vector<2x16x32xf32>, vector<2x16x32xf32> -> vector<2x16x32xf32>
    "tpu.trace_stop"() : () -> ()
    %cst_105 = arith.constant dense<0.000000e+00> : vector<16x32xf32>
    %298 = vector.multi_reduction <add>, %297, %cst_105 [0] : vector<2x16x32xf32> to vector<16x32xf32>
    %299 = arith.addf %298, %221 : vector<16x32xf32>
    %cst_106 = arith.constant dense<0.000000e+00> : vector<16xf32>
    %300 = vector.multi_reduction <add>, %299, %cst_106 [1] : vector<16x32xf32> to vector<16xf32>
    %301 = vector.shape_cast %300 : vector<16xf32> to vector<16x1xf32>
    %cst_107 = arith.constant 3.200000e+01 : f32
    %302 = vector.broadcast %cst_107 : f32 to vector<16x1xf32>
    %303 = arith.divf %301, %302 : vector<16x1xf32>
    %304 = vector.broadcast %303 : vector<16x1xf32> to vector<16x32xf32>
    %305 = arith.subf %299, %304 : vector<16x32xf32>
    %306 = arith.mulf %305, %305 : vector<16x32xf32>
    %cst_108 = arith.constant dense<0.000000e+00> : vector<16xf32>
    %307 = vector.multi_reduction <add>, %306, %cst_108 [1] : vector<16x32xf32> to vector<16xf32>
    %308 = vector.shape_cast %307 : vector<16xf32> to vector<16x1xf32>
    %cst_109 = arith.constant 3.200000e+01 : f32
    %309 = vector.broadcast %cst_109 : f32 to vector<16x1xf32>
    %310 = arith.divf %308, %309 : vector<16x1xf32>
    %311 = vector.broadcast %303 : vector<16x1xf32> to vector<16x32xf32>
    %312 = arith.subf %299, %311 : vector<16x32xf32>
    %cst_110 = arith.constant 9.99999997E-7 : f32
    %313 = vector.broadcast %cst_110 : f32 to vector<16x1xf32>
    %314 = arith.addf %310, %313 : vector<16x1xf32>
    %315 = math.rsqrt %314 : vector<16x1xf32>
    %316 = vector.broadcast %315 : vector<16x1xf32> to vector<16x32xf32>
    %317 = arith.mulf %312, %316 : vector<16x32xf32>
    %318 = vector.broadcast %236 : vector<1x32xf32> to vector<16x32xf32>
    %319 = arith.mulf %317, %318 : vector<16x32xf32>
    %320 = vector.broadcast %237 : vector<1x32xf32> to vector<16x32xf32>
    %321 = arith.addf %319, %320 : vector<16x32xf32>
    %cst_111 = arith.constant dense<0.000000e+00> : vector<16x64xf32>
    %322 = tpu.matmul %321, %227, %cst_111 {dimension_numbers = #tpu.dot_dimension_numbers<[1], [0], [0], [1], [0, 0, 1, 1], [], []>} : vector<16x32xf32>, vector<32x64xf32>, vector<16x64xf32> -> vector<16x64xf32>
    %323 = vector.broadcast %229 : vector<1x64xf32> to vector<16x64xf32>
    %324 = arith.addf %322, %323 : vector<16x64xf32>
    %cst_112 = arith.constant 0.000000e+00 : f32
    %325 = vector.broadcast %cst_112 : f32 to vector<16x64xf32>
    %326 = arith.maximumf %324, %325 : vector<16x64xf32>
    %cst_113 = arith.constant dense<0.000000e+00> : vector<16x32xf32>
    %327 = tpu.matmul %326, %231, %cst_113 {dimension_numbers = #tpu.dot_dimension_numbers<[1], [0], [0], [1], [0, 0, 1, 1], [], []>} : vector<16x64xf32>, vector<64x32xf32>, vector<16x32xf32> -> vector<16x32xf32>
    %328 = vector.broadcast %238 : vector<1x32xf32> to vector<16x32xf32>
    %329 = arith.addf %327, %328 : vector<16x32xf32>
    %330 = arith.addf %329, %299 : vector<16x32xf32>
    %cst_114 = arith.constant dense<0.000000e+00> : vector<16xf32>
    %331 = vector.multi_reduction <add>, %330, %cst_114 [1] : vector<16x32xf32> to vector<16xf32>
    %332 = vector.shape_cast %331 : vector<16xf32> to vector<16x1xf32>
    %cst_115 = arith.constant 3.200000e+01 : f32
    %333 = vector.broadcast %cst_115 : f32 to vector<16x1xf32>
    %334 = arith.divf %332, %333 : vector<16x1xf32>
    %335 = vector.broadcast %334 : vector<16x1xf32> to vector<16x32xf32>
    %336 = arith.subf %330, %335 : vector<16x32xf32>
    %337 = arith.mulf %336, %336 : vector<16x32xf32>
    %cst_116 = arith.constant dense<0.000000e+00> : vector<16xf32>
    %338 = vector.multi_reduction <add>, %337, %cst_116 [1] : vector<16x32xf32> to vector<16xf32>
    %339 = vector.shape_cast %338 : vector<16xf32> to vector<16x1xf32>
    %cst_117 = arith.constant 3.200000e+01 : f32
    %340 = vector.broadcast %cst_117 : f32 to vector<16x1xf32>
    %341 = arith.divf %339, %340 : vector<16x1xf32>
    %342 = vector.broadcast %334 : vector<16x1xf32> to vector<16x32xf32>
    %343 = arith.subf %330, %342 : vector<16x32xf32>
    %cst_118 = arith.constant 9.99999974E-6 : f32
    %344 = vector.broadcast %cst_118 : f32 to vector<16x1xf32>
    %345 = arith.addf %341, %344 : vector<16x1xf32>
    %346 = math.rsqrt %345 : vector<16x1xf32>
    %347 = vector.broadcast %346 : vector<16x1xf32> to vector<16x32xf32>
    %348 = arith.mulf %343, %347 : vector<16x32xf32>
    %349 = vector.broadcast %234 : vector<1x32xf32> to vector<16x32xf32>
    %350 = arith.mulf %348, %349 : vector<16x32xf32>
    %351 = vector.broadcast %235 : vector<1x32xf32> to vector<16x32xf32>
    %352 = arith.addf %350, %351 : vector<16x32xf32>
    %cst_119 = arith.constant dense<0.000000e+00> : vector<16x96xf32>
    %353 = tpu.matmul %352, %223, %cst_119 {dimension_numbers = #tpu.dot_dimension_numbers<[1], [0], [0], [1], [0, 0, 1, 1], [], []>} : vector<16x32xf32>, vector<32x96xf32>, vector<16x96xf32> -> vector<16x96xf32>
    %354 = vector.extract_strided_slice %353 {offsets = [0, 0], sizes = [16, 32], strides = [1, 1]} : vector<16x96xf32> to vector<16x32xf32>
    %355 = vector.extract_strided_slice %353 {offsets = [0, 32], sizes = [16, 32], strides = [1, 1]} : vector<16x96xf32> to vector<16x32xf32>
    %356 = vector.extract_strided_slice %353 {offsets = [0, 64], sizes = [16, 32], strides = [1, 1]} : vector<16x96xf32> to vector<16x32xf32>
    %357 = vector.extract_strided_slice %354 {offsets = [0, 0], sizes = [16, 16], strides = [1, 1]} : vector<16x32xf32> to vector<16x16xf32>
    %358 = vector.extract_strided_slice %354 {offsets = [0, 16], sizes = [16, 16], strides = [1, 1]} : vector<16x32xf32> to vector<16x16xf32>
    %359 = vector.shape_cast %357 : vector<16x16xf32> to vector<1x16x16xf32>
    %360 = vector.shape_cast %358 : vector<16x16xf32> to vector<1x16x16xf32>
    %361 = tpu.concatenate %359, %360 in 0 : vector<1x16x16xf32>, vector<1x16x16xf32> -> vector<2x16x16xf32>
    %362 = vector.extract_strided_slice %355 {offsets = [0, 0], sizes = [16, 16], strides = [1, 1]} : vector<16x32xf32> to vector<16x16xf32>
    %363 = vector.extract_strided_slice %355 {offsets = [0, 16], sizes = [16, 16], strides = [1, 1]} : vector<16x32xf32> to vector<16x16xf32>
    %364 = vector.shape_cast %362 : vector<16x16xf32> to vector<1x16x16xf32>
    %365 = vector.shape_cast %363 : vector<16x16xf32> to vector<1x16x16xf32>
    %366 = tpu.concatenate %364, %365 in 0 : vector<1x16x16xf32>, vector<1x16x16xf32> -> vector<2x16x16xf32>
    %367 = vector.extract_strided_slice %356 {offsets = [0, 0], sizes = [16, 16], strides = [1, 1]} : vector<16x32xf32> to vector<16x16xf32>
    %368 = vector.extract_strided_slice %356 {offsets = [0, 16], sizes = [16, 16], strides = [1, 1]} : vector<16x32xf32> to vector<16x16xf32>
    %369 = vector.shape_cast %367 : vector<16x16xf32> to vector<1x16x16xf32>
    %370 = vector.shape_cast %368 : vector<16x16xf32> to vector<1x16x16xf32>
    %371 = tpu.concatenate %369, %370 in 0 : vector<1x16x16xf32>, vector<1x16x16xf32> -> vector<2x16x16xf32>
    %cst_120 = arith.constant 2.500000e-01 : f32
    %372 = vector.broadcast %cst_120 : f32 to vector<2x16x16xf32>
    %373 = arith.mulf %361, %372 : vector<2x16x16xf32>
    "tpu.trace_start"() <{level = 10 : i32, message = "htd,hsd->hts"}> : () -> ()
    %cst_121 = arith.constant dense<0.000000e+00> : vector<2x16x16xf32>
    %374 = tpu.matmul %373, %366, %cst_121 {dimension_numbers = #tpu.dot_dimension_numbers<[2], [2], [1], [1], [0, 0, 0, 1, 1, 1], [0], [0]>} : vector<2x16x16xf32>, vector<2x16x16xf32>, vector<2x16x16xf32> -> vector<2x16x16xf32>
    "tpu.trace_stop"() : () -> ()
    %375 = vector.shape_cast %20 : vector<16x16xf32> to vector<1x16x16xf32>
    %376 = vector.broadcast %375 : vector<1x16x16xf32> to vector<2x16x16xf32>
    %377 = arith.addf %374, %376 : vector<2x16x16xf32>
    %cst_122 = arith.constant dense<0xFF800000> : vector<2x16xf32>
    %378 = vector.multi_reduction <maximumf>, %377, %cst_122 [2] : vector<2x16x16xf32> to vector<2x16xf32>
    %379 = vector.shape_cast %378 : vector<2x16xf32> to vector<2x16x1xf32>
    %380 = vector.broadcast %379 : vector<2x16x1xf32> to vector<2x16x16xf32>
    %381 = arith.subf %377, %380 : vector<2x16x16xf32>
    %382 = math.exp %381 : vector<2x16x16xf32>
    %cst_123 = arith.constant dense<0.000000e+00> : vector<2x16xf32>
    %383 = vector.multi_reduction <add>, %382, %cst_123 [2] : vector<2x16x16xf32> to vector<2x16xf32>
    %384 = vector.shape_cast %383 : vector<2x16xf32> to vector<2x16x1xf32>
    %385 = tpu.reciprocal %384 {approx = true} : vector<2x16x1xf32> -> vector<2x16x1xf32>
    %386 = vector.broadcast %385 : vector<2x16x1xf32> to vector<2x16x16xf32>
    %387 = arith.mulf %382, %386 : vector<2x16x16xf32>
    %c0_124 = arith.constant 0 : index
    %c0_125 = arith.constant 0 : index
    %c0_126 = arith.constant 0 : index
    %c0_127 = arith.constant 0 : index
    %388 = vector.load %arg13[%c0_124, %c0_125, %c0_126, %c0_127] : memref<1x2x16x16xf32, #tpu.memory_space<vmem>>, vector<1x2x16x16xf32>
    %389 = vector.shape_cast %388 : vector<1x2x16x16xf32> to vector<2x16x16xf32>
    %390 = vector.shape_cast %387 : vector<2x16x16xf32> to vector<1x2x16x16xf32>
    tpu.vector_store %arg13[%c0_124, %c0_125, %c0_126, %c0_127], %390 {strides = array<i32>} : memref<1x2x16x16xf32, #tpu.memory_space<vmem>>, vector<1x2x16x16xf32>,
    "tpu.trace_start"() <{level = 10 : i32, message = "hts,hsd->htd"}> : () -> ()
    %cst_128 = arith.constant dense<0.000000e+00> : vector<2x16x16xf32>
    %391 = tpu.matmul %387, %371, %cst_128 {dimension_numbers = #tpu.dot_dimension_numbers<[2], [1], [1], [2], [0, 0, 0, 1, 1, 2], [0], [0]>} : vector<2x16x16xf32>, vector<2x16x16xf32>, vector<2x16x16xf32> -> vector<2x16x16xf32>
    "tpu.trace_stop"() : () -> ()
    "tpu.trace_start"() <{level = 10 : i32, message = "htd,hdm->htm"}> : () -> ()
    %cst_129 = arith.constant dense<0.000000e+00> : vector<2x16x32xf32>
    %392 = tpu.matmul %391, %225, %cst_129 {dimension_numbers = #tpu.dot_dimension_numbers<[2], [1], [1], [2], [0, 0, 0, 1, 1, 2], [0], [0]>} : vector<2x16x16xf32>, vector<2x16x32xf32>, vector<2x16x32xf32> -> vector<2x16x32xf32>
    "tpu.trace_stop"() : () -> ()
    %cst_130 = arith.constant dense<0.000000e+00> : vector<16x32xf32>
    %393 = vector.multi_reduction <add>, %392, %cst_130 [0] : vector<2x16x32xf32> to vector<16x32xf32>
    %394 = arith.addf %393, %330 : vector<16x32xf32>
    %cst_131 = arith.constant dense<0.000000e+00> : vector<16xf32>
    %395 = vector.multi_reduction <add>, %394, %cst_131 [1] : vector<16x32xf32> to vector<16xf32>
    %396 = vector.shape_cast %395 : vector<16xf32> to vector<16x1xf32>
    %cst_132 = arith.constant 3.200000e+01 : f32
    %397 = vector.broadcast %cst_132 : f32 to vector<16x1xf32>
    %398 = arith.divf %396, %397 : vector<16x1xf32>
    %399 = vector.broadcast %398 : vector<16x1xf32> to vector<16x32xf32>
    %400 = arith.subf %394, %399 : vector<16x32xf32>
    %401 = arith.mulf %400, %400 : vector<16x32xf32>
    %cst_133 = arith.constant dense<0.000000e+00> : vector<16xf32>
    %402 = vector.multi_reduction <add>, %401, %cst_133 [1] : vector<16x32xf32> to vector<16xf32>
    %403 = vector.shape_cast %402 : vector<16xf32> to vector<16x1xf32>
    %cst_134 = arith.constant 3.200000e+01 : f32
    %404 = vector.broadcast %cst_134 : f32 to vector<16x1xf32>
    %405 = arith.divf %403, %404 : vector<16x1xf32>
    %406 = vector.broadcast %398 : vector<16x1xf32> to vector<16x32xf32>
    %407 = arith.subf %394, %406 : vector<16x32xf32>
    %cst_135 = arith.constant 9.99999997E-7 : f32
    %408 = vector.broadcast %cst_135 : f32 to vector<16x1xf32>
    %409 = arith.addf %405, %408 : vector<16x1xf32>
    %410 = math.rsqrt %409 : vector<16x1xf32>
    %411 = vector.broadcast %410 : vector<16x1xf32> to vector<16x32xf32>
    %412 = arith.mulf %407, %411 : vector<16x32xf32>
    %413 = vector.broadcast %236 : vector<1x32xf32> to vector<16x32xf32>
    %414 = arith.mulf %412, %413 : vector<16x32xf32>
    %415 = vector.broadcast %237 : vector<1x32xf32> to vector<16x32xf32>
    %416 = arith.addf %414, %415 : vector<16x32xf32>
    %cst_136 = arith.constant dense<0.000000e+00> : vector<16x64xf32>
    %417 = tpu.matmul %416, %227, %cst_136 {dimension_numbers = #tpu.dot_dimension_numbers<[1], [0], [0], [1], [0, 0, 1, 1], [], []>} : vector<16x32xf32>, vector<32x64xf32>, vector<16x64xf32> -> vector<16x64xf32>
    %418 = vector.broadcast %229 : vector<1x64xf32> to vector<16x64xf32>
    %419 = arith.addf %417, %418 : vector<16x64xf32>
    %cst_137 = arith.constant 0.000000e+00 : f32
    %420 = vector.broadcast %cst_137 : f32 to vector<16x64xf32>
    %421 = arith.maximumf %419, %420 : vector<16x64xf32>
    %cst_138 = arith.constant dense<0.000000e+00> : vector<16x32xf32>
    %422 = tpu.matmul %421, %231, %cst_138 {dimension_numbers = #tpu.dot_dimension_numbers<[1], [0], [0], [1], [0, 0, 1, 1], [], []>} : vector<16x64xf32>, vector<64x32xf32>, vector<16x32xf32> -> vector<16x32xf32>
    %423 = vector.broadcast %238 : vector<1x32xf32> to vector<16x32xf32>
    %424 = arith.addf %422, %423 : vector<16x32xf32>
    %425 = arith.addf %424, %394 : vector<16x32xf32>
    %c0_139 = arith.constant 0 : index
    %c0_140 = arith.constant 0 : index
    %c0_141 = arith.constant 0 : index
    %426 = vector.load %arg12[%c0_139, %c0_140, %c0_141] : memref<1x16x32xf32, #tpu.memory_space<vmem>>, vector<1x16x32xf32>
    %427 = vector.shape_cast %426 : vector<1x16x32xf32> to vector<16x32xf32>
    %428 = vector.shape_cast %425 : vector<16x32xf32> to vector<1x16x32xf32>
    tpu.vector_store %arg12[%c0_139, %c0_140, %c0_141], %428 {strides = array<i32>} : memref<1x16x32xf32, #tpu.memory_space<vmem>>, vector<1x16x32xf32>,
    return
  }
  func.func @transform_0(%arg0: i32) -> (i32, i32, i32) {
    %c0_i32 = arith.constant 0 : i32
    %c0_i32_0 = arith.constant 0 : i32
    %c0_i32_1 = arith.constant 0 : i32
    return %arg0, %c0_i32, %c0_i32_0 : i32, i32, i32
  }
  func.func @transform_1(%arg0: i32) -> (i32, i32, i32) {
    %c0_i32 = arith.constant 0 : i32
    %c0_i32_0 = arith.constant 0 : i32
    %c0_i32_1 = arith.constant 0 : i32
    return %arg0, %c0_i32, %c0_i32_0 : i32, i32, i32
  }
  func.func @transform_2(%arg0: i32) -> (i32, i32) {
    %c0_i32 = arith.constant 0 : i32
    %c0_i32_0 = arith.constant 0 : i32
    %c0_i32_1 = arith.constant 0 : i32
    return %c0_i32, %c0_i32_0 : i32, i32
  }
  func.func @transform_3(%arg0: i32) -> (i32, i32) {
    %c0_i32 = arith.constant 0 : i32
    %c0_i32_0 = arith.constant 0 : i32
    %c0_i32_1 = arith.constant 0 : i32
    return %c0_i32, %c0_i32_0 : i32, i32
  }
  func.func @transform_4(%arg0: i32) -> (i32, i32) {
    %c0_i32 = arith.constant 0 : i32
    %c0_i32_0 = arith.constant 0 : i32
    %c0_i32_1 = arith.constant 0 : i32
    return %c0_i32, %c0_i32_0 : i32, i32
  }
  func.func @transform_5(%arg0: i32) -> (i32, i32, i32) {
    %c0_i32 = arith.constant 0 : i32
    %c0_i32_0 = arith.constant 0 : i32
    %c0_i32_1 = arith.constant 0 : i32
    %c0_i32_2 = arith.constant 0 : i32
    return %c0_i32, %c0_i32_0, %c0_i32_1 : i32, i32, i32
  }
  func.func @transform_6(%arg0: i32) -> (i32, i32, i32, i32) {
    %c0_i32 = arith.constant 0 : i32
    %c0_i32_0 = arith.constant 0 : i32
    %c0_i32_1 = arith.constant 0 : i32
    %c0_i32_2 = arith.constant 0 : i32
    %c0_i32_3 = arith.constant 0 : i32
    return %c0_i32, %c0_i32_0, %c0_i32_1, %c0_i32_2 : i32, i32, i32, i32
  }
  func.func @transform_7(%arg0: i32) -> (i32, i32, i32) {
    %c0_i32 = arith.constant 0 : i32
    %c0_i32_0 = arith.constant 0 : i32
    %c0_i32_1 = arith.constant 0 : i32
    %c0_i32_2 = arith.constant 0 : i32
    return %c0_i32, %c0_i32_0, %c0_i32_1 : i32, i32, i32
  }
  func.func @transform_8(%arg0: i32) -> (i32, i32, i32) {
    %c0_i32 = arith.constant 0 : i32
    %c0_i32_0 = arith.constant 0 : i32
    %c0_i32_1 = arith.constant 0 : i32
    %c0_i32_2 = arith.constant 0 : i32
    return %c0_i32, %c0_i32_0, %c0_i32_1 : i32, i32, i32
  }
  func.func @transform_9(%arg0: i32) -> (i32, i32, i32) {
    %c0_i32 = arith.constant 0 : i32
    %c0_i32_0 = arith.constant 0 : i32
    %c0_i32_1 = arith.constant 0 : i32
    %c0_i32_2 = arith.constant 0 : i32
    return %c0_i32, %c0_i32_0, %c0_i32_1 : i32, i32, i32
  }
  func.func @transform_10(%arg0: i32) -> (i32, i32, i32) {
    %c0_i32 = arith.constant 0 : i32
    %c0_i32_0 = arith.constant 0 : i32
    %c0_i32_1 = arith.constant 0 : i32
    %c0_i32_2 = arith.constant 0 : i32
    return %c0_i32, %c0_i32_0, %c0_i32_1 : i32, i32, i32
  }
  func.func @transform_11(%arg0: i32) -> (i32, i32, i32) {
    %c0_i32 = arith.constant 0 : i32
    %c0_i32_0 = arith.constant 0 : i32
    %c0_i32_1 = arith.constant 0 : i32
    return %arg0, %c0_i32, %c0_i32_0 : i32, i32, i32
  }
  func.func @transform_12(%arg0: i32) -> (i32, i32, i32, i32) {
    %c0_i32 = arith.constant 0 : i32
    %c0_i32_0 = arith.constant 0 : i32
    %c0_i32_1 = arith.constant 0 : i32
    %c0_i32_2 = arith.constant 0 : i32
    return %arg0, %c0_i32, %c0_i32_0, %c0_i32_1 : i32, i32, i32, i32
  }
}

</mosaic_0001>

<llo_original>
// kernel: tpu_custom_call.1
$region0: #{tpu_custom_call.1}
  #allocation0 [shape = 'u32[]', space=smem, size = 0x4, offset = 0x4, fixed_abs, tag = 'smem constant byte address 0x4 - core index']
  #allocation1 [shape = 'u32[144,128]{1,0:T(1,128)}', space=vmem, size = 0x12000, scoped, tag = 'internal scratch']
  %s0 = inlined_call_operand.vmem [shape: f32[2,16,4], index: 0, kind: input, shape index: {}]
  %s1 = inlined_call_operand.vmem [shape: f32[2,16,4], index: 1, kind: input, shape index: {}]
  %s2 = inlined_call_operand.vmem [shape: f32[8,32], index: 2, kind: input, shape index: {}]
  %s3 = inlined_call_operand.vmem [shape: f32[1,32], index: 3, kind: input, shape index: {}]
  %s4 = inlined_call_operand.vmem [shape: f32[16,32], index: 4, kind: input, shape index: {}]
  %s5 = inlined_call_operand.vmem [shape: f32[2,32,96], index: 5, kind: input, shape index: {}]
  %s6 = inlined_call_operand.vmem [shape: f32[2,2,16,32], index: 6, kind: input, shape index: {}]
  %s7 = inlined_call_operand.vmem [shape: f32[2,32,64], index: 7, kind: input, shape index: {}]
  %s8 = inlined_call_operand.vmem [shape: f32[2,1,64], index: 8, kind: input, shape index: {}]
  %s9 = inlined_call_operand.vmem [shape: f32[2,64,32], index: 9, kind: input, shape index: {}]
  %s10 = inlined_call_operand.vmem [shape: f32[2,5,32], index: 10, kind: input, shape index: {}]
  %s11 = inlined_call_operand.hbm [shape: f32[2,16,32], index: 11, kind: output, shape index: {0}]
  %s12 = inlined_call_operand.hbm [shape: f32[2,2,16,16], index: 12, kind: output, shape index: {1}]
  %13 = xla_tuple %s11, %s12
  %s14 = sld [smem:[#allocation0]]
  $region85: #{tpu_custom_call.1} parent=0
    _
  %s16 = ssub.s32 1, %s14
  %s17 = scalar_select 0, %s16, %s14
  $region1: #{tpu_custom_call.1} parent=0
    #allocation2 [shape = 'u8[16384]{0}', space=vmem, size = 0x4000, scoped, tag = 'output window, operand 0']
    #allocation3 [shape = 's32[2]{0}', space=sflag, size = 0x8, scoped, tag = 'scoped memory for tpu_custom_call.1']
    #allocation4 [shape = 'u8[32768]{0}', space=vmem, size = 0x8000, scoped, tag = 'output window, operand 1']
    #allocation5 [shape = 's32[2]{0}', space=sflag, size = 0x8, scoped, tag = 'scoped memory for tpu_custom_call.1']
    %18 = vsyncpa [#allocation3], 0
    %s19 = scalar_lea.sflag [#allocation3], 1
    %20 = vsyncpa %s19, 0
    %21 = vsyncpa [#allocation5], 0
    %s22 = scalar_lea.sflag [#allocation5], 1
    %23 = vsyncpa %s22, 0
    loop: start=0, step=1, limit=4
    $region2: #{tpu_custom_call.1} parent=1 // loop_pre_header
      _
    $region3: #{tpu_custom_call.1} parent=1 // loop_header
      %s25 = sphi 0, %s29
      %p26 = scmp.ge.s32.totalorder %s25, 4
      %s35 = sphi 0, %s37
      %s38 = sphi 0, %s35
      %s39 = sphi 0, %s38
      %s55 = sphi 0, %s39
      %s61 = sphi 0, %s63
      %s64 = sphi 0, %s61
      %s65 = sphi 0, %s64
      %s81 = sphi 0, %s65
      %s85 = sphi 0, %s85
      %s87 = sphi 0, %s85
      %s88 = sphi 0, %s87
      %s102 = sphi 0, %s88
      %s106 = sphi 0, %s106
      %s108 = sphi 0, %s106
      %s109 = sphi 0, %s108
      %s123 = sphi 0, %s109
      %s127 = sphi 0, %s127
      %s129 = sphi 0, %s127
      %s130 = sphi 0, %s129
      %s144 = sphi 0, %s130
      %s148 = sphi 0, %s148
      %s150 = sphi 0, %s148
      %s151 = sphi 0, %s150
      %s165 = sphi 0, %s151
      %s169 = sphi 0, %s169
      %s171 = sphi 0, %s169
      %s172 = sphi 0, %s171
      %s186 = sphi 0, %s172
      %s190 = sphi 0, %s190
      %s192 = sphi 0, %s190
      %s193 = sphi 0, %s192
      %s207 = sphi 0, %s193
      %s211 = sphi 0, %s211
      %s213 = sphi 0, %s211
      %s214 = sphi 0, %s213
      %s228 = sphi 0, %s214
      %s232 = sphi 0, %s232
      %s234 = sphi 0, %s232
      %s235 = sphi 0, %s234
      %s249 = sphi 0, %s235
      %s253 = sphi 0, %s253
      %s255 = sphi 0, %s253
      %s256 = sphi 0, %s255
      %s270 = sphi 0, %s256
      %s276 = sphi 0, %s278
      %s279 = sphi 0, %s276
      %s280 = sphi 0, %s279
      %s296 = sphi 0, %s280
      %s302 = sphi 0, %s304
      %s305 = sphi 0, %s302
      %s306 = sphi 0, %s305
      %s322 = sphi 0, %s306
    $region4: #{tpu_custom_call.1} parent=1 // loop_header_branch
      %28 = sbr.rel (%p26) target = $region8
    $region5: #{tpu_custom_call.1} parent=1 // loop_body
      %s30 = ssub.s32 %s25, 1
      %s31 = ssub.s32 %s25, 2
      %s32 = sadd.s32 %s25, 1
      %s33 = ssub.s32 %s25, %s32
      %p34 = scmp.eq.s32.totalorder %s33, 0
      %s36 = sadd.s32 %s35, 1
      %s37 = scalar_select %p34, %s35, %s36
      %p40 = pneg %p34
      %p41 = scmp.eq.s32.totalorder %s25, 1
      %p42 = por %p40, %p41
      %p43 = scmp.ne.s32.totalorder %s35, %s38
      %p44 = scmp.eq.s32.totalorder %s25, 0
      %p45 = por %p43, %p44
      %p46 = scmp.ne.s32.totalorder %s35, %s38
      %p47 = scmp.eq.s32.totalorder %s30, 1
      %p48 = por %p46, %p47
      %p49 = scmp.ne.s32.totalorder %s38, %s39
      %p50 = scmp.eq.s32.totalorder %s30, 0
      %p51 = por %p49, %p50
      %p52 = scmp.ne.s32.totalorder %s38, %s39
      %p53 = scmp.eq.s32.totalorder %s31, 1
      %p54 = por %p52, %p53
      %p56 = scmp.ne.s32.totalorder %s39, %s55
      %p57 = scmp.eq.s32.totalorder %s31, 0
      %p58 = por %p56, %p57
      %s59 = ssub.s32 %s25, %s32
      %p60 = scmp.eq.s32.totalorder %s59, 0
      %s62 = sadd.s32 %s61, 1
      %s63 = scalar_select %p60, %s61, %s62
      %p66 = pneg %p60
      %p67 = scmp.eq.s32.totalorder %s25, 1
      %p68 = por %p66, %p67
      %p69 = scmp.ne.s32.totalorder %s61, %s64
      %p70 = scmp.eq.s32.totalorder %s25, 0
      %p71 = por %p69, %p70
      %p72 = scmp.ne.s32.totalorder %s61, %s64
      %p73 = scmp.eq.s32.totalorder %s30, 1
      %p74 = por %p72, %p73
      %p75 = scmp.ne.s32.totalorder %s64, %s65
      %p76 = scmp.eq.s32.totalorder %s30, 0
      %p77 = por %p75, %p76
      %p78 = scmp.ne.s32.totalorder %s64, %s65
      %p79 = scmp.eq.s32.totalorder %s31, 1
      %p80 = por %p78, %p79
      %p82 = scmp.ne.s32.totalorder %s65, %s81
      %p83 = scmp.eq.s32.totalorder %s31, 0
      %p84 = por %p82, %p83
      %s86 = sadd.s32 %s85, 1
      %p89 = scmp.eq.s32.totalorder %s25, 1
      %p90 = scmp.ne.s32.totalorder %s85, %s87
      %p91 = scmp.eq.s32.totalorder %s25, 0
      %p92 = por %p90, %p91
      %p93 = scmp.ne.s32.totalorder %s85, %s87
      %p94 = scmp.eq.s32.totalorder %s30, 1
      %p95 = por %p93, %p94
      %p96 = scmp.ne.s32.totalorder %s87, %s88
      %p97 = scmp.eq.s32.totalorder %s30, 0
      %p98 = por %p96, %p97
      %p99 = scmp.ne.s32.totalorder %s87, %s88
      %p100 = scmp.eq.s32.totalorder %s31, 1
      %p101 = por %p99, %p100
      %p103 = scmp.ne.s32.totalorder %s88, %s102
      %p104 = scmp.eq.s32.totalorder %s31, 0
      %p105 = por %p103, %p104
      %s107 = sadd.s32 %s106, 1
      %p110 = scmp.eq.s32.totalorder %s25, 1
      %p111 = scmp.ne.s32.totalorder %s106, %s108
      %p112 = scmp.eq.s32.totalorder %s25, 0
      %p113 = por %p111, %p112
      %p114 = scmp.ne.s32.totalorder %s106, %s108
      %p115 = scmp.eq.s32.totalorder %s30, 1
      %p116 = por %p114, %p115
      %p117 = scmp.ne.s32.totalorder %s108, %s109
      %p118 = scmp.eq.s32.totalorder %s30, 0
      %p119 = por %p117, %p118
      %p120 = scmp.ne.s32.totalorder %s108, %s109
      %p121 = scmp.eq.s32.totalorder %s31, 1
      %p122 = por %p120, %p121
      %p124 = scmp.ne.s32.totalorder %s109, %s123
      %p125 = scmp.eq.s32.totalorder %s31, 0
      %p126 = por %p124, %p125
      %s128 = sadd.s32 %s127, 1
      %p131 = scmp.eq.s32.totalorder %s25, 1
      %p132 = scmp.ne.s32.totalorder %s127, %s129
      %p133 = scmp.eq.s32.totalorder %s25, 0
      %p134 = por %p132, %p133
      %p135 = scmp.ne.s32.totalorder %s127, %s129
      %p136 = scmp.eq.s32.totalorder %s30, 1
      %p137 = por %p135, %p136
      %p138 = scmp.ne.s32.totalorder %s129, %s130
      %p139 = scmp.eq.s32.totalorder %s30, 0
      %p140 = por %p138, %p139
      %p141 = scmp.ne.s32.totalorder %s129, %s130
      %p142 = scmp.eq.s32.totalorder %s31, 1
      %p143 = por %p141, %p142
      %p145 = scmp.ne.s32.totalorder %s130, %s144
      %p146 = scmp.eq.s32.totalorder %s31, 0
      %p147 = por %p145, %p146
      %s149 = sadd.s32 %s148, 1
      %p152 = scmp.eq.s32.totalorder %s25, 1
      %p153 = scmp.ne.s32.totalorder %s148, %s150
      %p154 = scmp.eq.s32.totalorder %s25, 0
      %p155 = por %p153, %p154
      %p156 = scmp.ne.s32.totalorder %s148, %s150
      %p157 = scmp.eq.s32.totalorder %s30, 1
      %p158 = por %p156, %p157
      %p159 = scmp.ne.s32.totalorder %s150, %s151
      %p160 = scmp.eq.s32.totalorder %s30, 0
      %p161 = por %p159, %p160
      %p162 = scmp.ne.s32.totalorder %s150, %s151
      %p163 = scmp.eq.s32.totalorder %s31, 1
      %p164 = por %p162, %p163
      %p166 = scmp.ne.s32.totalorder %s151, %s165
      %p167 = scmp.eq.s32.totalorder %s31, 0
      %p168 = por %p166, %p167
      %s170 = sadd.s32 %s169, 1
      %p173 = scmp.eq.s32.totalorder %s25, 1
      %p174 = scmp.ne.s32.totalorder %s169, %s171
      %p175 = scmp.eq.s32.totalorder %s25, 0
      %p176 = por %p174, %p175
      %p177 = scmp.ne.s32.totalorder %s169, %s171
      %p178 = scmp.eq.s32.totalorder %s30, 1
      %p179 = por %p177, %p178
      %p180 = scmp.ne.s32.totalorder %s171, %s172
      %p181 = scmp.eq.s32.totalorder %s30, 0
      %p182 = por %p180, %p181
      %p183 = scmp.ne.s32.totalorder %s171, %s172
      %p184 = scmp.eq.s32.totalorder %s31, 1
      %p185 = por %p183, %p184
      %p187 = scmp.ne.s32.totalorder %s172, %s186
      %p188 = scmp.eq.s32.totalorder %s31, 0
      %p189 = por %p187, %p188
      %s191 = sadd.s32 %s190, 1
      %p194 = scmp.eq.s32.totalorder %s25, 1
      %p195 = scmp.ne.s32.totalorder %s190, %s192
      %p196 = scmp.eq.s32.totalorder %s25, 0
      %p197 = por %p195, %p196
      %p198 = scmp.ne.s32.totalorder %s190, %s192
      %p199 = scmp.eq.s32.totalorder %s30, 1
      %p200 = por %p198, %p199
      %p201 = scmp.ne.s32.totalorder %s192, %s193
      %p202 = scmp.eq.s32.totalorder %s30, 0
      %p203 = por %p201, %p202
      %p204 = scmp.ne.s32.totalorder %s192, %s193
      %p205 = scmp.eq.s32.totalorder %s31, 1
      %p206 = por %p204, %p205
      %p208 = scmp.ne.s32.totalorder %s193, %s207
      %p209 = scmp.eq.s32.totalorder %s31, 0
      %p210 = por %p208, %p209
      %s212 = sadd.s32 %s211, 1
      %p215 = scmp.eq.s32.totalorder %s25, 1
      %p216 = scmp.ne.s32.totalorder %s211, %s213
      %p217 = scmp.eq.s32.totalorder %s25, 0
      %p218 = por %p216, %p217
      %p219 = scmp.ne.s32.totalorder %s211, %s213
      %p220 = scmp.eq.s32.totalorder %s30, 1
      %p221 = por %p219, %p220
      %p222 = scmp.ne.s32.totalorder %s213, %s214
      %p223 = scmp.eq.s32.totalorder %s30, 0
      %p224 = por %p222, %p223
      %p225 = scmp.ne.s32.totalorder %s213, %s214
      %p226 = scmp.eq.s32.totalorder %s31, 1
      %p227 = por %p225, %p226
      %p229 = scmp.ne.s32.totalorder %s214, %s228
      %p230 = scmp.eq.s32.totalorder %s31, 0
      %p231 = por %p229, %p230
      %s233 = sadd.s32 %s232, 1
      %p236 = scmp.eq.s32.totalorder %s25, 1
      %p237 = scmp.ne.s32.totalorder %s232, %s234
      %p238 = scmp.eq.s32.totalorder %s25, 0
      %p239 = por %p237, %p238
      %p240 = scmp.ne.s32.totalorder %s232, %s234
      %p241 = scmp.eq.s32.totalorder %s30, 1
      %p242 = por %p240, %p241
      %p243 = scmp.ne.s32.totalorder %s234, %s235
      %p244 = scmp.eq.s32.totalorder %s30, 0
      %p245 = por %p243, %p244
      %p246 = scmp.ne.s32.totalorder %s234, %s235
      %p247 = scmp.eq.s32.totalorder %s31, 1
      %p248 = por %p246, %p247
      %p250 = scmp.ne.s32.totalorder %s235, %s249
      %p251 = scmp.eq.s32.totalorder %s31, 0
      %p252 = por %p250, %p251
      %s254 = sadd.s32 %s253, 1
      %p257 = scmp.eq.s32.totalorder %s25, 1
      %p258 = scmp.ne.s32.totalorder %s253, %s255
      %p259 = scmp.eq.s32.totalorder %s25, 0
      %p260 = por %p258, %p259
      %p261 = scmp.ne.s32.totalorder %s253, %s255
      %p262 = scmp.eq.s32.totalorder %s30, 1
      %p263 = por %p261, %p262
      %p264 = scmp.ne.s32.totalorder %s255, %s256
      %p265 = scmp.eq.s32.totalorder %s30, 0
      %p266 = por %p264, %p265
      %p267 = scmp.ne.s32.totalorder %s255, %s256
      %p268 = scmp.eq.s32.totalorder %s31, 1
      %p269 = por %p267, %p268
      %p271 = scmp.ne.s32.totalorder %s256, %s270
      %p272 = scmp.eq.s32.totalorder %s31, 0
      %p273 = por %p271, %p272
      %s274 = ssub.s32 %s25, %s32
      %p275 = scmp.eq.s32.totalorder %s274, 0
      %s277 = sadd.s32 %s276, 1
      %s278 = scalar_select %p275, %s276, %s277
      %p281 = pneg %p275
      %p282 = scmp.eq.s32.totalorder %s25, 1
      %p283 = por %p281, %p282
      %p284 = scmp.ne.s32.totalorder %s276, %s279
      %p285 = scmp.eq.s32.totalorder %s25, 0
      %p286 = por %p284, %p285
      %p287 = scmp.ne.s32.totalorder %s276, %s279
      %p288 = scmp.eq.s32.totalorder %s30, 1
      %p289 = por %p287, %p288
      %p290 = scmp.ne.s32.totalorder %s279, %s280
      %p291 = scmp.eq.s32.totalorder %s30, 0
      %p292 = por %p290, %p291
      %p293 = scmp.ne.s32.totalorder %s279, %s280
      %p294 = scmp.eq.s32.totalorder %s31, 1
      %p295 = por %p293, %p294
      %p297 = scmp.ne.s32.totalorder %s280, %s296
      %p298 = scmp.eq.s32.totalorder %s31, 0
      %p299 = por %p297, %p298
      %s300 = ssub.s32 %s25, %s32
      %p301 = scmp.eq.s32.totalorder %s300, 0
      %s303 = sadd.s32 %s302, 1
      %s304 = scalar_select %p301, %s302, %s303
      %p307 = pneg %p301
      %p308 = scmp.eq.s32.totalorder %s25, 1
      %p309 = por %p307, %p308
      %p310 = scmp.ne.s32.totalorder %s302, %s305
      %p311 = scmp.eq.s32.totalorder %s25, 0
      %p312 = por %p310, %p311
      %p313 = scmp.ne.s32.totalorder %s302, %s305
      %p314 = scmp.eq.s32.totalorder %s30, 1
      %p315 = por %p313, %p314
      %p316 = scmp.ne.s32.totalorder %s305, %s306
      %p317 = scmp.eq.s32.totalorder %s30, 0
      %p318 = por %p316, %p317
      %p319 = scmp.ne.s32.totalorder %s305, %s306
      %p320 = scmp.eq.s32.totalorder %s31, 1
      %p321 = por %p319, %p320
      %p323 = scmp.ne.s32.totalorder %s306, %s322
      %p324 = scmp.eq.s32.totalorder %s31, 0
      %p325 = por %p323, %p324
      %p326 = scmp.le.s32.totalorder 1, %s25
      %p327 = scmp.lt.s32.totalorder %s25, 3
      %p328 = pnand %p326, %p327
      %p329 = pneg %p328
      // Predicated region
      $region9: #{tpu_custom_call.1} parent=5 // pred_check
        _
      $region10: #{tpu_custom_call.1} parent=5 // pred_check_branch
        %331 = sbr.rel (%p328) target = $region12
      $region11: #{tpu_custom_call.1} parent=5 // pred_region
        %s332 = ssub.s32 %s25, 1
        // Predicated region
        $region13: #{tpu_custom_call.1} parent=11 // pred_check
          %p333 = pneg %p98
        $region14: #{tpu_custom_call.1} parent=11 // pred_check_branch
          %335 = sbr.rel (%p333) target = $region16
        $region15: #{tpu_custom_call.1} parent=11 // pred_region
          _
        $region16: #{tpu_custom_call.1} parent=11 // pred_fallthru
          _
        // Predicated region
        $region17: #{tpu_custom_call.1} parent=11 // pred_check
          %p336 = pneg %p119
        $region18: #{tpu_custom_call.1} parent=11 // pred_check_branch
          %338 = sbr.rel (%p336) target = $region20
        $region19: #{tpu_custom_call.1} parent=11 // pred_region
          _
        $region20: #{tpu_custom_call.1} parent=11 // pred_fallthru
          _
        // Predicated region
        $region21: #{tpu_custom_call.1} parent=11 // pred_check
          %p339 = pneg %p140
        $region22: #{tpu_custom_call.1} parent=11 // pred_check_branch
          %341 = sbr.rel (%p339) target = $region24
        $region23: #{tpu_custom_call.1} parent=11 // pred_region
          _
        $region24: #{tpu_custom_call.1} parent=11 // pred_fallthru
          _
        // Predicated region
        $region25: #{tpu_custom_call.1} parent=11 // pred_check
          %p342 = pneg %p161
        $region26: #{tpu_custom_call.1} parent=11 // pred_check_branch
          %344 = sbr.rel (%p342) target = $region28
        $region27: #{tpu_custom_call.1} parent=11 // pred_region
          _
        $region28: #{tpu_custom_call.1} parent=11 // pred_fallthru
          _
        // Predicated region
        $region29: #{tpu_custom_call.1} parent=11 // pred_check
          %p345 = pneg %p182
        $region30: #{tpu_custom_call.1} parent=11 // pred_check_branch
          %347 = sbr.rel (%p345) target = $region32
        $region31: #{tpu_custom_call.1} parent=11 // pred_region
          _
        $region32: #{tpu_custom_call.1} parent=11 // pred_fallthru
          _
        // Predicated region
        $region33: #{tpu_custom_call.1} parent=11 // pred_check
          %p348 = pneg %p203
        $region34: #{tpu_custom_call.1} parent=11 // pred_check_branch
          %350 = sbr.rel (%p348) target = $region36
        $region35: #{tpu_custom_call.1} parent=11 // pred_region
          _
        $region36: #{tpu_custom_call.1} parent=11 // pred_fallthru
          _
        // Predicated region
        $region37: #{tpu_custom_call.1} parent=11 // pred_check
          %p351 = pneg %p224
        $region38: #{tpu_custom_call.1} parent=11 // pred_check_branch
          %353 = sbr.rel (%p351) target = $region40
        $region39: #{tpu_custom_call.1} parent=11 // pred_region
          _
        $region40: #{tpu_custom_call.1} parent=11 // pred_fallthru
          _
        // Predicated region
        $region41: #{tpu_custom_call.1} parent=11 // pred_check
          %p354 = pneg %p245
        $region42: #{tpu_custom_call.1} parent=11 // pred_check_branch
          %356 = sbr.rel (%p354) target = $region44
        $region43: #{tpu_custom_call.1} parent=11 // pred_region
          _
        $region44: #{tpu_custom_call.1} parent=11 // pred_fallthru
          _
        // Predicated region
        $region45: #{tpu_custom_call.1} parent=11 // pred_check
          %p357 = pneg %p266
        $region46: #{tpu_custom_call.1} parent=11 // pred_check_branch
          %359 = sbr.rel (%p357) target = $region48
        $region47: #{tpu_custom_call.1} parent=11 // pred_region
          _
        $region48: #{tpu_custom_call.1} parent=11 // pred_fallthru
          _
      $region12: #{tpu_custom_call.1} parent=5 // pred_fallthru
        _
      %p360 = scmp.lt.s32.totalorder %s25, 2
      // Predicated region
      $region49: #{tpu_custom_call.1} parent=5 // pred_check
        %p361 = pneg %p360
      $region50: #{tpu_custom_call.1} parent=5 // pred_check_branch
        %363 = sbr.rel (%p361) target = $region52
      $region51: #{tpu_custom_call.1} parent=5 // pred_region
        // Predicated region
        $region53: #{tpu_custom_call.1} parent=51 // pred_check
          %p364 = pneg %p45
        $region54: #{tpu_custom_call.1} parent=51 // pred_check_branch
          %366 = sbr.rel (%p364) target = $region56
        $region55: #{tpu_custom_call.1} parent=51 // pred_region
          %p367 = scmp.lt.s32.totalorder %s25, 1
          %s368 = scalar_select %p367, %s25, 1
          %s369 = smul.addr %s368, 2
          %s370 = smul.addr %s369, 8
          %s371 = scalar_lea.vmem %s0, %s370
        $region56: #{tpu_custom_call.1} parent=51 // pred_fallthru
          _
        // Predicated region
        $region57: #{tpu_custom_call.1} parent=51 // pred_check
          %p372 = pneg %p71
        $region58: #{tpu_custom_call.1} parent=51 // pred_check_branch
          %374 = sbr.rel (%p372) target = $region60
        $region59: #{tpu_custom_call.1} parent=51 // pred_region
          %p375 = scmp.lt.s32.totalorder %s25, 1
          %s376 = scalar_select %p375, %s25, 1
          %s377 = smul.addr %s376, 2
          %s378 = smul.addr %s377, 8
          %s379 = scalar_lea.vmem %s1, %s378
        $region60: #{tpu_custom_call.1} parent=51 // pred_fallthru
          _
      $region52: #{tpu_custom_call.1} parent=5 // pred_fallthru
        _
      %p380 = scmp.le.s32.totalorder 1, %s25
      %p381 = scmp.lt.s32.totalorder %s25, 3
      %p382 = pnand %p380, %p381
      %p383 = pneg %p382
      // Predicated region
      $region61: #{tpu_custom_call.1} parent=5 // pred_check
        _
      $region62: #{tpu_custom_call.1} parent=5 // pred_check_branch
        %385 = sbr.rel (%p382) target = $region64
      $region63: #{tpu_custom_call.1} parent=5 // pred_region
        %s386 = ssub.s32 %s25, 1
        %p387 = scmp.lt.s32.totalorder %s30, 1
        %s388 = scalar_select %p387, %s30, 1
        %s389 = smul.addr %s388, 2
        %s390 = smul.addr %s389, 8
        %s391 = scalar_lea.vmem %s0, %s390
        %p392 = pneg %p51
        %p393 = pneg %p48
        %p394 = scmp.lt.s32.totalorder %s30, 1
        %s395 = scalar_select %p394, %s30, 1
        %s396 = smul.addr %s395, 2
        %s397 = smul.addr %s396, 8
        %s398 = scalar_lea.vmem %s1, %s397
        %p399 = pneg %p77
        %p400 = pneg %p74
        %p401 = pneg %p98
        %p402 = pneg %p95
        %p403 = pneg %p119
        %p404 = pneg %p116
        %p405 = pneg %p140
        %p406 = pneg %p137
        %p407 = pneg %p161
        %p408 = pneg %p158
        %p409 = pneg %p182
        %p410 = pneg %p179
        %p411 = pneg %p203
        %p412 = pneg %p200
        %p413 = pneg %p224
        %p414 = pneg %p221
        %p415 = pneg %p245
        %p416 = pneg %p242
        %p417 = pneg %p266
        %p418 = pneg %p263
        %p419 = pneg %p292
        %p420 = pneg %p289
        %s421 = sand.u32 %s279, 1
        %s422 = scalar_lea.sflag [#allocation3], %s421
        %s423 = sand.u32 %s279, 1
        %s424 = smul.addr %s423, 16
        %s425 = scalar_lea.vmem [#allocation2], %s424
        %p426 = pneg %p318
        %p427 = pneg %p315
        %s428 = sand.u32 %s305, 1
        %s429 = scalar_lea.sflag [#allocation5], %s428
        %s430 = sand.u32 %s305, 1
        %s431 = smul.addr %s430, 32
        %s432 = scalar_lea.vmem [#allocation4], %s431
        %p433 = scmp.lt.s32.totalorder %s30, 1
        %s434 = scalar_select %p433, %s30, 1
        %s435 = smul.addr %s434, 2
        %s436 = smul.addr %s435, 8
        %s437 = scalar_lea.vmem %s0, %s436
        %p438 = scmp.lt.s32.totalorder %s30, 1
        %s439 = scalar_select %p438, %s30, 1
        %s440 = smul.addr %s439, 2
        %s441 = smul.addr %s440, 8
        %s442 = scalar_lea.vmem %s1, %s441
        %v443 = vld [vmem:[%s437] sm:$0xff]
        %v444 = vld [vmem:[%s437 + $0x8] sm:$0xff]
        %v445 = vld [vmem:[%s442] sm:$0xff]
        %v446 = vld [vmem:[%s442 + $0x8] sm:$0xff]
        %v447 = vld [vmem:[%s2] sm:$0xff]
        %v449 = vrot.slane %v447, 4
        %vm450 = vcmask 31744
        %v452 = vsel %vm450, %v445, 0
        %v455 = vsel %vm450, %v446, 0
        %vm457 = vcmask 1043456
        %v458 = vsel %vm457, %v449, 0
        %460 = vmatprep.subr.mxu0 0.0
        %461 = vmatpush1.msra.mxu0 %v458
        %462 = vmatprep.subr.mxu0 0.0
        %463 = vmatpush1.msra.mxu0 0.0
        %464 = vmatprep.subr.mxu0 0.0
        %465 = vmatpush1.msra.mxu0 0.0
        %466 = vmatprep.subr.mxu0 0.0
        %467 = vmatpush1.msra.mxu0 0.0
        %468 = vmatprep.subr.mxu0 0.0
        %469 = vmatpush1.msra.mxu0 0.0
        %470 = vmatprep.subr.mxu0 0.0
        %471 = vmatpush1.msra.mxu0 0.0
        %472 = vmatprep.subr.mxu0 0.0
        %473 = vmatpush1.msra.mxu0 0.0
        %474 = vmatprep.subr.mxu0 0.0
        %475 = vmatpush1.msra.mxu0 0.0
        %476 = vmatprep.subr.mxu0 0.0
        %477 = vmatpush1.msra.mxu0 0.0
        %478 = vmatprep.subr.mxu0 0.0
        %479 = vmatpush1.msra.mxu0 0.0
        %480 = vmatprep.subr.mxu0 0.0
        %481 = vmatpush1.msra.mxu0 0.0
        %482 = vmatprep.subr.mxu0 0.0
        %483 = vmatpush1.msra.mxu0 0.0
        %484 = vmatprep.subr.mxu0 0.0
        %485 = vmatpush1.msra.mxu0 0.0
        %486 = vmatprep.subr.mxu0 0.0
        %487 = vmatpush1.msra.mxu0 0.0
        %488 = vmatprep.subr.mxu0 0.0
        %489 = vmatpush1.msra.mxu0 0.0
        %490 = vmatprep.subr.mxu0 0.0
        %491 = vmatpush1.msra.mxu0 0.0
        %492 = vmatprep.subr.mxu0 0.0
        %493 = vmatpush1.msra.mxu0 0.0
        %494 = vmatprep.subr.mxu0 0.0
        %495 = vmatpush1.msra.mxu0 0.0
        %496 = vmatprep.subr.mxu0 0.0
        %497 = vmatpush1.msra.mxu0 0.0
        %498 = vmatprep.subr.mxu0 0.0
        %499 = vmatpush1.msra.mxu0 0.0
        %500 = vmatprep.subr.mxu0 0.0
        %501 = vmatpush1.msra.mxu0 0.0
        %502 = vmatprep.subr.mxu0 0.0
        %503 = vmatpush1.msra.mxu0 0.0
        %504 = vmatprep.subr.mxu0 0.0
        %505 = vmatpush1.msra.mxu0 0.0
        %506 = vmatprep.subr.mxu0 0.0
        %507 = vmatpush1.msra.mxu0 0.0
        %508 = vmatprep.subr.mxu0 0.0
        %509 = vmatpush1.msra.mxu0 0.0
        %510 = vmatprep.subr.mxu0 0.0
        %511 = vmatpush1.msra.mxu0 0.0
        %512 = vmatprep.subr.mxu0 0.0
        %513 = vmatpush1.msra.mxu0 0.0
        %514 = vmatprep.subr.mxu0 0.0
        %515 = vmatpush1.msra.mxu0 0.0
        %516 = vmatprep.subr.mxu0 0.0
        %517 = vmatpush1.msra.mxu0 0.0
        %518 = vmatprep.subr.mxu0 0.0
        %519 = vmatpush1.msra.mxu0 0.0
        %520 = vmatprep.subr.mxu0 0.0
        %521 = vmatpush1.msra.mxu0 0.0
        %522 = vmatprep.subr.mxu0 0.0
        %523 = vmatpush1.msra.mxu0 0.0
        %524 = vmatprep.mubr.f32.mxu0 0.0
        %525 = vmatmul.mubr.f32.gmra.mrb[0].mxu0 %v452
        %v526 = vpop.f32.mrb[0].mxu0
        %v527 = vadd.f32 0.0, %v526
        %v528 = vpop.f32.mrb[0].mxu0
        %529 = vmatprep.mubr.f32.mxu0 0.0
        %530 = vmatmul.mubr.f32.gmra.mrb[0].mxu0 %v455
        %v531 = vpop.f32.mrb[0].mxu0
        %v532 = vadd.f32 0.0, %v531
        %v533 = vpop.f32.mrb[0].mxu0
        %534 = vdwg.mxu0
        %v536 = vsel %vm450, %v443, 0
        %v539 = vsel %vm450, %v444, 0
        %v541 = vsel %vm457, %v447, 0
        %543 = vmatprep.subr.mxu0 0.0
        %544 = vmatpush1.msra.mxu0 %v541
        %545 = vmatprep.subr.mxu0 0.0
        %546 = vmatpush1.msra.mxu0 0.0
        %547 = vmatprep.subr.mxu0 0.0
        %548 = vmatpush1.msra.mxu0 0.0
        %549 = vmatprep.subr.mxu0 0.0
        %550 = vmatpush1.msra.mxu0 0.0
        %551 = vmatprep.subr.mxu0 0.0
        %552 = vmatpush1.msra.mxu0 0.0
        %553 = vmatprep.subr.mxu0 0.0
        %554 = vmatpush1.msra.mxu0 0.0
        %555 = vmatprep.subr.mxu0 0.0
        %556 = vmatpush1.msra.mxu0 0.0
        %557 = vmatprep.subr.mxu0 0.0
        %558 = vmatpush1.msra.mxu0 0.0
        %559 = vmatprep.subr.mxu0 0.0
        %560 = vmatpush1.msra.mxu0 0.0
        %561 = vmatprep.subr.mxu0 0.0
        %562 = vmatpush1.msra.mxu0 0.0
        %563 = vmatprep.subr.mxu0 0.0
        %564 = vmatpush1.msra.mxu0 0.0
        %565 = vmatprep.subr.mxu0 0.0
        %566 = vmatpush1.msra.mxu0 0.0
        %567 = vmatprep.subr.mxu0 0.0
        %568 = vmatpush1.msra.mxu0 0.0
        %569 = vmatprep.subr.mxu0 0.0
        %570 = vmatpush1.msra.mxu0 0.0
        %571 = vmatprep.subr.mxu0 0.0
        %572 = vmatpush1.msra.mxu0 0.0
        %573 = vmatprep.subr.mxu0 0.0
        %574 = vmatpush1.msra.mxu0 0.0
        %575 = vmatprep.subr.mxu0 0.0
        %576 = vmatpush1.msra.mxu0 0.0
        %577 = vmatprep.subr.mxu0 0.0
        %578 = vmatpush1.msra.mxu0 0.0
        %579 = vmatprep.subr.mxu0 0.0
        %580 = vmatpush1.msra.mxu0 0.0
        %581 = vmatprep.subr.mxu0 0.0
        %582 = vmatpush1.msra.mxu0 0.0
        %583 = vmatprep.subr.mxu0 0.0
        %584 = vmatpush1.msra.mxu0 0.0
        %585 = vmatprep.subr.mxu0 0.0
        %586 = vmatpush1.msra.mxu0 0.0
        %587 = vmatprep.subr.mxu0 0.0
        %588 = vmatpush1.msra.mxu0 0.0
        %589 = vmatprep.subr.mxu0 0.0
        %590 = vmatpush1.msra.mxu0 0.0
        %591 = vmatprep.subr.mxu0 0.0
        %592 = vmatpush1.msra.mxu0 0.0
        %593 = vmatprep.subr.mxu0 0.0
        %594 = vmatpush1.msra.mxu0 0.0
        %595 = vmatprep.subr.mxu0 0.0
        %596 = vmatpush1.msra.mxu0 0.0
        %597 = vmatprep.subr.mxu0 0.0
        %598 = vmatpush1.msra.mxu0 0.0
        %599 = vmatprep.subr.mxu0 0.0
        %600 = vmatpush1.msra.mxu0 0.0
        %601 = vmatprep.subr.mxu0 0.0
        %602 = vmatpush1.msra.mxu0 0.0
        %603 = vmatprep.subr.mxu0 0.0
        %604 = vmatpush1.msra.mxu0 0.0
        %605 = vmatprep.subr.mxu0 0.0
        %606 = vmatpush1.msra.mxu0 0.0
        %607 = vmatprep.mubr.f32.mxu0 0.0
        %608 = vmatmul.mubr.f32.gmra.mrb[0].mxu0 %v536
        %v609 = vpop.f32.mrb[0].mxu0
        %v610 = vadd.f32 %v527, %v609
        %v611 = vpop.f32.mrb[0].mxu0
        %612 = vmatprep.mubr.f32.mxu0 0.0
        %613 = vmatmul.mubr.f32.gmra.mrb[0].mxu0 %v539
        %v614 = vpop.f32.mrb[0].mxu0
        %v615 = vadd.f32 %v532, %v614
        %v616 = vpop.f32.mrb[0].mxu0
        %617 = vdwg.mxu0
        %v618 = vld [vmem:[%s3] sm:$0x1]
        %v620 = vlaneseq
        %v621 = vshrl.u32 %v620, 7
        %v622 = vsub.s32 0, %v621
        %v623 = vrot.slane %v618, %v622
        %v625 = vadd.f32 %v610, %v623
        %v626 = vadd.f32 %v615, %v623
        %v627 = vld [vmem:[%s4] sm:$0xff]
        %v628 = vld [vmem:[%s4 + $0x8] sm:$0xff]
        %v629 = vadd.f32 %v625, %v627
        %v630 = vadd.f32 %v626, %v628
        %v631 = vlaneseq
        %v632 = vshrl.u32 %v631, 7
        %v633 = vadd.s32 %v632, 8
        %v634 = vlaneseq
        %v635 = vand.u32 %v634, 127
        %vm636 = vcmp.eq.s32.totalorder %v632, %v635
        %vm637 = vcmp.eq.s32.totalorder %v633, %v635
        %v638 = vsel %vm636, -1e+09, 0.0
        %v639 = vsel %vm637, -1e+09, 0.0
        %v640 = vld [vmem:[%s5] sm:$0xff]
        %v641 = vld [vmem:[%s5 + $0x8] sm:$0xff]
        %v642 = vld [vmem:[%s5 + $0x10] sm:$0xff]
        %v643 = vld [vmem:[%s5 + $0x18] sm:$0xff]
        %v644 = vld [vmem:[%s6] sm:$0xff]
        %v645 = vld [vmem:[%s6 + $0x8] sm:$0xff]
        %v646 = vld [vmem:[%s6 + $0x10] sm:$0xff]
        %v647 = vld [vmem:[%s6 + $0x18] sm:$0xff]
        %v648 = vld [vmem:[%s7] sm:$0xff]
        %v649 = vld [vmem:[%s7 + $0x8] sm:$0xff]
        %v650 = vld [vmem:[%s7 + $0x10] sm:$0xff]
        %v651 = vld [vmem:[%s7 + $0x18] sm:$0xff]
        %v652 = vld [vmem:[%s8] sm:$0x1]
        %v653 = vld [vmem:[%s9] sm:$0xff]
        %v654 = vld [vmem:[%s9 + $0x8] sm:$0xff]
        %v655 = vld [vmem:[%s9 + $0x10] sm:$0xff]
        %v656 = vld [vmem:[%s9 + $0x18] sm:$0xff]
        %v657 = vld [vmem:[%s9 + $0x20] sm:$0xff]
        %v658 = vld [vmem:[%s9 + $0x28] sm:$0xff]
        %v659 = vld [vmem:[%s9 + $0x30] sm:$0xff]
        %v660 = vld [vmem:[%s9 + $0x38] sm:$0xff]
        %v661 = vld [vmem:[%s10] sm:$0x1f]
        %vm662 = vcmask 261120
        %v663 = vsel %vm662, %v629, 0.0
        %664 = vadd.xlane.f32.xlu0 %v663
        %v665 = vpop.xlane.xlu0 %664
        %v666 = vsel %vm662, %v630, 0.0
        %667 = vadd.xlane.f32.xlu0 %v666
        %v668 = vpop.xlane.xlu0 %667
        %v669 = vrcp.pop 32.0
        %v670 = vmul.f32 %v665, %v669
        %v671 = vmul.f32 %v668, %v669
        %v672 = vsub.f32 %v629, %v670
        %v673 = vsub.f32 %v630, %v671
        %v674 = vmul.f32 %v672, %v672
        %v675 = vmul.f32 %v673, %v673
        %v676 = vsel %vm662, %v674, 0.0
        %677 = vadd.xlane.f32.xlu0 %v676
        %v678 = vpop.xlane.xlu0 %677
        %v679 = vsel %vm662, %v675, 0.0
        %680 = vadd.xlane.f32.xlu0 %v679
        %v681 = vpop.xlane.xlu0 %680
        %v682 = vmul.f32 %v678, %v669
        %v683 = vmul.f32 %v681, %v669
        %v684 = vadd.f32 %v682, 1e-05
        %v685 = vadd.f32 %v683, 1e-05
        %v686 = vrsqrt.pop %v684
        %v687 = vrsqrt.pop %v685
        %v688 = vmul.f32 %v672, %v686
        %v689 = vmul.f32 %v673, %v687
        %v690 = vlaneseq
        %v691 = vshrl.u32 %v690, 7
        %v692 = vsub.s32 0, %v691
        %v693 = vrot.slane %v661, %v692
        %v694 = vmul.f32 %v688, %v693
        %v695 = vmul.f32 %v689, %v693
        %v696 = vlaneseq
        %v697 = vshrl.u32 %v696, 7
        %v698 = vsub.s32 1, %v697
        %v699 = vrot.slane %v661, %v698
        %v700 = vadd.f32 %v694, %v699
        %v701 = vadd.f32 %v695, %v699
        %v703 = vsel %vm662, %v700, 0
        %v706 = vsel %vm662, %v701, 0
        %708 = vmatprep.subr.mxu0 0.0
        %709 = vmatpush1.msra.mxu0 %v640
        %710 = vmatprep.subr.mxu0 0.0
        %711 = vmatpush1.msra.mxu0 %v641
        %712 = vmatprep.subr.mxu0 0.0
        %713 = vmatpush1.msra.mxu0 %v642
        %714 = vmatprep.subr.mxu0 0.0
        %715 = vmatpush1.msra.mxu0 %v643
        %716 = vmatprep.subr.mxu0 0.0
        %717 = vmatpush1.msra.mxu0 0.0
        %718 = vmatprep.subr.mxu0 0.0
        %719 = vmatpush1.msra.mxu0 0.0
        %720 = vmatprep.subr.mxu0 0.0
        %721 = vmatpush1.msra.mxu0 0.0
        %722 = vmatprep.subr.mxu0 0.0
        %723 = vmatpush1.msra.mxu0 0.0
        %724 = vmatprep.subr.mxu0 0.0
        %725 = vmatpush1.msra.mxu0 0.0
        %726 = vmatprep.subr.mxu0 0.0
        %727 = vmatpush1.msra.mxu0 0.0
        %728 = vmatprep.subr.mxu0 0.0
        %729 = vmatpush1.msra.mxu0 0.0
        %730 = vmatprep.subr.mxu0 0.0
        %731 = vmatpush1.msra.mxu0 0.0
        %732 = vmatprep.subr.mxu0 0.0
        %733 = vmatpush1.msra.mxu0 0.0
        %734 = vmatprep.subr.mxu0 0.0
        %735 = vmatpush1.msra.mxu0 0.0
        %736 = vmatprep.subr.mxu0 0.0
        %737 = vmatpush1.msra.mxu0 0.0
        %738 = vmatprep.subr.mxu0 0.0
        %739 = vmatpush1.msra.mxu0 0.0
        %740 = vmatprep.subr.mxu0 0.0
        %741 = vmatpush1.msra.mxu0 0.0
        %742 = vmatprep.subr.mxu0 0.0
        %743 = vmatpush1.msra.mxu0 0.0
        %744 = vmatprep.subr.mxu0 0.0
        %745 = vmatpush1.msra.mxu0 0.0
        %746 = vmatprep.subr.mxu0 0.0
        %747 = vmatpush1.msra.mxu0 0.0
        %748 = vmatprep.subr.mxu0 0.0
        %749 = vmatpush1.msra.mxu0 0.0
        %750 = vmatprep.subr.mxu0 0.0
        %751 = vmatpush1.msra.mxu0 0.0
        %752 = vmatprep.subr.mxu0 0.0
        %753 = vmatpush1.msra.mxu0 0.0
        %754 = vmatprep.subr.mxu0 0.0
        %755 = vmatpush1.msra.mxu0 0.0
        %756 = vmatprep.subr.mxu0 0.0
        %757 = vmatpush1.msra.mxu0 0.0
        %758 = vmatprep.subr.mxu0 0.0
        %759 = vmatpush1.msra.mxu0 0.0
        %760 = vmatprep.subr.mxu0 0.0
        %761 = vmatpush1.msra.mxu0 0.0
        %762 = vmatprep.subr.mxu0 0.0
        %763 = vmatpush1.msra.mxu0 0.0
        %764 = vmatprep.subr.mxu0 0.0
        %765 = vmatpush1.msra.mxu0 0.0
        %766 = vmatprep.subr.mxu0 0.0
        %767 = vmatpush1.msra.mxu0 0.0
        %768 = vmatprep.subr.mxu0 0.0
        %769 = vmatpush1.msra.mxu0 0.0
        %770 = vmatprep.subr.mxu0 0.0
        %771 = vmatpush1.msra.mxu0 0.0
        %772 = vmatprep.mubr.f32.mxu0 0.0
        %773 = vmatmul.mubr.f32.gmra.mrb[0].mxu0 %v703
        %v774 = vpop.f32.mrb[0].mxu0
        %v775 = vadd.f32 0.0, %v774
        %v776 = vpop.f32.mrb[0].mxu0
        %777 = vmatprep.mubr.f32.mxu0 0.0
        %778 = vmatmul.mubr.f32.gmra.mrb[0].mxu0 %v706
        %v779 = vpop.f32.mrb[0].mxu0
        %v780 = vadd.f32 0.0, %v779
        %v781 = vpop.f32.mrb[0].mxu0
        %782 = vdwg.mxu0
        %785 = vrot.lane.b32.xlu0 %v775, 112
        %v786 = vpop.permute.xlu0 %785
        %787 = vrot.lane.b32.xlu0 %v780, 112
        %v788 = vpop.permute.xlu0 %787
        %v791 = vmul.f32 %v775, 0.25
        %v792 = vmul.f32 %v780, 0.25
        %v793 = vmul.f32 %v786, 0.25
        %v794 = vmul.f32 %v788, 0.25
        %795 = vrot.lane.b32.xlu0 %v775, 96
        %v796 = vpop.permute.xlu0 %795
        %797 = vrot.lane.b32.xlu0 %v780, 96
        %v798 = vpop.permute.xlu0 %797
        %vm799 = vcmask 130048
        %v801 = vsel %vm799, %v791, 0
        %v804 = vsel %vm799, %v792, 0
        %v806 = vsel %vm799, %v796, 0
        %v808 = vsel %vm799, %v798, 0
        %810 = vmatprep.subr.mxu0 0.0
        %811 = vmatpush1.xpose.msra.mxu0 %v806
        %812 = vmatprep.subr.mxu0 0.0
        %813 = vmatpush1.xpose.msra.mxu0 %v808
        %814 = vmatprep.subr.mxu0 0.0
        %815 = vmatpush1.xpose.msra.mxu0 0.0
        %816 = vmatprep.subr.mxu0 0.0
        %817 = vmatpush1.xpose.msra.mxu0 0.0
        %818 = vmatprep.subr.mxu0 0.0
        %819 = vmatpush1.xpose.msra.mxu0 0.0
        %820 = vmatprep.subr.mxu0 0.0
        %821 = vmatpush1.xpose.msra.mxu0 0.0
        %822 = vmatprep.subr.mxu0 0.0
        %823 = vmatpush1.xpose.msra.mxu0 0.0
        %824 = vmatprep.subr.mxu0 0.0
        %825 = vmatpush1.xpose.msra.mxu0 0.0
        %826 = vmatprep.subr.mxu0 0.0
        %827 = vmatpush1.xpose.msra.mxu0 0.0
        %828 = vmatprep.subr.mxu0 0.0
        %829 = vmatpush1.xpose.msra.mxu0 0.0
        %830 = vmatprep.subr.mxu0 0.0
        %831 = vmatpush1.xpose.msra.mxu0 0.0
        %832 = vmatprep.subr.mxu0 0.0
        %833 = vmatpush1.xpose.msra.mxu0 0.0
        %834 = vmatprep.subr.mxu0 0.0
        %835 = vmatpush1.xpose.msra.mxu0 0.0
        %836 = vmatprep.subr.mxu0 0.0
        %837 = vmatpush1.xpose.msra.mxu0 0.0
        %838 = vmatprep.subr.mxu0 0.0
        %839 = vmatpush1.xpose.msra.mxu0 0.0
        %840 = vmatprep.subr.mxu0 0.0
        %841 = vmatpush1.xpose.msra.mxu0 0.0
        %842 = vmatprep.subr.mxu0 0.0
        %843 = vmatpush1.xpose.msra.mxu0 0.0
        %844 = vmatprep.subr.mxu0 0.0
        %845 = vmatpush1.xpose.msra.mxu0 0.0
        %846 = vmatprep.subr.mxu0 0.0
        %847 = vmatpush1.xpose.msra.mxu0 0.0
        %848 = vmatprep.subr.mxu0 0.0
        %849 = vmatpush1.xpose.msra.mxu0 0.0
        %850 = vmatprep.subr.mxu0 0.0
        %851 = vmatpush1.xpose.msra.mxu0 0.0
        %852 = vmatprep.subr.mxu0 0.0
        %853 = vmatpush1.xpose.msra.mxu0 0.0
        %854 = vmatprep.subr.mxu0 0.0
        %855 = vmatpush1.xpose.msra.mxu0 0.0
        %856 = vmatprep.subr.mxu0 0.0
        %857 = vmatpush1.xpose.msra.mxu0 0.0
        %858 = vmatprep.subr.mxu0 0.0
        %859 = vmatpush1.xpose.msra.mxu0 0.0
        %860 = vmatprep.subr.mxu0 0.0
        %861 = vmatpush1.xpose.msra.mxu0 0.0
        %862 = vmatprep.subr.mxu0 0.0
        %863 = vmatpush1.xpose.msra.mxu0 0.0
        %864 = vmatprep.subr.mxu0 0.0
        %865 = vmatpush1.xpose.msra.mxu0 0.0
        %866 = vmatprep.subr.mxu0 0.0
        %867 = vmatpush1.xpose.msra.mxu0 0.0
        %868 = vmatprep.subr.mxu0 0.0
        %869 = vmatpush1.xpose.msra.mxu0 0.0
        %870 = vmatprep.subr.mxu0 0.0
        %871 = vmatpush1.xpose.msra.mxu0 0.0
        %872 = vmatprep.subr.mxu0 0.0
        %873 = vmatpush1.xpose.msra.mxu0 0.0
        %874 = vmatprep.mubr.f32.mxu0 0.0
        %875 = vmatmul.mubr.f32.gmra.mrb[0].mxu0 %v801
        %v876 = vpop.f32.mrb[0].mxu0
        %v877 = vadd.f32 %v638, %v876
        %v878 = vpop.f32.mrb[0].mxu0
        %879 = vmatprep.mubr.f32.mxu0 0.0
        %880 = vmatmul.mubr.f32.gmra.mrb[0].mxu0 %v804
        %v881 = vpop.f32.mrb[0].mxu0
        %v882 = vadd.f32 %v639, %v881
        %v883 = vpop.f32.mrb[0].mxu0
        %884 = vdwg.mxu0
        %885 = vrot.lane.b32.xlu0 %v786, 96
        %v886 = vpop.permute.xlu0 %885
        %887 = vrot.lane.b32.xlu0 %v788, 96
        %v888 = vpop.permute.xlu0 %887
        %v890 = vsel %vm799, %v793, 0
        %v893 = vsel %vm799, %v794, 0
        %v895 = vsel %vm799, %v886, 0
        %v897 = vsel %vm799, %v888, 0
        %899 = vmatprep.subr.mxu0 0.0
        %900 = vmatpush1.xpose.msra.mxu0 %v895
        %901 = vmatprep.subr.mxu0 0.0
        %902 = vmatpush1.xpose.msra.mxu0 %v897
        %903 = vmatprep.subr.mxu0 0.0
        %904 = vmatpush1.xpose.msra.mxu0 0.0
        %905 = vmatprep.subr.mxu0 0.0
        %906 = vmatpush1.xpose.msra.mxu0 0.0
        %907 = vmatprep.subr.mxu0 0.0
        %908 = vmatpush1.xpose.msra.mxu0 0.0
        %909 = vmatprep.subr.mxu0 0.0
        %910 = vmatpush1.xpose.msra.mxu0 0.0
        %911 = vmatprep.subr.mxu0 0.0
        %912 = vmatpush1.xpose.msra.mxu0 0.0
        %913 = vmatprep.subr.mxu0 0.0
        %914 = vmatpush1.xpose.msra.mxu0 0.0
        %915 = vmatprep.subr.mxu0 0.0
        %916 = vmatpush1.xpose.msra.mxu0 0.0
        %917 = vmatprep.subr.mxu0 0.0
        %918 = vmatpush1.xpose.msra.mxu0 0.0
        %919 = vmatprep.subr.mxu0 0.0
        %920 = vmatpush1.xpose.msra.mxu0 0.0
        %921 = vmatprep.subr.mxu0 0.0
        %922 = vmatpush1.xpose.msra.mxu0 0.0
        %923 = vmatprep.subr.mxu0 0.0
        %924 = vmatpush1.xpose.msra.mxu0 0.0
        %925 = vmatprep.subr.mxu0 0.0
        %926 = vmatpush1.xpose.msra.mxu0 0.0
        %927 = vmatprep.subr.mxu0 0.0
        %928 = vmatpush1.xpose.msra.mxu0 0.0
        %929 = vmatprep.subr.mxu0 0.0
        %930 = vmatpush1.xpose.msra.mxu0 0.0
        %931 = vmatprep.subr.mxu0 0.0
        %932 = vmatpush1.xpose.msra.mxu0 0.0
        %933 = vmatprep.subr.mxu0 0.0
        %934 = vmatpush1.xpose.msra.mxu0 0.0
        %935 = vmatprep.subr.mxu0 0.0
        %936 = vmatpush1.xpose.msra.mxu0 0.0
        %937 = vmatprep.subr.mxu0 0.0
        %938 = vmatpush1.xpose.msra.mxu0 0.0
        %939 = vmatprep.subr.mxu0 0.0
        %940 = vmatpush1.xpose.msra.mxu0 0.0
        %941 = vmatprep.subr.mxu0 0.0
        %942 = vmatpush1.xpose.msra.mxu0 0.0
        %943 = vmatprep.subr.mxu0 0.0
        %944 = vmatpush1.xpose.msra.mxu0 0.0
        %945 = vmatprep.subr.mxu0 0.0
        %946 = vmatpush1.xpose.msra.mxu0 0.0
        %947 = vmatprep.subr.mxu0 0.0
        %948 = vmatpush1.xpose.msra.mxu0 0.0
        %949 = vmatprep.subr.mxu0 0.0
        %950 = vmatpush1.xpose.msra.mxu0 0.0
        %951 = vmatprep.subr.mxu0 0.0
        %952 = vmatpush1.xpose.msra.mxu0 0.0
        %953 = vmatprep.subr.mxu0 0.0
        %954 = vmatpush1.xpose.msra.mxu0 0.0
        %955 = vmatprep.subr.mxu0 0.0
        %956 = vmatpush1.xpose.msra.mxu0 0.0
        %957 = vmatprep.subr.mxu0 0.0
        %958 = vmatpush1.xpose.msra.mxu0 0.0
        %959 = vmatprep.subr.mxu0 0.0
        %960 = vmatpush1.xpose.msra.mxu0 0.0
        %961 = vmatprep.subr.mxu0 0.0
        %962 = vmatpush1.xpose.msra.mxu0 0.0
        %963 = vmatprep.mubr.f32.mxu0 0.0
        %964 = vmatmul.mubr.f32.gmra.mrb[0].mxu0 %v890
        %v965 = vpop.f32.mrb[0].mxu0
        %v966 = vadd.f32 %v638, %v965
        %v967 = vpop.f32.mrb[0].mxu0
        %968 = vmatprep.mubr.f32.mxu0 0.0
        %969 = vmatmul.mubr.f32.gmra.mrb[0].mxu0 %v893
        %v970 = vpop.f32.mrb[0].mxu0
        %v971 = vadd.f32 %v639, %v970
        %v972 = vpop.f32.mrb[0].mxu0
        %973 = vdwg.mxu0
        %v974 = vsel %vm799, %v877, -inf
        %975 = vmax.xlane.f32.xlu0 %v974
        %v976 = vpop.xlane.xlu0 %975
        %v977 = vsel %vm799, %v882, -inf
        %978 = vmax.xlane.f32.xlu0 %v977
        %v979 = vpop.xlane.xlu0 %978
        %v980 = vsel %vm799, %v966, -inf
        %981 = vmax.xlane.f32.xlu0 %v980
        %v982 = vpop.xlane.xlu0 %981
        %v983 = vsel %vm799, %v971, -inf
        %984 = vmax.xlane.f32.xlu0 %v983
        %v985 = vpop.xlane.xlu0 %984
        %v986 = vsub.f32 %v877, %v976
        %v987 = vsub.f32 %v882, %v979
        %v988 = vsub.f32 %v966, %v982
        %v989 = vsub.f32 %v971, %v985
        %v990 = vmul.f32 %v986, 1.442695
        %v991 = vpow.pop %v990
        %v992 = vmul.f32 %v987, 1.442695
        %v993 = vpow.pop %v992
        %v994 = vmul.f32 %v988, 1.442695
        %v995 = vpow.pop %v994
        %v996 = vmul.f32 %v989, 1.442695
        %v997 = vpow.pop %v996
        %v998 = vsel %vm799, %v991, 0.0
        %999 = vadd.xlane.f32.xlu0 %v998
        %v1000 = vpop.xlane.xlu0 %999
        %v1001 = vsel %vm799, %v993, 0.0
        %1002 = vadd.xlane.f32.xlu0 %v1001
        %v1003 = vpop.xlane.xlu0 %1002
        %v1004 = vsel %vm799, %v995, 0.0
        %1005 = vadd.xlane.f32.xlu0 %v1004
        %v1006 = vpop.xlane.xlu0 %1005
        %v1007 = vsel %vm799, %v997, 0.0
        %1008 = vadd.xlane.f32.xlu0 %v1007
        %v1009 = vpop.xlane.xlu0 %1008
        %v1010 = vrcp.pop %v1000
        %v1011 = vrcp.pop %v1003
        %v1012 = vrcp.pop %v1006
        %v1013 = vrcp.pop %v1009
        %v1014 = vmul.f32 %v991, %v1010
        %v1015 = vmul.f32 %v993, %v1011
        %v1016 = vmul.f32 %v995, %v1012
        %v1017 = vmul.f32 %v997, %v1013
        %1018 = vrot.lane.b32.xlu0 %v775, 64
        %v1019 = vpop.permute.xlu0 %1018
        %1020 = vrot.lane.b32.xlu0 %v780, 64
        %v1021 = vpop.permute.xlu0 %1020
        %v1025 = vsel %vm799, %v1014, 0
        %v1028 = vsel %vm799, %v1015, 0
        %1030 = vmatprep.subr.mxu0 0.0
        %1031 = vmatpush1.msra.mxu0 %v1019
        %1032 = vmatprep.subr.mxu0 0.0
        %1033 = vmatpush1.msra.mxu0 %v1021
        %1034 = vmatprep.subr.mxu0 0.0
        %1035 = vmatpush1.msra.mxu0 0.0
        %1036 = vmatprep.subr.mxu0 0.0
        %1037 = vmatpush1.msra.mxu0 0.0
        %1038 = vmatprep.subr.mxu0 0.0
        %1039 = vmatpush1.msra.mxu0 0.0
        %1040 = vmatprep.subr.mxu0 0.0
        %1041 = vmatpush1.msra.mxu0 0.0
        %1042 = vmatprep.subr.mxu0 0.0
        %1043 = vmatpush1.msra.mxu0 0.0
        %1044 = vmatprep.subr.mxu0 0.0
        %1045 = vmatpush1.msra.mxu0 0.0
        %1046 = vmatprep.subr.mxu0 0.0
        %1047 = vmatpush1.msra.mxu0 0.0
        %1048 = vmatprep.subr.mxu0 0.0
        %1049 = vmatpush1.msra.mxu0 0.0
        %1050 = vmatprep.subr.mxu0 0.0
        %1051 = vmatpush1.msra.mxu0 0.0
        %1052 = vmatprep.subr.mxu0 0.0
        %1053 = vmatpush1.msra.mxu0 0.0
        %1054 = vmatprep.subr.mxu0 0.0
        %1055 = vmatpush1.msra.mxu0 0.0
        %1056 = vmatprep.subr.mxu0 0.0
        %1057 = vmatpush1.msra.mxu0 0.0
        %1058 = vmatprep.subr.mxu0 0.0
        %1059 = vmatpush1.msra.mxu0 0.0
        %1060 = vmatprep.subr.mxu0 0.0
        %1061 = vmatpush1.msra.mxu0 0.0
        %1062 = vmatprep.subr.mxu0 0.0
        %1063 = vmatpush1.msra.mxu0 0.0
        %1064 = vmatprep.subr.mxu0 0.0
        %1065 = vmatpush1.msra.mxu0 0.0
        %1066 = vmatprep.subr.mxu0 0.0
        %1067 = vmatpush1.msra.mxu0 0.0
        %1068 = vmatprep.subr.mxu0 0.0
        %1069 = vmatpush1.msra.mxu0 0.0
        %1070 = vmatprep.subr.mxu0 0.0
        %1071 = vmatpush1.msra.mxu0 0.0
        %1072 = vmatprep.subr.mxu0 0.0
        %1073 = vmatpush1.msra.mxu0 0.0
        %1074 = vmatprep.subr.mxu0 0.0
        %1075 = vmatpush1.msra.mxu0 0.0
        %1076 = vmatprep.subr.mxu0 0.0
        %1077 = vmatpush1.msra.mxu0 0.0
        %1078 = vmatprep.subr.mxu0 0.0
        %1079 = vmatpush1.msra.mxu0 0.0
        %1080 = vmatprep.subr.mxu0 0.0
        %1081 = vmatpush1.msra.mxu0 0.0
        %1082 = vmatprep.subr.mxu0 0.0
        %1083 = vmatpush1.msra.mxu0 0.0
        %1084 = vmatprep.subr.mxu0 0.0
        %1085 = vmatpush1.msra.mxu0 0.0
        %1086 = vmatprep.subr.mxu0 0.0
        %1087 = vmatpush1.msra.mxu0 0.0
        %1088 = vmatprep.subr.mxu0 0.0
        %1089 = vmatpush1.msra.mxu0 0.0
        %1090 = vmatprep.subr.mxu0 0.0
        %1091 = vmatpush1.msra.mxu0 0.0
        %1092 = vmatprep.subr.mxu0 0.0
        %1093 = vmatpush1.msra.mxu0 0.0
        %1094 = vmatprep.mubr.f32.mxu0 0.0
        %1095 = vmatmul.mubr.f32.gmra.mrb[0].mxu0 %v1025
        %v1096 = vpop.f32.mrb[0].mxu0
        %v1097 = vadd.f32 0.0, %v1096
        %v1098 = vpop.f32.mrb[0].mxu0
        %1099 = vmatprep.mubr.f32.mxu0 0.0
        %1100 = vmatmul.mubr.f32.gmra.mrb[0].mxu0 %v1028
        %v1101 = vpop.f32.mrb[0].mxu0
        %v1102 = vadd.f32 0.0, %v1101
        %v1103 = vpop.f32.mrb[0].mxu0
        %1104 = vdwg.mxu0
        %1105 = vrot.lane.b32.xlu0 %v786, 64
        %v1106 = vpop.permute.xlu0 %1105
        %1107 = vrot.lane.b32.xlu0 %v788, 64
        %v1108 = vpop.permute.xlu0 %1107
        %v1112 = vsel %vm799, %v1016, 0
        %v1115 = vsel %vm799, %v1017, 0
        %1117 = vmatprep.subr.mxu0 0.0
        %1118 = vmatpush1.msra.mxu0 %v1106
        %1119 = vmatprep.subr.mxu0 0.0
        %1120 = vmatpush1.msra.mxu0 %v1108
        %1121 = vmatprep.subr.mxu0 0.0
        %1122 = vmatpush1.msra.mxu0 0.0
        %1123 = vmatprep.subr.mxu0 0.0
        %1124 = vmatpush1.msra.mxu0 0.0
        %1125 = vmatprep.subr.mxu0 0.0
        %1126 = vmatpush1.msra.mxu0 0.0
        %1127 = vmatprep.subr.mxu0 0.0
        %1128 = vmatpush1.msra.mxu0 0.0
        %1129 = vmatprep.subr.mxu0 0.0
        %1130 = vmatpush1.msra.mxu0 0.0
        %1131 = vmatprep.subr.mxu0 0.0
        %1132 = vmatpush1.msra.mxu0 0.0
        %1133 = vmatprep.subr.mxu0 0.0
        %1134 = vmatpush1.msra.mxu0 0.0
        %1135 = vmatprep.subr.mxu0 0.0
        %1136 = vmatpush1.msra.mxu0 0.0
        %1137 = vmatprep.subr.mxu0 0.0
        %1138 = vmatpush1.msra.mxu0 0.0
        %1139 = vmatprep.subr.mxu0 0.0
        %1140 = vmatpush1.msra.mxu0 0.0
        %1141 = vmatprep.subr.mxu0 0.0
        %1142 = vmatpush1.msra.mxu0 0.0
        %1143 = vmatprep.subr.mxu0 0.0
        %1144 = vmatpush1.msra.mxu0 0.0
        %1145 = vmatprep.subr.mxu0 0.0
        %1146 = vmatpush1.msra.mxu0 0.0
        %1147 = vmatprep.subr.mxu0 0.0
        %1148 = vmatpush1.msra.mxu0 0.0
        %1149 = vmatprep.subr.mxu0 0.0
        %1150 = vmatpush1.msra.mxu0 0.0
        %1151 = vmatprep.subr.mxu0 0.0
        %1152 = vmatpush1.msra.mxu0 0.0
        %1153 = vmatprep.subr.mxu0 0.0
        %1154 = vmatpush1.msra.mxu0 0.0
        %1155 = vmatprep.subr.mxu0 0.0
        %1156 = vmatpush1.msra.mxu0 0.0
        %1157 = vmatprep.subr.mxu0 0.0
        %1158 = vmatpush1.msra.mxu0 0.0
        %1159 = vmatprep.subr.mxu0 0.0
        %1160 = vmatpush1.msra.mxu0 0.0
        %1161 = vmatprep.subr.mxu0 0.0
        %1162 = vmatpush1.msra.mxu0 0.0
        %1163 = vmatprep.subr.mxu0 0.0
        %1164 = vmatpush1.msra.mxu0 0.0
        %1165 = vmatprep.subr.mxu0 0.0
        %1166 = vmatpush1.msra.mxu0 0.0
        %1167 = vmatprep.subr.mxu0 0.0
        %1168 = vmatpush1.msra.mxu0 0.0
        %1169 = vmatprep.subr.mxu0 0.0
        %1170 = vmatpush1.msra.mxu0 0.0
        %1171 = vmatprep.subr.mxu0 0.0
        %1172 = vmatpush1.msra.mxu0 0.0
        %1173 = vmatprep.subr.mxu0 0.0
        %1174 = vmatpush1.msra.mxu0 0.0
        %1175 = vmatprep.subr.mxu0 0.0
        %1176 = vmatpush1.msra.mxu0 0.0
        %1177 = vmatprep.subr.mxu0 0.0
        %1178 = vmatpush1.msra.mxu0 0.0
        %1179 = vmatprep.subr.mxu0 0.0
        %1180 = vmatpush1.msra.mxu0 0.0
        %1181 = vmatprep.mubr.f32.mxu0 0.0
        %1182 = vmatmul.mubr.f32.gmra.mrb[0].mxu0 %v1112
        %v1183 = vpop.f32.mrb[0].mxu0
        %v1184 = vadd.f32 0.0, %v1183
        %v1185 = vpop.f32.mrb[0].mxu0
        %1186 = vmatprep.mubr.f32.mxu0 0.0
        %1187 = vmatmul.mubr.f32.gmra.mrb[0].mxu0 %v1115
        %v1188 = vpop.f32.mrb[0].mxu0
        %v1189 = vadd.f32 0.0, %v1188
        %v1190 = vpop.f32.mrb[0].mxu0
        %1191 = vdwg.mxu0
        %v1193 = vsel %vm799, %v1097, 0
        %v1196 = vsel %vm799, %v1102, 0
        %1198 = vmatprep.subr.mxu0 0.0
        %1199 = vmatpush1.msra.mxu0 %v644
        %1200 = vmatprep.subr.mxu0 0.0
        %1201 = vmatpush1.msra.mxu0 %v645
        %1202 = vmatprep.subr.mxu0 0.0
        %1203 = vmatpush1.msra.mxu0 0.0
        %1204 = vmatprep.subr.mxu0 0.0
        %1205 = vmatpush1.msra.mxu0 0.0
        %1206 = vmatprep.subr.mxu0 0.0
        %1207 = vmatpush1.msra.mxu0 0.0
        %1208 = vmatprep.subr.mxu0 0.0
        %1209 = vmatpush1.msra.mxu0 0.0
        %1210 = vmatprep.subr.mxu0 0.0
        %1211 = vmatpush1.msra.mxu0 0.0
        %1212 = vmatprep.subr.mxu0 0.0
        %1213 = vmatpush1.msra.mxu0 0.0
        %1214 = vmatprep.subr.mxu0 0.0
        %1215 = vmatpush1.msra.mxu0 0.0
        %1216 = vmatprep.subr.mxu0 0.0
        %1217 = vmatpush1.msra.mxu0 0.0
        %1218 = vmatprep.subr.mxu0 0.0
        %1219 = vmatpush1.msra.mxu0 0.0
        %1220 = vmatprep.subr.mxu0 0.0
        %1221 = vmatpush1.msra.mxu0 0.0
        %1222 = vmatprep.subr.mxu0 0.0
        %1223 = vmatpush1.msra.mxu0 0.0
        %1224 = vmatprep.subr.mxu0 0.0
        %1225 = vmatpush1.msra.mxu0 0.0
        %1226 = vmatprep.subr.mxu0 0.0
        %1227 = vmatpush1.msra.mxu0 0.0
        %1228 = vmatprep.subr.mxu0 0.0
        %1229 = vmatpush1.msra.mxu0 0.0
        %1230 = vmatprep.subr.mxu0 0.0
        %1231 = vmatpush1.msra.mxu0 0.0
        %1232 = vmatprep.subr.mxu0 0.0
        %1233 = vmatpush1.msra.mxu0 0.0
        %1234 = vmatprep.subr.mxu0 0.0
        %1235 = vmatpush1.msra.mxu0 0.0
        %1236 = vmatprep.subr.mxu0 0.0
        %1237 = vmatpush1.msra.mxu0 0.0
        %1238 = vmatprep.subr.mxu0 0.0
        %1239 = vmatpush1.msra.mxu0 0.0
        %1240 = vmatprep.subr.mxu0 0.0
        %1241 = vmatpush1.msra.mxu0 0.0
        %1242 = vmatprep.subr.mxu0 0.0
        %1243 = vmatpush1.msra.mxu0 0.0
        %1244 = vmatprep.subr.mxu0 0.0
        %1245 = vmatpush1.msra.mxu0 0.0
        %1246 = vmatprep.subr.mxu0 0.0
        %1247 = vmatpush1.msra.mxu0 0.0
        %1248 = vmatprep.subr.mxu0 0.0
        %1249 = vmatpush1.msra.mxu0 0.0
        %1250 = vmatprep.subr.mxu0 0.0
        %1251 = vmatpush1.msra.mxu0 0.0
        %1252 = vmatprep.subr.mxu0 0.0
        %1253 = vmatpush1.msra.mxu0 0.0
        %1254 = vmatprep.subr.mxu0 0.0
        %1255 = vmatpush1.msra.mxu0 0.0
        %1256 = vmatprep.subr.mxu0 0.0
        %1257 = vmatpush1.msra.mxu0 0.0
        %1258 = vmatprep.subr.mxu0 0.0
        %1259 = vmatpush1.msra.mxu0 0.0
        %1260 = vmatprep.subr.mxu0 0.0
        %1261 = vmatpush1.msra.mxu0 0.0
        %1262 = vmatprep.mubr.f32.mxu0 0.0
        %1263 = vmatmul.mubr.f32.gmra.mrb[0].mxu0 %v1193
        %v1264 = vpop.f32.mrb[0].mxu0
        %v1265 = vadd.f32 0.0, %v1264
        %v1266 = vpop.f32.mrb[0].mxu0
        %1267 = vmatprep.mubr.f32.mxu0 0.0
        %1268 = vmatmul.mubr.f32.gmra.mrb[0].mxu0 %v1196
        %v1269 = vpop.f32.mrb[0].mxu0
        %v1270 = vadd.f32 0.0, %v1269
        %v1271 = vpop.f32.mrb[0].mxu0
        %1272 = vdwg.mxu0
        %v1274 = vsel %vm799, %v1184, 0
        %v1277 = vsel %vm799, %v1189, 0
        %1279 = vmatprep.subr.mxu0 0.0
        %1280 = vmatpush1.msra.mxu0 %v646
        %1281 = vmatprep.subr.mxu0 0.0
        %1282 = vmatpush1.msra.mxu0 %v647
        %1283 = vmatprep.subr.mxu0 0.0
        %1284 = vmatpush1.msra.mxu0 0.0
        %1285 = vmatprep.subr.mxu0 0.0
        %1286 = vmatpush1.msra.mxu0 0.0
        %1287 = vmatprep.subr.mxu0 0.0
        %1288 = vmatpush1.msra.mxu0 0.0
        %1289 = vmatprep.subr.mxu0 0.0
        %1290 = vmatpush1.msra.mxu0 0.0
        %1291 = vmatprep.subr.mxu0 0.0
        %1292 = vmatpush1.msra.mxu0 0.0
        %1293 = vmatprep.subr.mxu0 0.0
        %1294 = vmatpush1.msra.mxu0 0.0
        %1295 = vmatprep.subr.mxu0 0.0
        %1296 = vmatpush1.msra.mxu0 0.0
        %1297 = vmatprep.subr.mxu0 0.0
        %1298 = vmatpush1.msra.mxu0 0.0
        %1299 = vmatprep.subr.mxu0 0.0
        %1300 = vmatpush1.msra.mxu0 0.0
        %1301 = vmatprep.subr.mxu0 0.0
        %1302 = vmatpush1.msra.mxu0 0.0
        %1303 = vmatprep.subr.mxu0 0.0
        %1304 = vmatpush1.msra.mxu0 0.0
        %1305 = vmatprep.subr.mxu0 0.0
        %1306 = vmatpush1.msra.mxu0 0.0
        %1307 = vmatprep.subr.mxu0 0.0
        %1308 = vmatpush1.msra.mxu0 0.0
        %1309 = vmatprep.subr.mxu0 0.0
        %1310 = vmatpush1.msra.mxu0 0.0
        %1311 = vmatprep.subr.mxu0 0.0
        %1312 = vmatpush1.msra.mxu0 0.0
        %1313 = vmatprep.subr.mxu0 0.0
        %1314 = vmatpush1.msra.mxu0 0.0
        %1315 = vmatprep.subr.mxu0 0.0
        %1316 = vmatpush1.msra.mxu0 0.0
        %1317 = vmatprep.subr.mxu0 0.0
        %1318 = vmatpush1.msra.mxu0 0.0
        %1319 = vmatprep.subr.mxu0 0.0
        %1320 = vmatpush1.msra.mxu0 0.0
        %1321 = vmatprep.subr.mxu0 0.0
        %1322 = vmatpush1.msra.mxu0 0.0
        %1323 = vmatprep.subr.mxu0 0.0
        %1324 = vmatpush1.msra.mxu0 0.0
        %1325 = vmatprep.subr.mxu0 0.0
        %1326 = vmatpush1.msra.mxu0 0.0
        %1327 = vmatprep.subr.mxu0 0.0
        %1328 = vmatpush1.msra.mxu0 0.0
        %1329 = vmatprep.subr.mxu0 0.0
        %1330 = vmatpush1.msra.mxu0 0.0
        %1331 = vmatprep.subr.mxu0 0.0
        %1332 = vmatpush1.msra.mxu0 0.0
        %1333 = vmatprep.subr.mxu0 0.0
        %1334 = vmatpush1.msra.mxu0 0.0
        %1335 = vmatprep.subr.mxu0 0.0
        %1336 = vmatpush1.msra.mxu0 0.0
        %1337 = vmatprep.subr.mxu0 0.0
        %1338 = vmatpush1.msra.mxu0 0.0
        %1339 = vmatprep.subr.mxu0 0.0
        %1340 = vmatpush1.msra.mxu0 0.0
        %1341 = vmatprep.subr.mxu0 0.0
        %1342 = vmatpush1.msra.mxu0 0.0
        %1343 = vmatprep.mubr.f32.mxu0 0.0
        %1344 = vmatmul.mubr.f32.gmra.mrb[0].mxu0 %v1274
        %v1345 = vpop.f32.mrb[0].mxu0
        %v1346 = vadd.f32 0.0, %v1345
        %v1347 = vpop.f32.mrb[0].mxu0
        %1348 = vmatprep.mubr.f32.mxu0 0.0
        %1349 = vmatmul.mubr.f32.gmra.mrb[0].mxu0 %v1277
        %v1350 = vpop.f32.mrb[0].mxu0
        %v1351 = vadd.f32 0.0, %v1350
        %v1352 = vpop.f32.mrb[0].mxu0
        %1353 = vdwg.mxu0
        %v1354 = vsel %vm662, %v1265, 0.0
        %v1355 = vsel %vm662, %v1346, 0.0
        %v1356 = vadd.f32 %v1354, %v1355
        %v1357 = vsel %vm662, %v1270, 0.0
        %v1358 = vsel %vm662, %v1351, 0.0
        %v1359 = vadd.f32 %v1357, %v1358
        %v1360 = vadd.f32 %v1356, %v629
        %v1361 = vadd.f32 %v1359, %v630
        %v1362 = vsel %vm662, %v1360, 0.0
        %1363 = vadd.xlane.f32.xlu0 %v1362
        %v1364 = vpop.xlane.xlu0 %1363
        %v1365 = vsel %vm662, %v1361, 0.0
        %1366 = vadd.xlane.f32.xlu0 %v1365
        %v1367 = vpop.xlane.xlu0 %1366
        %v1368 = vmul.f32 %v1364, %v669
        %v1369 = vmul.f32 %v1367, %v669
        %v1370 = vsub.f32 %v1360, %v1368
        %v1371 = vsub.f32 %v1361, %v1369
        %v1372 = vmul.f32 %v1370, %v1370
        %v1373 = vmul.f32 %v1371, %v1371
        %v1374 = vsel %vm662, %v1372, 0.0
        %1375 = vadd.xlane.f32.xlu0 %v1374
        %v1376 = vpop.xlane.xlu0 %1375
        %v1377 = vsel %vm662, %v1373, 0.0
        %1378 = vadd.xlane.f32.xlu0 %v1377
        %v1379 = vpop.xlane.xlu0 %1378
        %v1380 = vmul.f32 %v1376, %v669
        %v1381 = vmul.f32 %v1379, %v669
        %v1382 = vadd.f32 %v1380, 1e-06
        %v1383 = vadd.f32 %v1381, 1e-06
        %v1384 = vrsqrt.pop %v1382
        %v1385 = vrsqrt.pop %v1383
        %v1386 = vmul.f32 %v1370, %v1384
        %v1387 = vmul.f32 %v1371, %v1385
        %v1388 = vlaneseq
        %v1389 = vshrl.u32 %v1388, 7
        %v1390 = vsub.s32 2, %v1389
        %v1391 = vrot.slane %v661, %v1390
        %v1392 = vmul.f32 %v1386, %v1391
        %v1393 = vmul.f32 %v1387, %v1391
        %v1394 = vlaneseq
        %v1395 = vshrl.u32 %v1394, 7
        %v1396 = vsub.s32 3, %v1395
        %v1397 = vrot.slane %v661, %v1396
        %v1398 = vadd.f32 %v1392, %v1397
        %v1399 = vadd.f32 %v1393, %v1397
        %v1401 = vlaneseq
        %v1402 = vshrl.u32 %v1401, 7
        %v1403 = vsub.s32 0, %v1402
        %v1404 = vrot.slane %v652, %v1403
        %v1407 = vsel %vm662, %v1398, 0
        %v1410 = vsel %vm662, %v1399, 0
        %1412 = vmatprep.subr.mxu0 0.0
        %1413 = vmatpush1.msra.mxu0 %v648
        %1414 = vmatprep.subr.mxu0 0.0
        %1415 = vmatpush1.msra.mxu0 %v649
        %1416 = vmatprep.subr.mxu0 0.0
        %1417 = vmatpush1.msra.mxu0 %v650
        %1418 = vmatprep.subr.mxu0 0.0
        %1419 = vmatpush1.msra.mxu0 %v651
        %1420 = vmatprep.subr.mxu0 0.0
        %1421 = vmatpush1.msra.mxu0 0.0
        %1422 = vmatprep.subr.mxu0 0.0
        %1423 = vmatpush1.msra.mxu0 0.0
        %1424 = vmatprep.subr.mxu0 0.0
        %1425 = vmatpush1.msra.mxu0 0.0
        %1426 = vmatprep.subr.mxu0 0.0
        %1427 = vmatpush1.msra.mxu0 0.0
        %1428 = vmatprep.subr.mxu0 0.0
        %1429 = vmatpush1.msra.mxu0 0.0
        %1430 = vmatprep.subr.mxu0 0.0
        %1431 = vmatpush1.msra.mxu0 0.0
        %1432 = vmatprep.subr.mxu0 0.0
        %1433 = vmatpush1.msra.mxu0 0.0
        %1434 = vmatprep.subr.mxu0 0.0
        %1435 = vmatpush1.msra.mxu0 0.0
        %1436 = vmatprep.subr.mxu0 0.0
        %1437 = vmatpush1.msra.mxu0 0.0
        %1438 = vmatprep.subr.mxu0 0.0
        %1439 = vmatpush1.msra.mxu0 0.0
        %1440 = vmatprep.subr.mxu0 0.0
        %1441 = vmatpush1.msra.mxu0 0.0
        %1442 = vmatprep.subr.mxu0 0.0
        %1443 = vmatpush1.msra.mxu0 0.0
        %1444 = vmatprep.subr.mxu0 0.0
        %1445 = vmatpush1.msra.mxu0 0.0
        %1446 = vmatprep.subr.mxu0 0.0
        %1447 = vmatpush1.msra.mxu0 0.0
        %1448 = vmatprep.subr.mxu0 0.0
        %1449 = vmatpush1.msra.mxu0 0.0
        %1450 = vmatprep.subr.mxu0 0.0
        %1451 = vmatpush1.msra.mxu0 0.0
        %1452 = vmatprep.subr.mxu0 0.0
        %1453 = vmatpush1.msra.mxu0 0.0
        %1454 = vmatprep.subr.mxu0 0.0
        %1455 = vmatpush1.msra.mxu0 0.0
        %1456 = vmatprep.subr.mxu0 0.0
        %1457 = vmatpush1.msra.mxu0 0.0
        %1458 = vmatprep.subr.mxu0 0.0
        %1459 = vmatpush1.msra.mxu0 0.0
        %1460 = vmatprep.subr.mxu0 0.0
        %1461 = vmatpush1.msra.mxu0 0.0
        %1462 = vmatprep.subr.mxu0 0.0
        %1463 = vmatpush1.msra.mxu0 0.0
        %1464 = vmatprep.subr.mxu0 0.0
        %1465 = vmatpush1.msra.mxu0 0.0
        %1466 = vmatprep.subr.mxu0 0.0
        %1467 = vmatpush1.msra.mxu0 0.0
        %1468 = vmatprep.subr.mxu0 0.0
        %1469 = vmatpush1.msra.mxu0 0.0
        %1470 = vmatprep.subr.mxu0 0.0
        %1471 = vmatpush1.msra.mxu0 0.0
        %1472 = vmatprep.subr.mxu0 0.0
        %1473 = vmatpush1.msra.mxu0 0.0
        %1474 = vmatprep.subr.mxu0 0.0
        %1475 = vmatpush1.msra.mxu0 0.0
        %1476 = vmatprep.mubr.f32.mxu0 0.0
        %1477 = vmatmul.mubr.f32.gmra.mrb[0].mxu0 %v1407
        %v1478 = vpop.f32.mrb[0].mxu0
        %v1479 = vadd.f32 %v1404, %v1478
        %v1480 = vpop.f32.mrb[0].mxu0
        %1481 = vmatprep.mubr.f32.mxu0 0.0
        %1482 = vmatmul.mubr.f32.gmra.mrb[0].mxu0 %v1410
        %v1483 = vpop.f32.mrb[0].mxu0
        %v1484 = vadd.f32 %v1404, %v1483
        %v1485 = vpop.f32.mrb[0].mxu0
        %1486 = vdwg.mxu0
        %v1487 = vmax.f32 %v1479, 0.0
        %v1488 = vmax.f32 %v1484, 0.0
        %v1489 = vlaneseq
        %v1490 = vshrl.u32 %v1489, 7
        %v1491 = vsub.s32 4, %v1490
        %v1492 = vrot.slane %v661, %v1491
        %vm1493 = vcmask 523264
        %v1495 = vsel %vm1493, %v1487, 0
        %v1498 = vsel %vm1493, %v1488, 0
        %1500 = vmatprep.subr.mxu0 0.0
        %1501 = vmatpush1.msra.mxu0 %v653
        %1502 = vmatprep.subr.mxu0 0.0
        %1503 = vmatpush1.msra.mxu0 %v654
        %1504 = vmatprep.subr.mxu0 0.0
        %1505 = vmatpush1.msra.mxu0 %v655
        %1506 = vmatprep.subr.mxu0 0.0
        %1507 = vmatpush1.msra.mxu0 %v656
        %1508 = vmatprep.subr.mxu0 0.0
        %1509 = vmatpush1.msra.mxu0 %v657
        %1510 = vmatprep.subr.mxu0 0.0
        %1511 = vmatpush1.msra.mxu0 %v658
        %1512 = vmatprep.subr.mxu0 0.0
        %1513 = vmatpush1.msra.mxu0 %v659
        %1514 = vmatprep.subr.mxu0 0.0
        %1515 = vmatpush1.msra.mxu0 %v660
        %1516 = vmatprep.subr.mxu0 0.0
        %1517 = vmatpush1.msra.mxu0 0.0
        %1518 = vmatprep.subr.mxu0 0.0
        %1519 = vmatpush1.msra.mxu0 0.0
        %1520 = vmatprep.subr.mxu0 0.0
        %1521 = vmatpush1.msra.mxu0 0.0
        %1522 = vmatprep.subr.mxu0 0.0
        %1523 = vmatpush1.msra.mxu0 0.0
        %1524 = vmatprep.subr.mxu0 0.0
        %1525 = vmatpush1.msra.mxu0 0.0
        %1526 = vmatprep.subr.mxu0 0.0
        %1527 = vmatpush1.msra.mxu0 0.0
        %1528 = vmatprep.subr.mxu0 0.0
        %1529 = vmatpush1.msra.mxu0 0.0
        %1530 = vmatprep.subr.mxu0 0.0
        %1531 = vmatpush1.msra.mxu0 0.0
        %1532 = vmatprep.subr.mxu0 0.0
        %1533 = vmatpush1.msra.mxu0 0.0
        %1534 = vmatprep.subr.mxu0 0.0
        %1535 = vmatpush1.msra.mxu0 0.0
        %1536 = vmatprep.subr.mxu0 0.0
        %1537 = vmatpush1.msra.mxu0 0.0
        %1538 = vmatprep.subr.mxu0 0.0
        %1539 = vmatpush1.msra.mxu0 0.0
        %1540 = vmatprep.subr.mxu0 0.0
        %1541 = vmatpush1.msra.mxu0 0.0
        %1542 = vmatprep.subr.mxu0 0.0
        %1543 = vmatpush1.msra.mxu0 0.0
        %1544 = vmatprep.subr.mxu0 0.0
        %1545 = vmatpush1.msra.mxu0 0.0
        %1546 = vmatprep.subr.mxu0 0.0
        %1547 = vmatpush1.msra.mxu0 0.0
        %1548 = vmatprep.subr.mxu0 0.0
        %1549 = vmatpush1.msra.mxu0 0.0
        %1550 = vmatprep.subr.mxu0 0.0
        %1551 = vmatpush1.msra.mxu0 0.0
        %1552 = vmatprep.subr.mxu0 0.0
        %1553 = vmatpush1.msra.mxu0 0.0
        %1554 = vmatprep.subr.mxu0 0.0
        %1555 = vmatpush1.msra.mxu0 0.0
        %1556 = vmatprep.subr.mxu0 0.0
        %1557 = vmatpush1.msra.mxu0 0.0
        %1558 = vmatprep.subr.mxu0 0.0
        %1559 = vmatpush1.msra.mxu0 0.0
        %1560 = vmatprep.subr.mxu0 0.0
        %1561 = vmatpush1.msra.mxu0 0.0
        %1562 = vmatprep.subr.mxu0 0.0
        %1563 = vmatpush1.msra.mxu0 0.0
        %1564 = vmatprep.mubr.f32.mxu0 0.0
        %1565 = vmatmul.mubr.f32.gmra.mrb[0].mxu0 %v1495
        %v1566 = vpop.f32.mrb[0].mxu0
        %v1567 = vadd.f32 %v1492, %v1566
        %v1568 = vpop.f32.mrb[0].mxu0
        %1569 = vmatprep.mubr.f32.mxu0 0.0
        %1570 = vmatmul.mubr.f32.gmra.mrb[0].mxu0 %v1498
        %v1571 = vpop.f32.mrb[0].mxu0
        %v1572 = vadd.f32 %v1492, %v1571
        %v1573 = vpop.f32.mrb[0].mxu0
        %1574 = vdwg.mxu0
        %v1575 = vadd.f32 %v1567, %v1360
        %v1576 = vadd.f32 %v1572, %v1361
        %v1577 = vsel %vm662, %v1575, 0.0
        %1578 = vadd.xlane.f32.xlu0 %v1577
        %v1579 = vpop.xlane.xlu0 %1578
        %v1580 = vsel %vm662, %v1576, 0.0
        %1581 = vadd.xlane.f32.xlu0 %v1580
        %v1582 = vpop.xlane.xlu0 %1581
        %v1583 = vmul.f32 %v1579, %v669
        %v1584 = vmul.f32 %v1582, %v669
        %v1585 = vsub.f32 %v1575, %v1583
        %v1586 = vsub.f32 %v1576, %v1584
        %v1587 = vmul.f32 %v1585, %v1585
        %v1588 = vmul.f32 %v1586, %v1586
        %v1589 = vsel %vm662, %v1587, 0.0
        %1590 = vadd.xlane.f32.xlu0 %v1589
        %v1591 = vpop.xlane.xlu0 %1590
        %v1592 = vsel %vm662, %v1588, 0.0
        %1593 = vadd.xlane.f32.xlu0 %v1592
        %v1594 = vpop.xlane.xlu0 %1593
        %v1595 = vmul.f32 %v1591, %v669
        %v1596 = vmul.f32 %v1594, %v669
        %v1597 = vadd.f32 %v1595, 1e-05
        %v1598 = vadd.f32 %v1596, 1e-05
        %v1599 = vrsqrt.pop %v1597
        %v1600 = vrsqrt.pop %v1598
        %v1601 = vmul.f32 %v1585, %v1599
        %v1602 = vmul.f32 %v1586, %v1600
        %v1603 = vmul.f32 %v1601, %v693
        %v1604 = vmul.f32 %v1602, %v693
        %v1605 = vadd.f32 %v1603, %v699
        %v1606 = vadd.f32 %v1604, %v699
        %v1608 = vsel %vm662, %v1605, 0
        %v1611 = vsel %vm662, %v1606, 0
        %1613 = vmatprep.subr.mxu0 0.0
        %1614 = vmatpush1.msra.mxu0 %v640
        %1615 = vmatprep.subr.mxu0 0.0
        %1616 = vmatpush1.msra.mxu0 %v641
        %1617 = vmatprep.subr.mxu0 0.0
        %1618 = vmatpush1.msra.mxu0 %v642
        %1619 = vmatprep.subr.mxu0 0.0
        %1620 = vmatpush1.msra.mxu0 %v643
        %1621 = vmatprep.subr.mxu0 0.0
        %1622 = vmatpush1.msra.mxu0 0.0
        %1623 = vmatprep.subr.mxu0 0.0
        %1624 = vmatpush1.msra.mxu0 0.0
        %1625 = vmatprep.subr.mxu0 0.0
        %1626 = vmatpush1.msra.mxu0 0.0
        %1627 = vmatprep.subr.mxu0 0.0
        %1628 = vmatpush1.msra.mxu0 0.0
        %1629 = vmatprep.subr.mxu0 0.0
        %1630 = vmatpush1.msra.mxu0 0.0
        %1631 = vmatprep.subr.mxu0 0.0
        %1632 = vmatpush1.msra.mxu0 0.0
        %1633 = vmatprep.subr.mxu0 0.0
        %1634 = vmatpush1.msra.mxu0 0.0
        %1635 = vmatprep.subr.mxu0 0.0
        %1636 = vmatpush1.msra.mxu0 0.0
        %1637 = vmatprep.subr.mxu0 0.0
        %1638 = vmatpush1.msra.mxu0 0.0
        %1639 = vmatprep.subr.mxu0 0.0
        %1640 = vmatpush1.msra.mxu0 0.0
        %1641 = vmatprep.subr.mxu0 0.0
        %1642 = vmatpush1.msra.mxu0 0.0
        %1643 = vmatprep.subr.mxu0 0.0
        %1644 = vmatpush1.msra.mxu0 0.0
        %1645 = vmatprep.subr.mxu0 0.0
        %1646 = vmatpush1.msra.mxu0 0.0
        %1647 = vmatprep.subr.mxu0 0.0
        %1648 = vmatpush1.msra.mxu0 0.0
        %1649 = vmatprep.subr.mxu0 0.0
        %1650 = vmatpush1.msra.mxu0 0.0
        %1651 = vmatprep.subr.mxu0 0.0
        %1652 = vmatpush1.msra.mxu0 0.0
        %1653 = vmatprep.subr.mxu0 0.0
        %1654 = vmatpush1.msra.mxu0 0.0
        %1655 = vmatprep.subr.mxu0 0.0
        %1656 = vmatpush1.msra.mxu0 0.0
        %1657 = vmatprep.subr.mxu0 0.0
        %1658 = vmatpush1.msra.mxu0 0.0
        %1659 = vmatprep.subr.mxu0 0.0
        %1660 = vmatpush1.msra.mxu0 0.0
        %1661 = vmatprep.subr.mxu0 0.0
        %1662 = vmatpush1.msra.mxu0 0.0
        %1663 = vmatprep.subr.mxu0 0.0
        %1664 = vmatpush1.msra.mxu0 0.0
        %1665 = vmatprep.subr.mxu0 0.0
        %1666 = vmatpush1.msra.mxu0 0.0
        %1667 = vmatprep.subr.mxu0 0.0
        %1668 = vmatpush1.msra.mxu0 0.0
        %1669 = vmatprep.subr.mxu0 0.0
        %1670 = vmatpush1.msra.mxu0 0.0
        %1671 = vmatprep.subr.mxu0 0.0
        %1672 = vmatpush1.msra.mxu0 0.0
        %1673 = vmatprep.subr.mxu0 0.0
        %1674 = vmatpush1.msra.mxu0 0.0
        %1675 = vmatprep.subr.mxu0 0.0
        %1676 = vmatpush1.msra.mxu0 0.0
        %1677 = vmatprep.mubr.f32.mxu0 0.0
        %1678 = vmatmul.mubr.f32.gmra.mrb[0].mxu0 %v1608
        %v1679 = vpop.f32.mrb[0].mxu0
        %v1680 = vadd.f32 0.0, %v1679
        %v1681 = vpop.f32.mrb[0].mxu0
        %1682 = vmatprep.mubr.f32.mxu0 0.0
        %1683 = vmatmul.mubr.f32.gmra.mrb[0].mxu0 %v1611
        %v1684 = vpop.f32.mrb[0].mxu0
        %v1685 = vadd.f32 0.0, %v1684
        %v1686 = vpop.f32.mrb[0].mxu0
        %1687 = vdwg.mxu0
        %1690 = vrot.lane.b32.xlu0 %v1680, 112
        %v1691 = vpop.permute.xlu0 %1690
        %1692 = vrot.lane.b32.xlu0 %v1685, 112
        %v1693 = vpop.permute.xlu0 %1692
        %v1696 = vmul.f32 %v1680, 0.25
        %v1697 = vmul.f32 %v1685, 0.25
        %v1698 = vmul.f32 %v1691, 0.25
        %v1699 = vmul.f32 %v1693, 0.25
        %1700 = vrot.lane.b32.xlu0 %v1680, 96
        %v1701 = vpop.permute.xlu0 %1700
        %1702 = vrot.lane.b32.xlu0 %v1685, 96
        %v1703 = vpop.permute.xlu0 %1702
        %v1705 = vsel %vm799, %v1696, 0
        %v1708 = vsel %vm799, %v1697, 0
        %v1710 = vsel %vm799, %v1701, 0
        %v1712 = vsel %vm799, %v1703, 0
        %1714 = vmatprep.subr.mxu0 0.0
        %1715 = vmatpush1.xpose.msra.mxu0 %v1710
        %1716 = vmatprep.subr.mxu0 0.0
        %1717 = vmatpush1.xpose.msra.mxu0 %v1712
        %1718 = vmatprep.subr.mxu0 0.0
        %1719 = vmatpush1.xpose.msra.mxu0 0.0
        %1720 = vmatprep.subr.mxu0 0.0
        %1721 = vmatpush1.xpose.msra.mxu0 0.0
        %1722 = vmatprep.subr.mxu0 0.0
        %1723 = vmatpush1.xpose.msra.mxu0 0.0
        %1724 = vmatprep.subr.mxu0 0.0
        %1725 = vmatpush1.xpose.msra.mxu0 0.0
        %1726 = vmatprep.subr.mxu0 0.0
        %1727 = vmatpush1.xpose.msra.mxu0 0.0
        %1728 = vmatprep.subr.mxu0 0.0
        %1729 = vmatpush1.xpose.msra.mxu0 0.0
        %1730 = vmatprep.subr.mxu0 0.0
        %1731 = vmatpush1.xpose.msra.mxu0 0.0
        %1732 = vmatprep.subr.mxu0 0.0
        %1733 = vmatpush1.xpose.msra.mxu0 0.0
        %1734 = vmatprep.subr.mxu0 0.0
        %1735 = vmatpush1.xpose.msra.mxu0 0.0
        %1736 = vmatprep.subr.mxu0 0.0
        %1737 = vmatpush1.xpose.msra.mxu0 0.0
        %1738 = vmatprep.subr.mxu0 0.0
        %1739 = vmatpush1.xpose.msra.mxu0 0.0
        %1740 = vmatprep.subr.mxu0 0.0
        %1741 = vmatpush1.xpose.msra.mxu0 0.0
        %1742 = vmatprep.subr.mxu0 0.0
        %1743 = vmatpush1.xpose.msra.mxu0 0.0
        %1744 = vmatprep.subr.mxu0 0.0
        %1745 = vmatpush1.xpose.msra.mxu0 0.0
        %1746 = vmatprep.subr.mxu0 0.0
        %1747 = vmatpush1.xpose.msra.mxu0 0.0
        %1748 = vmatprep.subr.mxu0 0.0
        %1749 = vmatpush1.xpose.msra.mxu0 0.0
        %1750 = vmatprep.subr.mxu0 0.0
        %1751 = vmatpush1.xpose.msra.mxu0 0.0
        %1752 = vmatprep.subr.mxu0 0.0
        %1753 = vmatpush1.xpose.msra.mxu0 0.0
        %1754 = vmatprep.subr.mxu0 0.0
        %1755 = vmatpush1.xpose.msra.mxu0 0.0
        %1756 = vmatprep.subr.mxu0 0.0
        %1757 = vmatpush1.xpose.msra.mxu0 0.0
        %1758 = vmatprep.subr.mxu0 0.0
        %1759 = vmatpush1.xpose.msra.mxu0 0.0
        %1760 = vmatprep.subr.mxu0 0.0
        %1761 = vmatpush1.xpose.msra.mxu0 0.0
        %1762 = vmatprep.subr.mxu0 0.0
        %1763 = vmatpush1.xpose.msra.mxu0 0.0
        %1764 = vmatprep.subr.mxu0 0.0
        %1765 = vmatpush1.xpose.msra.mxu0 0.0
        %1766 = vmatprep.subr.mxu0 0.0
        %1767 = vmatpush1.xpose.msra.mxu0 0.0
        %1768 = vmatprep.subr.mxu0 0.0
        %1769 = vmatpush1.xpose.msra.mxu0 0.0
        %1770 = vmatprep.subr.mxu0 0.0
        %1771 = vmatpush1.xpose.msra.mxu0 0.0
        %1772 = vmatprep.subr.mxu0 0.0
        %1773 = vmatpush1.xpose.msra.mxu0 0.0
        %1774 = vmatprep.subr.mxu0 0.0
        %1775 = vmatpush1.xpose.msra.mxu0 0.0
        %1776 = vmatprep.subr.mxu0 0.0
        %1777 = vmatpush1.xpose.msra.mxu0 0.0
        %1778 = vmatprep.mubr.f32.mxu0 0.0
        %1779 = vmatmul.mubr.f32.gmra.mrb[0].mxu0 %v1705
        %v1780 = vpop.f32.mrb[0].mxu0
        %v1781 = vadd.f32 %v638, %v1780
        %v1782 = vpop.f32.mrb[0].mxu0
        %1783 = vmatprep.mubr.f32.mxu0 0.0
        %1784 = vmatmul.mubr.f32.gmra.mrb[0].mxu0 %v1708
        %v1785 = vpop.f32.mrb[0].mxu0
        %v1786 = vadd.f32 %v639, %v1785
        %v1787 = vpop.f32.mrb[0].mxu0
        %1788 = vdwg.mxu0
        %1789 = vrot.lane.b32.xlu0 %v1691, 96
        %v1790 = vpop.permute.xlu0 %1789
        %1791 = vrot.lane.b32.xlu0 %v1693, 96
        %v1792 = vpop.permute.xlu0 %1791
        %v1794 = vsel %vm799, %v1698, 0
        %v1797 = vsel %vm799, %v1699, 0
        %v1799 = vsel %vm799, %v1790, 0
        %v1801 = vsel %vm799, %v1792, 0
        %1803 = vmatprep.subr.mxu0 0.0
        %1804 = vmatpush1.xpose.msra.mxu0 %v1799
        %1805 = vmatprep.subr.mxu0 0.0
        %1806 = vmatpush1.xpose.msra.mxu0 %v1801
        %1807 = vmatprep.subr.mxu0 0.0
        %1808 = vmatpush1.xpose.msra.mxu0 0.0
        %1809 = vmatprep.subr.mxu0 0.0
        %1810 = vmatpush1.xpose.msra.mxu0 0.0
        %1811 = vmatprep.subr.mxu0 0.0
        %1812 = vmatpush1.xpose.msra.mxu0 0.0
        %1813 = vmatprep.subr.mxu0 0.0
        %1814 = vmatpush1.xpose.msra.mxu0 0.0
        %1815 = vmatprep.subr.mxu0 0.0
        %1816 = vmatpush1.xpose.msra.mxu0 0.0
        %1817 = vmatprep.subr.mxu0 0.0
        %1818 = vmatpush1.xpose.msra.mxu0 0.0
        %1819 = vmatprep.subr.mxu0 0.0
        %1820 = vmatpush1.xpose.msra.mxu0 0.0
        %1821 = vmatprep.subr.mxu0 0.0
        %1822 = vmatpush1.xpose.msra.mxu0 0.0
        %1823 = vmatprep.subr.mxu0 0.0
        %1824 = vmatpush1.xpose.msra.mxu0 0.0
        %1825 = vmatprep.subr.mxu0 0.0
        %1826 = vmatpush1.xpose.msra.mxu0 0.0
        %1827 = vmatprep.subr.mxu0 0.0
        %1828 = vmatpush1.xpose.msra.mxu0 0.0
        %1829 = vmatprep.subr.mxu0 0.0
        %1830 = vmatpush1.xpose.msra.mxu0 0.0
        %1831 = vmatprep.subr.mxu0 0.0
        %1832 = vmatpush1.xpose.msra.mxu0 0.0
        %1833 = vmatprep.subr.mxu0 0.0
        %1834 = vmatpush1.xpose.msra.mxu0 0.0
        %1835 = vmatprep.subr.mxu0 0.0
        %1836 = vmatpush1.xpose.msra.mxu0 0.0
        %1837 = vmatprep.subr.mxu0 0.0
        %1838 = vmatpush1.xpose.msra.mxu0 0.0
        %1839 = vmatprep.subr.mxu0 0.0
        %1840 = vmatpush1.xpose.msra.mxu0 0.0
        %1841 = vmatprep.subr.mxu0 0.0
        %1842 = vmatpush1.xpose.msra.mxu0 0.0
        %1843 = vmatprep.subr.mxu0 0.0
        %1844 = vmatpush1.xpose.msra.mxu0 0.0
        %1845 = vmatprep.subr.mxu0 0.0
        %1846 = vmatpush1.xpose.msra.mxu0 0.0
        %1847 = vmatprep.subr.mxu0 0.0
        %1848 = vmatpush1.xpose.msra.mxu0 0.0
        %1849 = vmatprep.subr.mxu0 0.0
        %1850 = vmatpush1.xpose.msra.mxu0 0.0
        %1851 = vmatprep.subr.mxu0 0.0
        %1852 = vmatpush1.xpose.msra.mxu0 0.0
        %1853 = vmatprep.subr.mxu0 0.0
        %1854 = vmatpush1.xpose.msra.mxu0 0.0
        %1855 = vmatprep.subr.mxu0 0.0
        %1856 = vmatpush1.xpose.msra.mxu0 0.0
        %1857 = vmatprep.subr.mxu0 0.0
        %1858 = vmatpush1.xpose.msra.mxu0 0.0
        %1859 = vmatprep.subr.mxu0 0.0
        %1860 = vmatpush1.xpose.msra.mxu0 0.0
        %1861 = vmatprep.subr.mxu0 0.0
        %1862 = vmatpush1.xpose.msra.mxu0 0.0
        %1863 = vmatprep.subr.mxu0 0.0
        %1864 = vmatpush1.xpose.msra.mxu0 0.0
        %1865 = vmatprep.subr.mxu0 0.0
        %1866 = vmatpush1.xpose.msra.mxu0 0.0
        %1867 = vmatprep.mubr.f32.mxu0 0.0
        %1868 = vmatmul.mubr.f32.gmra.mrb[0].mxu0 %v1794
        %v1869 = vpop.f32.mrb[0].mxu0
        %v1870 = vadd.f32 %v638, %v1869
        %v1871 = vpop.f32.mrb[0].mxu0
        %1872 = vmatprep.mubr.f32.mxu0 0.0
        %1873 = vmatmul.mubr.f32.gmra.mrb[0].mxu0 %v1797
        %v1874 = vpop.f32.mrb[0].mxu0
        %v1875 = vadd.f32 %v639, %v1874
        %v1876 = vpop.f32.mrb[0].mxu0
        %1877 = vdwg.mxu0
        %v1878 = vsel %vm799, %v1781, -inf
        %1879 = vmax.xlane.f32.xlu0 %v1878
        %v1880 = vpop.xlane.xlu0 %1879
        %v1881 = vsel %vm799, %v1786, -inf
        %1882 = vmax.xlane.f32.xlu0 %v1881
        %v1883 = vpop.xlane.xlu0 %1882
        %v1884 = vsel %vm799, %v1870, -inf
        %1885 = vmax.xlane.f32.xlu0 %v1884
        %v1886 = vpop.xlane.xlu0 %1885
        %v1887 = vsel %vm799, %v1875, -inf
        %1888 = vmax.xlane.f32.xlu0 %v1887
        %v1889 = vpop.xlane.xlu0 %1888
        %v1890 = vsub.f32 %v1781, %v1880
        %v1891 = vsub.f32 %v1786, %v1883
        %v1892 = vsub.f32 %v1870, %v1886
        %v1893 = vsub.f32 %v1875, %v1889
        %v1894 = vmul.f32 %v1890, 1.442695
        %v1895 = vpow.pop %v1894
        %v1896 = vmul.f32 %v1891, 1.442695
        %v1897 = vpow.pop %v1896
        %v1898 = vmul.f32 %v1892, 1.442695
        %v1899 = vpow.pop %v1898
        %v1900 = vmul.f32 %v1893, 1.442695
        %v1901 = vpow.pop %v1900
        %v1902 = vsel %vm799, %v1895, 0.0
        %1903 = vadd.xlane.f32.xlu0 %v1902
        %v1904 = vpop.xlane.xlu0 %1903
        %v1905 = vsel %vm799, %v1897, 0.0
        %1906 = vadd.xlane.f32.xlu0 %v1905
        %v1907 = vpop.xlane.xlu0 %1906
        %v1908 = vsel %vm799, %v1899, 0.0
        %1909 = vadd.xlane.f32.xlu0 %v1908
        %v1910 = vpop.xlane.xlu0 %1909
        %v1911 = vsel %vm799, %v1901, 0.0
        %1912 = vadd.xlane.f32.xlu0 %v1911
        %v1913 = vpop.xlane.xlu0 %1912
        %v1914 = vrcp.pop %v1904
        %v1915 = vrcp.pop %v1907
        %v1916 = vrcp.pop %v1910
        %v1917 = vrcp.pop %v1913
        %v1918 = vmul.f32 %v1895, %v1914
        %v1919 = vmul.f32 %v1897, %v1915
        %v1920 = vmul.f32 %v1899, %v1916
        %v1921 = vmul.f32 %v1901, %v1917
        %1922 = vrot.lane.b32.xlu0 %v1680, 64
        %v1923 = vpop.permute.xlu0 %1922
        %1924 = vrot.lane.b32.xlu0 %v1685, 64
        %v1925 = vpop.permute.xlu0 %1924
        %v1929 = vsel %vm799, %v1918, 0
        %v1932 = vsel %vm799, %v1919, 0
        %1934 = vmatprep.subr.mxu0 0.0
        %1935 = vmatpush1.msra.mxu0 %v1923
        %1936 = vmatprep.subr.mxu0 0.0
        %1937 = vmatpush1.msra.mxu0 %v1925
        %1938 = vmatprep.subr.mxu0 0.0
        %1939 = vmatpush1.msra.mxu0 0.0
        %1940 = vmatprep.subr.mxu0 0.0
        %1941 = vmatpush1.msra.mxu0 0.0
        %1942 = vmatprep.subr.mxu0 0.0
        %1943 = vmatpush1.msra.mxu0 0.0
        %1944 = vmatprep.subr.mxu0 0.0
        %1945 = vmatpush1.msra.mxu0 0.0
        %1946 = vmatprep.subr.mxu0 0.0
        %1947 = vmatpush1.msra.mxu0 0.0
        %1948 = vmatprep.subr.mxu0 0.0
        %1949 = vmatpush1.msra.mxu0 0.0
        %1950 = vmatprep.subr.mxu0 0.0
        %1951 = vmatpush1.msra.mxu0 0.0
        %1952 = vmatprep.subr.mxu0 0.0
        %1953 = vmatpush1.msra.mxu0 0.0
        %1954 = vmatprep.subr.mxu0 0.0
        %1955 = vmatpush1.msra.mxu0 0.0
        %1956 = vmatprep.subr.mxu0 0.0
        %1957 = vmatpush1.msra.mxu0 0.0
        %1958 = vmatprep.subr.mxu0 0.0
        %1959 = vmatpush1.msra.mxu0 0.0
        %1960 = vmatprep.subr.mxu0 0.0
        %1961 = vmatpush1.msra.mxu0 0.0
        %1962 = vmatprep.subr.mxu0 0.0
        %1963 = vmatpush1.msra.mxu0 0.0
        %1964 = vmatprep.subr.mxu0 0.0
        %1965 = vmatpush1.msra.mxu0 0.0
        %1966 = vmatprep.subr.mxu0 0.0
        %1967 = vmatpush1.msra.mxu0 0.0
        %1968 = vmatprep.subr.mxu0 0.0
        %1969 = vmatpush1.msra.mxu0 0.0
        %1970 = vmatprep.subr.mxu0 0.0
        %1971 = vmatpush1.msra.mxu0 0.0
        %1972 = vmatprep.subr.mxu0 0.0
        %1973 = vmatpush1.msra.mxu0 0.0
        %1974 = vmatprep.subr.mxu0 0.0
        %1975 = vmatpush1.msra.mxu0 0.0
        %1976 = vmatprep.subr.mxu0 0.0
        %1977 = vmatpush1.msra.mxu0 0.0
        %1978 = vmatprep.subr.mxu0 0.0
        %1979 = vmatpush1.msra.mxu0 0.0
        %1980 = vmatprep.subr.mxu0 0.0
        %1981 = vmatpush1.msra.mxu0 0.0
        %1982 = vmatprep.subr.mxu0 0.0
        %1983 = vmatpush1.msra.mxu0 0.0
        %1984 = vmatprep.subr.mxu0 0.0
        %1985 = vmatpush1.msra.mxu0 0.0
        %1986 = vmatprep.subr.mxu0 0.0
        %1987 = vmatpush1.msra.mxu0 0.0
        %1988 = vmatprep.subr.mxu0 0.0
        %1989 = vmatpush1.msra.mxu0 0.0
        %1990 = vmatprep.subr.mxu0 0.0
        %1991 = vmatpush1.msra.mxu0 0.0
        %1992 = vmatprep.subr.mxu0 0.0
        %1993 = vmatpush1.msra.mxu0 0.0
        %1994 = vmatprep.subr.mxu0 0.0
        %1995 = vmatpush1.msra.mxu0 0.0
        %1996 = vmatprep.subr.mxu0 0.0
        %1997 = vmatpush1.msra.mxu0 0.0
        %1998 = vmatprep.mubr.f32.mxu0 0.0
        %1999 = vmatmul.mubr.f32.gmra.mrb[0].mxu0 %v1929
        %v2000 = vpop.f32.mrb[0].mxu0
        %v2001 = vadd.f32 0.0, %v2000
        %v2002 = vpop.f32.mrb[0].mxu0
        %2003 = vmatprep.mubr.f32.mxu0 0.0
        %2004 = vmatmul.mubr.f32.gmra.mrb[0].mxu0 %v1932
        %v2005 = vpop.f32.mrb[0].mxu0
        %v2006 = vadd.f32 0.0, %v2005
        %v2007 = vpop.f32.mrb[0].mxu0
        %2008 = vdwg.mxu0
        %2009 = vrot.lane.b32.xlu0 %v1691, 64
        %v2010 = vpop.permute.xlu0 %2009
        %2011 = vrot.lane.b32.xlu0 %v1693, 64
        %v2012 = vpop.permute.xlu0 %2011
        %v2016 = vsel %vm799, %v1920, 0
        %v2019 = vsel %vm799, %v1921, 0
        %2021 = vmatprep.subr.mxu0 0.0
        %2022 = vmatpush1.msra.mxu0 %v2010
        %2023 = vmatprep.subr.mxu0 0.0
        %2024 = vmatpush1.msra.mxu0 %v2012
        %2025 = vmatprep.subr.mxu0 0.0
        %2026 = vmatpush1.msra.mxu0 0.0
        %2027 = vmatprep.subr.mxu0 0.0
        %2028 = vmatpush1.msra.mxu0 0.0
        %2029 = vmatprep.subr.mxu0 0.0
        %2030 = vmatpush1.msra.mxu0 0.0
        %2031 = vmatprep.subr.mxu0 0.0
        %2032 = vmatpush1.msra.mxu0 0.0
        %2033 = vmatprep.subr.mxu0 0.0
        %2034 = vmatpush1.msra.mxu0 0.0
        %2035 = vmatprep.subr.mxu0 0.0
        %2036 = vmatpush1.msra.mxu0 0.0
        %2037 = vmatprep.subr.mxu0 0.0
        %2038 = vmatpush1.msra.mxu0 0.0
        %2039 = vmatprep.subr.mxu0 0.0
        %2040 = vmatpush1.msra.mxu0 0.0
        %2041 = vmatprep.subr.mxu0 0.0
        %2042 = vmatpush1.msra.mxu0 0.0
        %2043 = vmatprep.subr.mxu0 0.0
        %2044 = vmatpush1.msra.mxu0 0.0
        %2045 = vmatprep.subr.mxu0 0.0
        %2046 = vmatpush1.msra.mxu0 0.0
        %2047 = vmatprep.subr.mxu0 0.0
        %2048 = vmatpush1.msra.mxu0 0.0
        %2049 = vmatprep.subr.mxu0 0.0
        %2050 = vmatpush1.msra.mxu0 0.0
        %2051 = vmatprep.subr.mxu0 0.0
        %2052 = vmatpush1.msra.mxu0 0.0
        %2053 = vmatprep.subr.mxu0 0.0
        %2054 = vmatpush1.msra.mxu0 0.0
        %2055 = vmatprep.subr.mxu0 0.0
        %2056 = vmatpush1.msra.mxu0 0.0
        %2057 = vmatprep.subr.mxu0 0.0
        %2058 = vmatpush1.msra.mxu0 0.0
        %2059 = vmatprep.subr.mxu0 0.0
        %2060 = vmatpush1.msra.mxu0 0.0
        %2061 = vmatprep.subr.mxu0 0.0
        %2062 = vmatpush1.msra.mxu0 0.0
        %2063 = vmatprep.subr.mxu0 0.0
        %2064 = vmatpush1.msra.mxu0 0.0
        %2065 = vmatprep.subr.mxu0 0.0
        %2066 = vmatpush1.msra.mxu0 0.0
        %2067 = vmatprep.subr.mxu0 0.0
        %2068 = vmatpush1.msra.mxu0 0.0
        %2069 = vmatprep.subr.mxu0 0.0
        %2070 = vmatpush1.msra.mxu0 0.0
        %2071 = vmatprep.subr.mxu0 0.0
        %2072 = vmatpush1.msra.mxu0 0.0
        %2073 = vmatprep.subr.mxu0 0.0
        %2074 = vmatpush1.msra.mxu0 0.0
        %2075 = vmatprep.subr.mxu0 0.0
        %2076 = vmatpush1.msra.mxu0 0.0
        %2077 = vmatprep.subr.mxu0 0.0
        %2078 = vmatpush1.msra.mxu0 0.0
        %2079 = vmatprep.subr.mxu0 0.0
        %2080 = vmatpush1.msra.mxu0 0.0
        %2081 = vmatprep.subr.mxu0 0.0
        %2082 = vmatpush1.msra.mxu0 0.0
        %2083 = vmatprep.subr.mxu0 0.0
        %2084 = vmatpush1.msra.mxu0 0.0
        %2085 = vmatprep.mubr.f32.mxu0 0.0
        %2086 = vmatmul.mubr.f32.gmra.mrb[0].mxu0 %v2016
        %v2087 = vpop.f32.mrb[0].mxu0
        %v2088 = vadd.f32 0.0, %v2087
        %v2089 = vpop.f32.mrb[0].mxu0
        %2090 = vmatprep.mubr.f32.mxu0 0.0
        %2091 = vmatmul.mubr.f32.gmra.mrb[0].mxu0 %v2019
        %v2092 = vpop.f32.mrb[0].mxu0
        %v2093 = vadd.f32 0.0, %v2092
        %v2094 = vpop.f32.mrb[0].mxu0
        %2095 = vdwg.mxu0
        %v2097 = vsel %vm799, %v2001, 0
        %v2100 = vsel %vm799, %v2006, 0
        %2102 = vmatprep.subr.mxu0 0.0
        %2103 = vmatpush1.msra.mxu0 %v644
        %2104 = vmatprep.subr.mxu0 0.0
        %2105 = vmatpush1.msra.mxu0 %v645
        %2106 = vmatprep.subr.mxu0 0.0
        %2107 = vmatpush1.msra.mxu0 0.0
        %2108 = vmatprep.subr.mxu0 0.0
        %2109 = vmatpush1.msra.mxu0 0.0
        %2110 = vmatprep.subr.mxu0 0.0
        %2111 = vmatpush1.msra.mxu0 0.0
        %2112 = vmatprep.subr.mxu0 0.0
        %2113 = vmatpush1.msra.mxu0 0.0
        %2114 = vmatprep.subr.mxu0 0.0
        %2115 = vmatpush1.msra.mxu0 0.0
        %2116 = vmatprep.subr.mxu0 0.0
        %2117 = vmatpush1.msra.mxu0 0.0
        %2118 = vmatprep.subr.mxu0 0.0
        %2119 = vmatpush1.msra.mxu0 0.0
        %2120 = vmatprep.subr.mxu0 0.0
        %2121 = vmatpush1.msra.mxu0 0.0
        %2122 = vmatprep.subr.mxu0 0.0
        %2123 = vmatpush1.msra.mxu0 0.0
        %2124 = vmatprep.subr.mxu0 0.0
        %2125 = vmatpush1.msra.mxu0 0.0
        %2126 = vmatprep.subr.mxu0 0.0
        %2127 = vmatpush1.msra.mxu0 0.0
        %2128 = vmatprep.subr.mxu0 0.0
        %2129 = vmatpush1.msra.mxu0 0.0
        %2130 = vmatprep.subr.mxu0 0.0
        %2131 = vmatpush1.msra.mxu0 0.0
        %2132 = vmatprep.subr.mxu0 0.0
        %2133 = vmatpush1.msra.mxu0 0.0
        %2134 = vmatprep.subr.mxu0 0.0
        %2135 = vmatpush1.msra.mxu0 0.0
        %2136 = vmatprep.subr.mxu0 0.0
        %2137 = vmatpush1.msra.mxu0 0.0
        %2138 = vmatprep.subr.mxu0 0.0
        %2139 = vmatpush1.msra.mxu0 0.0
        %2140 = vmatprep.subr.mxu0 0.0
        %2141 = vmatpush1.msra.mxu0 0.0
        %2142 = vmatprep.subr.mxu0 0.0
        %2143 = vmatpush1.msra.mxu0 0.0
        %2144 = vmatprep.subr.mxu0 0.0
        %2145 = vmatpush1.msra.mxu0 0.0
        %2146 = vmatprep.subr.mxu0 0.0
        %2147 = vmatpush1.msra.mxu0 0.0
        %2148 = vmatprep.subr.mxu0 0.0
        %2149 = vmatpush1.msra.mxu0 0.0
        %2150 = vmatprep.subr.mxu0 0.0
        %2151 = vmatpush1.msra.mxu0 0.0
        %2152 = vmatprep.subr.mxu0 0.0
        %2153 = vmatpush1.msra.mxu0 0.0
        %2154 = vmatprep.subr.mxu0 0.0
        %2155 = vmatpush1.msra.mxu0 0.0
        %2156 = vmatprep.subr.mxu0 0.0
        %2157 = vmatpush1.msra.mxu0 0.0
        %2158 = vmatprep.subr.mxu0 0.0
        %2159 = vmatpush1.msra.mxu0 0.0
        %2160 = vmatprep.subr.mxu0 0.0
        %2161 = vmatpush1.msra.mxu0 0.0
        %2162 = vmatprep.subr.mxu0 0.0
        %2163 = vmatpush1.msra.mxu0 0.0
        %2164 = vmatprep.subr.mxu0 0.0
        %2165 = vmatpush1.msra.mxu0 0.0
        %2166 = vmatprep.mubr.f32.mxu0 0.0
        %2167 = vmatmul.mubr.f32.gmra.mrb[0].mxu0 %v2097
        %v2168 = vpop.f32.mrb[0].mxu0
        %v2169 = vadd.f32 0.0, %v2168
        %v2170 = vpop.f32.mrb[0].mxu0
        %2171 = vmatprep.mubr.f32.mxu0 0.0
        %2172 = vmatmul.mubr.f32.gmra.mrb[0].mxu0 %v2100
        %v2173 = vpop.f32.mrb[0].mxu0
        %v2174 = vadd.f32 0.0, %v2173
        %v2175 = vpop.f32.mrb[0].mxu0
        %2176 = vdwg.mxu0
        %v2178 = vsel %vm799, %v2088, 0
        %v2181 = vsel %vm799, %v2093, 0
        %2183 = vmatprep.subr.mxu0 0.0
        %2184 = vmatpush1.msra.mxu0 %v646
        %2185 = vmatprep.subr.mxu0 0.0
        %2186 = vmatpush1.msra.mxu0 %v647
        %2187 = vmatprep.subr.mxu0 0.0
        %2188 = vmatpush1.msra.mxu0 0.0
        %2189 = vmatprep.subr.mxu0 0.0
        %2190 = vmatpush1.msra.mxu0 0.0
        %2191 = vmatprep.subr.mxu0 0.0
        %2192 = vmatpush1.msra.mxu0 0.0
        %2193 = vmatprep.subr.mxu0 0.0
        %2194 = vmatpush1.msra.mxu0 0.0
        %2195 = vmatprep.subr.mxu0 0.0
        %2196 = vmatpush1.msra.mxu0 0.0
        %2197 = vmatprep.subr.mxu0 0.0
        %2198 = vmatpush1.msra.mxu0 0.0
        %2199 = vmatprep.subr.mxu0 0.0
        %2200 = vmatpush1.msra.mxu0 0.0
        %2201 = vmatprep.subr.mxu0 0.0
        %2202 = vmatpush1.msra.mxu0 0.0
        %2203 = vmatprep.subr.mxu0 0.0
        %2204 = vmatpush1.msra.mxu0 0.0
        %2205 = vmatprep.subr.mxu0 0.0
        %2206 = vmatpush1.msra.mxu0 0.0
        %2207 = vmatprep.subr.mxu0 0.0
        %2208 = vmatpush1.msra.mxu0 0.0
        %2209 = vmatprep.subr.mxu0 0.0
        %2210 = vmatpush1.msra.mxu0 0.0
        %2211 = vmatprep.subr.mxu0 0.0
        %2212 = vmatpush1.msra.mxu0 0.0
        %2213 = vmatprep.subr.mxu0 0.0
        %2214 = vmatpush1.msra.mxu0 0.0
        %2215 = vmatprep.subr.mxu0 0.0
        %2216 = vmatpush1.msra.mxu0 0.0
        %2217 = vmatprep.subr.mxu0 0.0
        %2218 = vmatpush1.msra.mxu0 0.0
        %2219 = vmatprep.subr.mxu0 0.0
        %2220 = vmatpush1.msra.mxu0 0.0
        %2221 = vmatprep.subr.mxu0 0.0
        %2222 = vmatpush1.msra.mxu0 0.0
        %2223 = vmatprep.subr.mxu0 0.0
        %2224 = vmatpush1.msra.mxu0 0.0
        %2225 = vmatprep.subr.mxu0 0.0
        %2226 = vmatpush1.msra.mxu0 0.0
        %2227 = vmatprep.subr.mxu0 0.0
        %2228 = vmatpush1.msra.mxu0 0.0
        %2229 = vmatprep.subr.mxu0 0.0
        %2230 = vmatpush1.msra.mxu0 0.0
        %2231 = vmatprep.subr.mxu0 0.0
        %2232 = vmatpush1.msra.mxu0 0.0
        %2233 = vmatprep.subr.mxu0 0.0
        %2234 = vmatpush1.msra.mxu0 0.0
        %2235 = vmatprep.subr.mxu0 0.0
        %2236 = vmatpush1.msra.mxu0 0.0
        %2237 = vmatprep.subr.mxu0 0.0
        %2238 = vmatpush1.msra.mxu0 0.0
        %2239 = vmatprep.subr.mxu0 0.0
        %2240 = vmatpush1.msra.mxu0 0.0
        %2241 = vmatprep.subr.mxu0 0.0
        %2242 = vmatpush1.msra.mxu0 0.0
        %2243 = vmatprep.subr.mxu0 0.0
        %2244 = vmatpush1.msra.mxu0 0.0
        %2245 = vmatprep.subr.mxu0 0.0
        %2246 = vmatpush1.msra.mxu0 0.0
        %2247 = vmatprep.mubr.f32.mxu0 0.0
        %2248 = vmatmul.mubr.f32.gmra.mrb[0].mxu0 %v2178
        %v2249 = vpop.f32.mrb[0].mxu0
        %v2250 = vadd.f32 0.0, %v2249
        %v2251 = vpop.f32.mrb[0].mxu0
        %2252 = vmatprep.mubr.f32.mxu0 0.0
        %2253 = vmatmul.mubr.f32.gmra.mrb[0].mxu0 %v2181
        %v2254 = vpop.f32.mrb[0].mxu0
        %v2255 = vadd.f32 0.0, %v2254
        %v2256 = vpop.f32.mrb[0].mxu0
        %2257 = vdwg.mxu0
        %v2258 = vsel %vm662, %v2169, 0.0
        %v2259 = vsel %vm662, %v2250, 0.0
        %v2260 = vadd.f32 %v2258, %v2259
        %v2261 = vsel %vm662, %v2174, 0.0
        %v2262 = vsel %vm662, %v2255, 0.0
        %v2263 = vadd.f32 %v2261, %v2262
        %v2264 = vadd.f32 %v2260, %v1575
        %v2265 = vadd.f32 %v2263, %v1576
        %v2266 = vsel %vm662, %v2264, 0.0
        %2267 = vadd.xlane.f32.xlu0 %v2266
        %v2268 = vpop.xlane.xlu0 %2267
        %v2269 = vsel %vm662, %v2265, 0.0
        %2270 = vadd.xlane.f32.xlu0 %v2269
        %v2271 = vpop.xlane.xlu0 %2270
        %v2272 = vmul.f32 %v2268, %v669
        %v2273 = vmul.f32 %v2271, %v669
        %v2274 = vsub.f32 %v2264, %v2272
        %v2275 = vsub.f32 %v2265, %v2273
        %v2276 = vmul.f32 %v2274, %v2274
        %v2277 = vmul.f32 %v2275, %v2275
        %v2278 = vsel %vm662, %v2276, 0.0
        %2279 = vadd.xlane.f32.xlu0 %v2278
        %v2280 = vpop.xlane.xlu0 %2279
        %v2281 = vsel %vm662, %v2277, 0.0
        %2282 = vadd.xlane.f32.xlu0 %v2281
        %v2283 = vpop.xlane.xlu0 %2282
        %v2284 = vmul.f32 %v2280, %v669
        %v2285 = vmul.f32 %v2283, %v669
        %v2286 = vadd.f32 %v2284, 1e-06
        %v2287 = vadd.f32 %v2285, 1e-06
        %v2288 = vrsqrt.pop %v2286
        %v2289 = vrsqrt.pop %v2287
        %v2290 = vmul.f32 %v2274, %v2288
        %v2291 = vmul.f32 %v2275, %v2289
        %v2292 = vmul.f32 %v2290, %v1391
        %v2293 = vmul.f32 %v2291, %v1391
        %v2294 = vadd.f32 %v2292, %v1397
        %v2295 = vadd.f32 %v2293, %v1397
        %v2297 = vsel %vm662, %v2294, 0
        %v2300 = vsel %vm662, %v2295, 0
        %2302 = vmatprep.subr.mxu0 0.0
        %2303 = vmatpush1.msra.mxu0 %v648
        %2304 = vmatprep.subr.mxu0 0.0
        %2305 = vmatpush1.msra.mxu0 %v649
        %2306 = vmatprep.subr.mxu0 0.0
        %2307 = vmatpush1.msra.mxu0 %v650
        %2308 = vmatprep.subr.mxu0 0.0
        %2309 = vmatpush1.msra.mxu0 %v651
        %2310 = vmatprep.subr.mxu0 0.0
        %2311 = vmatpush1.msra.mxu0 0.0
        %2312 = vmatprep.subr.mxu0 0.0
        %2313 = vmatpush1.msra.mxu0 0.0
        %2314 = vmatprep.subr.mxu0 0.0
        %2315 = vmatpush1.msra.mxu0 0.0
        %2316 = vmatprep.subr.mxu0 0.0
        %2317 = vmatpush1.msra.mxu0 0.0
        %2318 = vmatprep.subr.mxu0 0.0
        %2319 = vmatpush1.msra.mxu0 0.0
        %2320 = vmatprep.subr.mxu0 0.0
        %2321 = vmatpush1.msra.mxu0 0.0
        %2322 = vmatprep.subr.mxu0 0.0
        %2323 = vmatpush1.msra.mxu0 0.0
        %2324 = vmatprep.subr.mxu0 0.0
        %2325 = vmatpush1.msra.mxu0 0.0
        %2326 = vmatprep.subr.mxu0 0.0
        %2327 = vmatpush1.msra.mxu0 0.0
        %2328 = vmatprep.subr.mxu0 0.0
        %2329 = vmatpush1.msra.mxu0 0.0
        %2330 = vmatprep.subr.mxu0 0.0
        %2331 = vmatpush1.msra.mxu0 0.0
        %2332 = vmatprep.subr.mxu0 0.0
        %2333 = vmatpush1.msra.mxu0 0.0
        %2334 = vmatprep.subr.mxu0 0.0
        %2335 = vmatpush1.msra.mxu0 0.0
        %2336 = vmatprep.subr.mxu0 0.0
        %2337 = vmatpush1.msra.mxu0 0.0
        %2338 = vmatprep.subr.mxu0 0.0
        %2339 = vmatpush1.msra.mxu0 0.0
        %2340 = vmatprep.subr.mxu0 0.0
        %2341 = vmatpush1.msra.mxu0 0.0
        %2342 = vmatprep.subr.mxu0 0.0
        %2343 = vmatpush1.msra.mxu0 0.0
        %2344 = vmatprep.subr.mxu0 0.0
        %2345 = vmatpush1.msra.mxu0 0.0
        %2346 = vmatprep.subr.mxu0 0.0
        %2347 = vmatpush1.msra.mxu0 0.0
        %2348 = vmatprep.subr.mxu0 0.0
        %2349 = vmatpush1.msra.mxu0 0.0
        %2350 = vmatprep.subr.mxu0 0.0
        %2351 = vmatpush1.msra.mxu0 0.0
        %2352 = vmatprep.subr.mxu0 0.0
        %2353 = vmatpush1.msra.mxu0 0.0
        %2354 = vmatprep.subr.mxu0 0.0
        %2355 = vmatpush1.msra.mxu0 0.0
        %2356 = vmatprep.subr.mxu0 0.0
        %2357 = vmatpush1.msra.mxu0 0.0
        %2358 = vmatprep.subr.mxu0 0.0
        %2359 = vmatpush1.msra.mxu0 0.0
        %2360 = vmatprep.subr.mxu0 0.0
        %2361 = vmatpush1.msra.mxu0 0.0
        %2362 = vmatprep.subr.mxu0 0.0
        %2363 = vmatpush1.msra.mxu0 0.0
        %2364 = vmatprep.subr.mxu0 0.0
        %2365 = vmatpush1.msra.mxu0 0.0
        %2366 = vmatprep.mubr.f32.mxu0 0.0
        %2367 = vmatmul.mubr.f32.gmra.mrb[0].mxu0 %v2297
        %v2368 = vpop.f32.mrb[0].mxu0
        %v2369 = vadd.f32 %v1404, %v2368
        %v2370 = vpop.f32.mrb[0].mxu0
        %2371 = vmatprep.mubr.f32.mxu0 0.0
        %2372 = vmatmul.mubr.f32.gmra.mrb[0].mxu0 %v2300
        %v2373 = vpop.f32.mrb[0].mxu0
        %v2374 = vadd.f32 %v1404, %v2373
        %v2375 = vpop.f32.mrb[0].mxu0
        %2376 = vdwg.mxu0
        %v2377 = vmax.f32 %v2369, 0.0
        %v2378 = vmax.f32 %v2374, 0.0
        %v2380 = vsel %vm1493, %v2377, 0
        %v2383 = vsel %vm1493, %v2378, 0
        %2385 = vmatprep.subr.mxu0 0.0
        %2386 = vmatpush1.msra.mxu0 %v653
        %2387 = vmatprep.subr.mxu0 0.0
        %2388 = vmatpush1.msra.mxu0 %v654
        %2389 = vmatprep.subr.mxu0 0.0
        %2390 = vmatpush1.msra.mxu0 %v655
        %2391 = vmatprep.subr.mxu0 0.0
        %2392 = vmatpush1.msra.mxu0 %v656
        %2393 = vmatprep.subr.mxu0 0.0
        %2394 = vmatpush1.msra.mxu0 %v657
        %2395 = vmatprep.subr.mxu0 0.0
        %2396 = vmatpush1.msra.mxu0 %v658
        %2397 = vmatprep.subr.mxu0 0.0
        %2398 = vmatpush1.msra.mxu0 %v659
        %2399 = vmatprep.subr.mxu0 0.0
        %2400 = vmatpush1.msra.mxu0 %v660
        %2401 = vmatprep.subr.mxu0 0.0
        %2402 = vmatpush1.msra.mxu0 0.0
        %2403 = vmatprep.subr.mxu0 0.0
        %2404 = vmatpush1.msra.mxu0 0.0
        %2405 = vmatprep.subr.mxu0 0.0
        %2406 = vmatpush1.msra.mxu0 0.0
        %2407 = vmatprep.subr.mxu0 0.0
        %2408 = vmatpush1.msra.mxu0 0.0
        %2409 = vmatprep.subr.mxu0 0.0
        %2410 = vmatpush1.msra.mxu0 0.0
        %2411 = vmatprep.subr.mxu0 0.0
        %2412 = vmatpush1.msra.mxu0 0.0
        %2413 = vmatprep.subr.mxu0 0.0
        %2414 = vmatpush1.msra.mxu0 0.0
        %2415 = vmatprep.subr.mxu0 0.0
        %2416 = vmatpush1.msra.mxu0 0.0
        %2417 = vmatprep.subr.mxu0 0.0
        %2418 = vmatpush1.msra.mxu0 0.0
        %2419 = vmatprep.subr.mxu0 0.0
        %2420 = vmatpush1.msra.mxu0 0.0
        %2421 = vmatprep.subr.mxu0 0.0
        %2422 = vmatpush1.msra.mxu0 0.0
        %2423 = vmatprep.subr.mxu0 0.0
        %2424 = vmatpush1.msra.mxu0 0.0
        %2425 = vmatprep.subr.mxu0 0.0
        %2426 = vmatpush1.msra.mxu0 0.0
        %2427 = vmatprep.subr.mxu0 0.0
        %2428 = vmatpush1.msra.mxu0 0.0
        %2429 = vmatprep.subr.mxu0 0.0
        %2430 = vmatpush1.msra.mxu0 0.0
        %2431 = vmatprep.subr.mxu0 0.0
        %2432 = vmatpush1.msra.mxu0 0.0
        %2433 = vmatprep.subr.mxu0 0.0
        %2434 = vmatpush1.msra.mxu0 0.0
        %2435 = vmatprep.subr.mxu0 0.0
        %2436 = vmatpush1.msra.mxu0 0.0
        %2437 = vmatprep.subr.mxu0 0.0
        %2438 = vmatpush1.msra.mxu0 0.0
        %2439 = vmatprep.subr.mxu0 0.0
        %2440 = vmatpush1.msra.mxu0 0.0
        %2441 = vmatprep.subr.mxu0 0.0
        %2442 = vmatpush1.msra.mxu0 0.0
        %2443 = vmatprep.subr.mxu0 0.0
        %2444 = vmatpush1.msra.mxu0 0.0
        %2445 = vmatprep.subr.mxu0 0.0
        %2446 = vmatpush1.msra.mxu0 0.0
        %2447 = vmatprep.subr.mxu0 0.0
        %2448 = vmatpush1.msra.mxu0 0.0
        %2449 = vmatprep.mubr.f32.mxu0 0.0
        %2450 = vmatmul.mubr.f32.gmra.mrb[0].mxu0 %v2380
        %v2451 = vpop.f32.mrb[0].mxu0
        %v2452 = vadd.f32 %v1492, %v2451
        %v2453 = vpop.f32.mrb[0].mxu0
        %2454 = vmatprep.mubr.f32.mxu0 0.0
        %2455 = vmatmul.mubr.f32.gmra.mrb[0].mxu0 %v2383
        %v2456 = vpop.f32.mrb[0].mxu0
        %v2457 = vadd.f32 %v1492, %v2456
        %v2458 = vpop.f32.mrb[0].mxu0
        %2459 = vdwg.mxu0
        %v2460 = vadd.f32 %v2452, %v2264
        %v2461 = vadd.f32 %v2457, %v2265
        %s2462 = scalar_lea.vmem %s5, 32
        %v2463 = vld [vmem:[%s2462] sm:$0xff]
        %v2464 = vld [vmem:[%s2462 + $0x8] sm:$0xff]
        %v2465 = vld [vmem:[%s2462 + $0x10] sm:$0xff]
        %v2466 = vld [vmem:[%s2462 + $0x18] sm:$0xff]
        %s2467 = scalar_lea.vmem %s6, 32
        %v2468 = vld [vmem:[%s2467] sm:$0xff]
        %v2469 = vld [vmem:[%s2467 + $0x8] sm:$0xff]
        %v2470 = vld [vmem:[%s2467 + $0x10] sm:$0xff]
        %v2471 = vld [vmem:[%s2467 + $0x18] sm:$0xff]
        %s2472 = scalar_lea.vmem %s7, 32
        %v2473 = vld [vmem:[%s2472] sm:$0xff]
        %v2474 = vld [vmem:[%s2472 + $0x8] sm:$0xff]
        %v2475 = vld [vmem:[%s2472 + $0x10] sm:$0xff]
        %v2476 = vld [vmem:[%s2472 + $0x18] sm:$0xff]
        %s2477 = scalar_lea.vmem %s8, 1
        %v2478 = vld [vmem:[%s2477] sm:$0x1]
        %s2479 = scalar_lea.vmem %s9, 64
        %v2480 = vld [vmem:[%s2479] sm:$0xff]
        %v2481 = vld [vmem:[%s2479 + $0x8] sm:$0xff]
        %v2482 = vld [vmem:[%s2479 + $0x10] sm:$0xff]
        %v2483 = vld [vmem:[%s2479 + $0x18] sm:$0xff]
        %v2484 = vld [vmem:[%s2479 + $0x20] sm:$0xff]
        %v2485 = vld [vmem:[%s2479 + $0x28] sm:$0xff]
        %v2486 = vld [vmem:[%s2479 + $0x30] sm:$0xff]
        %v2487 = vld [vmem:[%s2479 + $0x38] sm:$0xff]
        %s2488 = scalar_lea.vmem %s10, 8
        %v2489 = vld [vmem:[%s2488] sm:$0x1f]
        %v2490 = vsel %vm662, %v2460, 0.0
        %2491 = vadd.xlane.f32.xlu0 %v2490
        %v2492 = vpop.xlane.xlu0 %2491
        %v2493 = vsel %vm662, %v2461, 0.0
        %2494 = vadd.xlane.f32.xlu0 %v2493
        %v2495 = vpop.xlane.xlu0 %2494
        %v2496 = vmul.f32 %v2492, %v669
        %v2497 = vmul.f32 %v2495, %v669
        %v2498 = vsub.f32 %v2460, %v2496
        %v2499 = vsub.f32 %v2461, %v2497
        %v2500 = vmul.f32 %v2498, %v2498
        %v2501 = vmul.f32 %v2499, %v2499
        %v2502 = vsel %vm662, %v2500, 0.0
        %2503 = vadd.xlane.f32.xlu0 %v2502
        %v2504 = vpop.xlane.xlu0 %2503
        %v2505 = vsel %vm662, %v2501, 0.0
        %2506 = vadd.xlane.f32.xlu0 %v2505
        %v2507 = vpop.xlane.xlu0 %2506
        %v2508 = vmul.f32 %v2504, %v669
        %v2509 = vmul.f32 %v2507, %v669
        %v2510 = vadd.f32 %v2508, 1e-05
        %v2511 = vadd.f32 %v2509, 1e-05
        %v2512 = vrsqrt.pop %v2510
        %v2513 = vrsqrt.pop %v2511
        %v2514 = vmul.f32 %v2498, %v2512
        %v2515 = vmul.f32 %v2499, %v2513
        %v2516 = vlaneseq
        %v2517 = vshrl.u32 %v2516, 7
        %v2518 = vsub.s32 0, %v2517
        %v2519 = vrot.slane %v2489, %v2518
        %v2520 = vmul.f32 %v2514, %v2519
        %v2521 = vmul.f32 %v2515, %v2519
        %v2522 = vlaneseq
        %v2523 = vshrl.u32 %v2522, 7
        %v2524 = vsub.s32 1, %v2523
        %v2525 = vrot.slane %v2489, %v2524
        %v2526 = vadd.f32 %v2520, %v2525
        %v2527 = vadd.f32 %v2521, %v2525
        %v2529 = vsel %vm662, %v2526, 0
        %v2532 = vsel %vm662, %v2527, 0
        %2534 = vmatprep.subr.mxu0 0.0
        %2535 = vmatpush1.msra.mxu0 %v2463
        %2536 = vmatprep.subr.mxu0 0.0
        %2537 = vmatpush1.msra.mxu0 %v2464
        %2538 = vmatprep.subr.mxu0 0.0
        %2539 = vmatpush1.msra.mxu0 %v2465
        %2540 = vmatprep.subr.mxu0 0.0
        %2541 = vmatpush1.msra.mxu0 %v2466
        %2542 = vmatprep.subr.mxu0 0.0
        %2543 = vmatpush1.msra.mxu0 0.0
        %2544 = vmatprep.subr.mxu0 0.0
        %2545 = vmatpush1.msra.mxu0 0.0
        %2546 = vmatprep.subr.mxu0 0.0
        %2547 = vmatpush1.msra.mxu0 0.0
        %2548 = vmatprep.subr.mxu0 0.0
        %2549 = vmatpush1.msra.mxu0 0.0
        %2550 = vmatprep.subr.mxu0 0.0
        %2551 = vmatpush1.msra.mxu0 0.0
        %2552 = vmatprep.subr.mxu0 0.0
        %2553 = vmatpush1.msra.mxu0 0.0
        %2554 = vmatprep.subr.mxu0 0.0
        %2555 = vmatpush1.msra.mxu0 0.0
        %2556 = vmatprep.subr.mxu0 0.0
        %2557 = vmatpush1.msra.mxu0 0.0
        %2558 = vmatprep.subr.mxu0 0.0
        %2559 = vmatpush1.msra.mxu0 0.0
        %2560 = vmatprep.subr.mxu0 0.0
        %2561 = vmatpush1.msra.mxu0 0.0
        %2562 = vmatprep.subr.mxu0 0.0
        %2563 = vmatpush1.msra.mxu0 0.0
        %2564 = vmatprep.subr.mxu0 0.0
        %2565 = vmatpush1.msra.mxu0 0.0
        %2566 = vmatprep.subr.mxu0 0.0
        %2567 = vmatpush1.msra.mxu0 0.0
        %2568 = vmatprep.subr.mxu0 0.0
        %2569 = vmatpush1.msra.mxu0 0.0
        %2570 = vmatprep.subr.mxu0 0.0
        %2571 = vmatpush1.msra.mxu0 0.0
        %2572 = vmatprep.subr.mxu0 0.0
        %2573 = vmatpush1.msra.mxu0 0.0
        %2574 = vmatprep.subr.mxu0 0.0
        %2575 = vmatpush1.msra.mxu0 0.0
        %2576 = vmatprep.subr.mxu0 0.0
        %2577 = vmatpush1.msra.mxu0 0.0
        %2578 = vmatprep.subr.mxu0 0.0
        %2579 = vmatpush1.msra.mxu0 0.0
        %2580 = vmatprep.subr.mxu0 0.0
        %2581 = vmatpush1.msra.mxu0 0.0
        %2582 = vmatprep.subr.mxu0 0.0
        %2583 = vmatpush1.msra.mxu0 0.0
        %2584 = vmatprep.subr.mxu0 0.0
        %2585 = vmatpush1.msra.mxu0 0.0
        %2586 = vmatprep.subr.mxu0 0.0
        %2587 = vmatpush1.msra.mxu0 0.0
        %2588 = vmatprep.subr.mxu0 0.0
        %2589 = vmatpush1.msra.mxu0 0.0
        %2590 = vmatprep.subr.mxu0 0.0
        %2591 = vmatpush1.msra.mxu0 0.0
        %2592 = vmatprep.subr.mxu0 0.0
        %2593 = vmatpush1.msra.mxu0 0.0
        %2594 = vmatprep.subr.mxu0 0.0
        %2595 = vmatpush1.msra.mxu0 0.0
        %2596 = vmatprep.subr.mxu0 0.0
        %2597 = vmatpush1.msra.mxu0 0.0
        %2598 = vmatprep.mubr.f32.mxu0 0.0
        %2599 = vmatmul.mubr.f32.gmra.mrb[0].mxu0 %v2529
        %v2600 = vpop.f32.mrb[0].mxu0
        %v2601 = vadd.f32 0.0, %v2600
        %v2602 = vpop.f32.mrb[0].mxu0
        %2603 = vmatprep.mubr.f32.mxu0 0.0
        %2604 = vmatmul.mubr.f32.gmra.mrb[0].mxu0 %v2532
        %v2605 = vpop.f32.mrb[0].mxu0
        %v2606 = vadd.f32 0.0, %v2605
        %v2607 = vpop.f32.mrb[0].mxu0
        %2608 = vdwg.mxu0
        %2611 = vrot.lane.b32.xlu0 %v2601, 112
        %v2612 = vpop.permute.xlu0 %2611
        %2613 = vrot.lane.b32.xlu0 %v2606, 112
        %v2614 = vpop.permute.xlu0 %2613
        %v2617 = vmul.f32 %v2601, 0.25
        %v2618 = vmul.f32 %v2606, 0.25
        %v2619 = vmul.f32 %v2612, 0.25
        %v2620 = vmul.f32 %v2614, 0.25
        %2621 = vrot.lane.b32.xlu0 %v2601, 96
        %v2622 = vpop.permute.xlu0 %2621
        %2623 = vrot.lane.b32.xlu0 %v2606, 96
        %v2624 = vpop.permute.xlu0 %2623
        %v2626 = vsel %vm799, %v2617, 0
        %v2629 = vsel %vm799, %v2618, 0
        %v2631 = vsel %vm799, %v2622, 0
        %v2633 = vsel %vm799, %v2624, 0
        %2635 = vmatprep.subr.mxu0 0.0
        %2636 = vmatpush1.xpose.msra.mxu0 %v2631
        %2637 = vmatprep.subr.mxu0 0.0
        %2638 = vmatpush1.xpose.msra.mxu0 %v2633
        %2639 = vmatprep.subr.mxu0 0.0
        %2640 = vmatpush1.xpose.msra.mxu0 0.0
        %2641 = vmatprep.subr.mxu0 0.0
        %2642 = vmatpush1.xpose.msra.mxu0 0.0
        %2643 = vmatprep.subr.mxu0 0.0
        %2644 = vmatpush1.xpose.msra.mxu0 0.0
        %2645 = vmatprep.subr.mxu0 0.0
        %2646 = vmatpush1.xpose.msra.mxu0 0.0
        %2647 = vmatprep.subr.mxu0 0.0
        %2648 = vmatpush1.xpose.msra.mxu0 0.0
        %2649 = vmatprep.subr.mxu0 0.0
        %2650 = vmatpush1.xpose.msra.mxu0 0.0
        %2651 = vmatprep.subr.mxu0 0.0
        %2652 = vmatpush1.xpose.msra.mxu0 0.0
        %2653 = vmatprep.subr.mxu0 0.0
        %2654 = vmatpush1.xpose.msra.mxu0 0.0
        %2655 = vmatprep.subr.mxu0 0.0
        %2656 = vmatpush1.xpose.msra.mxu0 0.0
        %2657 = vmatprep.subr.mxu0 0.0
        %2658 = vmatpush1.xpose.msra.mxu0 0.0
        %2659 = vmatprep.subr.mxu0 0.0
        %2660 = vmatpush1.xpose.msra.mxu0 0.0
        %2661 = vmatprep.subr.mxu0 0.0
        %2662 = vmatpush1.xpose.msra.mxu0 0.0
        %2663 = vmatprep.subr.mxu0 0.0
        %2664 = vmatpush1.xpose.msra.mxu0 0.0
        %2665 = vmatprep.subr.mxu0 0.0
        %2666 = vmatpush1.xpose.msra.mxu0 0.0
        %2667 = vmatprep.subr.mxu0 0.0
        %2668 = vmatpush1.xpose.msra.mxu0 0.0
        %2669 = vmatprep.subr.mxu0 0.0
        %2670 = vmatpush1.xpose.msra.mxu0 0.0
        %2671 = vmatprep.subr.mxu0 0.0
        %2672 = vmatpush1.xpose.msra.mxu0 0.0
        %2673 = vmatprep.subr.mxu0 0.0
        %2674 = vmatpush1.xpose.msra.mxu0 0.0
        %2675 = vmatprep.subr.mxu0 0.0
        %2676 = vmatpush1.xpose.msra.mxu0 0.0
        %2677 = vmatprep.subr.mxu0 0.0
        %2678 = vmatpush1.xpose.msra.mxu0 0.0
        %2679 = vmatprep.subr.mxu0 0.0
        %2680 = vmatpush1.xpose.msra.mxu0 0.0
        %2681 = vmatprep.subr.mxu0 0.0
        %2682 = vmatpush1.xpose.msra.mxu0 0.0
        %2683 = vmatprep.subr.mxu0 0.0
        %2684 = vmatpush1.xpose.msra.mxu0 0.0
        %2685 = vmatprep.subr.mxu0 0.0
        %2686 = vmatpush1.xpose.msra.mxu0 0.0
        %2687 = vmatprep.subr.mxu0 0.0
        %2688 = vmatpush1.xpose.msra.mxu0 0.0
        %2689 = vmatprep.subr.mxu0 0.0
        %2690 = vmatpush1.xpose.msra.mxu0 0.0
        %2691 = vmatprep.subr.mxu0 0.0
        %2692 = vmatpush1.xpose.msra.mxu0 0.0
        %2693 = vmatprep.subr.mxu0 0.0
        %2694 = vmatpush1.xpose.msra.mxu0 0.0
        %2695 = vmatprep.subr.mxu0 0.0
        %2696 = vmatpush1.xpose.msra.mxu0 0.0
        %2697 = vmatprep.subr.mxu0 0.0
        %2698 = vmatpush1.xpose.msra.mxu0 0.0
        %2699 = vmatprep.mubr.f32.mxu0 0.0
        %2700 = vmatmul.mubr.f32.gmra.mrb[0].mxu0 %v2626
        %v2701 = vpop.f32.mrb[0].mxu0
        %v2702 = vadd.f32 %v638, %v2701
        %v2703 = vpop.f32.mrb[0].mxu0
        %2704 = vmatprep.mubr.f32.mxu0 0.0
        %2705 = vmatmul.mubr.f32.gmra.mrb[0].mxu0 %v2629
        %v2706 = vpop.f32.mrb[0].mxu0
        %v2707 = vadd.f32 %v639, %v2706
        %v2708 = vpop.f32.mrb[0].mxu0
        %2709 = vdwg.mxu0
        %2710 = vrot.lane.b32.xlu0 %v2612, 96
        %v2711 = vpop.permute.xlu0 %2710
        %2712 = vrot.lane.b32.xlu0 %v2614, 96
        %v2713 = vpop.permute.xlu0 %2712
        %v2715 = vsel %vm799, %v2619, 0
        %v2718 = vsel %vm799, %v2620, 0
        %v2720 = vsel %vm799, %v2711, 0
        %v2722 = vsel %vm799, %v2713, 0
        %2724 = vmatprep.subr.mxu0 0.0
        %2725 = vmatpush1.xpose.msra.mxu0 %v2720
        %2726 = vmatprep.subr.mxu0 0.0
        %2727 = vmatpush1.xpose.msra.mxu0 %v2722
        %2728 = vmatprep.subr.mxu0 0.0
        %2729 = vmatpush1.xpose.msra.mxu0 0.0
        %2730 = vmatprep.subr.mxu0 0.0
        %2731 = vmatpush1.xpose.msra.mxu0 0.0
        %2732 = vmatprep.subr.mxu0 0.0
        %2733 = vmatpush1.xpose.msra.mxu0 0.0
        %2734 = vmatprep.subr.mxu0 0.0
        %2735 = vmatpush1.xpose.msra.mxu0 0.0
        %2736 = vmatprep.subr.mxu0 0.0
        %2737 = vmatpush1.xpose.msra.mxu0 0.0
        %2738 = vmatprep.subr.mxu0 0.0
        %2739 = vmatpush1.xpose.msra.mxu0 0.0
        %2740 = vmatprep.subr.mxu0 0.0
        %2741 = vmatpush1.xpose.msra.mxu0 0.0
        %2742 = vmatprep.subr.mxu0 0.0
        %2743 = vmatpush1.xpose.msra.mxu0 0.0
        %2744 = vmatprep.subr.mxu0 0.0
        %2745 = vmatpush1.xpose.msra.mxu0 0.0
        %2746 = vmatprep.subr.mxu0 0.0
        %2747 = vmatpush1.xpose.msra.mxu0 0.0
        %2748 = vmatprep.subr.mxu0 0.0
        %2749 = vmatpush1.xpose.msra.mxu0 0.0
        %2750 = vmatprep.subr.mxu0 0.0
        %2751 = vmatpush1.xpose.msra.mxu0 0.0
        %2752 = vmatprep.subr.mxu0 0.0
        %2753 = vmatpush1.xpose.msra.mxu0 0.0
        %2754 = vmatprep.subr.mxu0 0.0
        %2755 = vmatpush1.xpose.msra.mxu0 0.0
        %2756 = vmatprep.subr.mxu0 0.0
        %2757 = vmatpush1.xpose.msra.mxu0 0.0
        %2758 = vmatprep.subr.mxu0 0.0
        %2759 = vmatpush1.xpose.msra.mxu0 0.0
        %2760 = vmatprep.subr.mxu0 0.0
        %2761 = vmatpush1.xpose.msra.mxu0 0.0
        %2762 = vmatprep.subr.mxu0 0.0
        %2763 = vmatpush1.xpose.msra.mxu0 0.0
        %2764 = vmatprep.subr.mxu0 0.0
        %2765 = vmatpush1.xpose.msra.mxu0 0.0
        %2766 = vmatprep.subr.mxu0 0.0
        %2767 = vmatpush1.xpose.msra.mxu0 0.0
        %2768 = vmatprep.subr.mxu0 0.0
        %2769 = vmatpush1.xpose.msra.mxu0 0.0
        %2770 = vmatprep.subr.mxu0 0.0
        %2771 = vmatpush1.xpose.msra.mxu0 0.0
        %2772 = vmatprep.subr.mxu0 0.0
        %2773 = vmatpush1.xpose.msra.mxu0 0.0
        %2774 = vmatprep.subr.mxu0 0.0
        %2775 = vmatpush1.xpose.msra.mxu0 0.0
        %2776 = vmatprep.subr.mxu0 0.0
        %2777 = vmatpush1.xpose.msra.mxu0 0.0
        %2778 = vmatprep.subr.mxu0 0.0
        %2779 = vmatpush1.xpose.msra.mxu0 0.0
        %2780 = vmatprep.subr.mxu0 0.0
        %2781 = vmatpush1.xpose.msra.mxu0 0.0
        %2782 = vmatprep.subr.mxu0 0.0
        %2783 = vmatpush1.xpose.msra.mxu0 0.0
        %2784 = vmatprep.subr.mxu0 0.0
        %2785 = vmatpush1.xpose.msra.mxu0 0.0
        %2786 = vmatprep.subr.mxu0 0.0
        %2787 = vmatpush1.xpose.msra.mxu0 0.0
        %2788 = vmatprep.mubr.f32.mxu0 0.0
        %2789 = vmatmul.mubr.f32.gmra.mrb[0].mxu0 %v2715
        %v2790 = vpop.f32.mrb[0].mxu0
        %v2791 = vadd.f32 %v638, %v2790
        %v2792 = vpop.f32.mrb[0].mxu0
        %2793 = vmatprep.mubr.f32.mxu0 0.0
        %2794 = vmatmul.mubr.f32.gmra.mrb[0].mxu0 %v2718
        %v2795 = vpop.f32.mrb[0].mxu0
        %v2796 = vadd.f32 %v639, %v2795
        %v2797 = vpop.f32.mrb[0].mxu0
        %2798 = vdwg.mxu0
        %v2799 = vsel %vm799, %v2702, -inf
        %2800 = vmax.xlane.f32.xlu0 %v2799
        %v2801 = vpop.xlane.xlu0 %2800
        %v2802 = vsel %vm799, %v2707, -inf
        %2803 = vmax.xlane.f32.xlu0 %v2802
        %v2804 = vpop.xlane.xlu0 %2803
        %v2805 = vsel %vm799, %v2791, -inf
        %2806 = vmax.xlane.f32.xlu0 %v2805
        %v2807 = vpop.xlane.xlu0 %2806
        %v2808 = vsel %vm799, %v2796, -inf
        %2809 = vmax.xlane.f32.xlu0 %v2808
        %v2810 = vpop.xlane.xlu0 %2809
        %v2811 = vsub.f32 %v2702, %v2801
        %v2812 = vsub.f32 %v2707, %v2804
        %v2813 = vsub.f32 %v2791, %v2807
        %v2814 = vsub.f32 %v2796, %v2810
        %v2815 = vmul.f32 %v2811, 1.442695
        %v2816 = vpow.pop %v2815
        %v2817 = vmul.f32 %v2812, 1.442695
        %v2818 = vpow.pop %v2817
        %v2819 = vmul.f32 %v2813, 1.442695
        %v2820 = vpow.pop %v2819
        %v2821 = vmul.f32 %v2814, 1.442695
        %v2822 = vpow.pop %v2821
        %v2823 = vsel %vm799, %v2816, 0.0
        %2824 = vadd.xlane.f32.xlu0 %v2823
        %v2825 = vpop.xlane.xlu0 %2824
        %v2826 = vsel %vm799, %v2818, 0.0
        %2827 = vadd.xlane.f32.xlu0 %v2826
        %v2828 = vpop.xlane.xlu0 %2827
        %v2829 = vsel %vm799, %v2820, 0.0
        %2830 = vadd.xlane.f32.xlu0 %v2829
        %v2831 = vpop.xlane.xlu0 %2830
        %v2832 = vsel %vm799, %v2822, 0.0
        %2833 = vadd.xlane.f32.xlu0 %v2832
        %v2834 = vpop.xlane.xlu0 %2833
        %v2835 = vrcp.pop %v2825
        %v2836 = vrcp.pop %v2828
        %v2837 = vrcp.pop %v2831
        %v2838 = vrcp.pop %v2834
        %v2839 = vmul.f32 %v2816, %v2835
        %v2840 = vmul.f32 %v2818, %v2836
        %v2841 = vmul.f32 %v2820, %v2837
        %v2842 = vmul.f32 %v2822, %v2838
        %2843 = vrot.lane.b32.xlu0 %v2601, 64
        %v2844 = vpop.permute.xlu0 %2843
        %2845 = vrot.lane.b32.xlu0 %v2606, 64
        %v2846 = vpop.permute.xlu0 %2845
        %v2850 = vsel %vm799, %v2839, 0
        %v2853 = vsel %vm799, %v2840, 0
        %2855 = vmatprep.subr.mxu0 0.0
        %2856 = vmatpush1.msra.mxu0 %v2844
        %2857 = vmatprep.subr.mxu0 0.0
        %2858 = vmatpush1.msra.mxu0 %v2846
        %2859 = vmatprep.subr.mxu0 0.0
        %2860 = vmatpush1.msra.mxu0 0.0
        %2861 = vmatprep.subr.mxu0 0.0
        %2862 = vmatpush1.msra.mxu0 0.0
        %2863 = vmatprep.subr.mxu0 0.0
        %2864 = vmatpush1.msra.mxu0 0.0
        %2865 = vmatprep.subr.mxu0 0.0
        %2866 = vmatpush1.msra.mxu0 0.0
        %2867 = vmatprep.subr.mxu0 0.0
        %2868 = vmatpush1.msra.mxu0 0.0
        %2869 = vmatprep.subr.mxu0 0.0
        %2870 = vmatpush1.msra.mxu0 0.0
        %2871 = vmatprep.subr.mxu0 0.0
        %2872 = vmatpush1.msra.mxu0 0.0
        %2873 = vmatprep.subr.mxu0 0.0
        %2874 = vmatpush1.msra.mxu0 0.0
        %2875 = vmatprep.subr.mxu0 0.0
        %2876 = vmatpush1.msra.mxu0 0.0
        %2877 = vmatprep.subr.mxu0 0.0
        %2878 = vmatpush1.msra.mxu0 0.0
        %2879 = vmatprep.subr.mxu0 0.0
        %2880 = vmatpush1.msra.mxu0 0.0
        %2881 = vmatprep.subr.mxu0 0.0
        %2882 = vmatpush1.msra.mxu0 0.0
        %2883 = vmatprep.subr.mxu0 0.0
        %2884 = vmatpush1.msra.mxu0 0.0
        %2885 = vmatprep.subr.mxu0 0.0
        %2886 = vmatpush1.msra.mxu0 0.0
        %2887 = vmatprep.subr.mxu0 0.0
        %2888 = vmatpush1.msra.mxu0 0.0
        %2889 = vmatprep.subr.mxu0 0.0
        %2890 = vmatpush1.msra.mxu0 0.0
        %2891 = vmatprep.subr.mxu0 0.0
        %2892 = vmatpush1.msra.mxu0 0.0
        %2893 = vmatprep.subr.mxu0 0.0
        %2894 = vmatpush1.msra.mxu0 0.0
        %2895 = vmatprep.subr.mxu0 0.0
        %2896 = vmatpush1.msra.mxu0 0.0
        %2897 = vmatprep.subr.mxu0 0.0
        %2898 = vmatpush1.msra.mxu0 0.0
        %2899 = vmatprep.subr.mxu0 0.0
        %2900 = vmatpush1.msra.mxu0 0.0
        %2901 = vmatprep.subr.mxu0 0.0
        %2902 = vmatpush1.msra.mxu0 0.0
        %2903 = vmatprep.subr.mxu0 0.0
        %2904 = vmatpush1.msra.mxu0 0.0
        %2905 = vmatprep.subr.mxu0 0.0
        %2906 = vmatpush1.msra.mxu0 0.0
        %2907 = vmatprep.subr.mxu0 0.0
        %2908 = vmatpush1.msra.mxu0 0.0
        %2909 = vmatprep.subr.mxu0 0.0
        %2910 = vmatpush1.msra.mxu0 0.0
        %2911 = vmatprep.subr.mxu0 0.0
        %2912 = vmatpush1.msra.mxu0 0.0
        %2913 = vmatprep.subr.mxu0 0.0
        %2914 = vmatpush1.msra.mxu0 0.0
        %2915 = vmatprep.subr.mxu0 0.0
        %2916 = vmatpush1.msra.mxu0 0.0
        %2917 = vmatprep.subr.mxu0 0.0
        %2918 = vmatpush1.msra.mxu0 0.0
        %2919 = vmatprep.mubr.f32.mxu0 0.0
        %2920 = vmatmul.mubr.f32.gmra.mrb[0].mxu0 %v2850
        %v2921 = vpop.f32.mrb[0].mxu0
        %v2922 = vadd.f32 0.0, %v2921
        %v2923 = vpop.f32.mrb[0].mxu0
        %2924 = vmatprep.mubr.f32.mxu0 0.0
        %2925 = vmatmul.mubr.f32.gmra.mrb[0].mxu0 %v2853
        %v2926 = vpop.f32.mrb[0].mxu0
        %v2927 = vadd.f32 0.0, %v2926
        %v2928 = vpop.f32.mrb[0].mxu0
        %2929 = vdwg.mxu0
        %2930 = vrot.lane.b32.xlu0 %v2612, 64
        %v2931 = vpop.permute.xlu0 %2930
        %2932 = vrot.lane.b32.xlu0 %v2614, 64
        %v2933 = vpop.permute.xlu0 %2932
        %v2937 = vsel %vm799, %v2841, 0
        %v2940 = vsel %vm799, %v2842, 0
        %2942 = vmatprep.subr.mxu0 0.0
        %2943 = vmatpush1.msra.mxu0 %v2931
        %2944 = vmatprep.subr.mxu0 0.0
        %2945 = vmatpush1.msra.mxu0 %v2933
        %2946 = vmatprep.subr.mxu0 0.0
        %2947 = vmatpush1.msra.mxu0 0.0
        %2948 = vmatprep.subr.mxu0 0.0
        %2949 = vmatpush1.msra.mxu0 0.0
        %2950 = vmatprep.subr.mxu0 0.0
        %2951 = vmatpush1.msra.mxu0 0.0
        %2952 = vmatprep.subr.mxu0 0.0
        %2953 = vmatpush1.msra.mxu0 0.0
        %2954 = vmatprep.subr.mxu0 0.0
        %2955 = vmatpush1.msra.mxu0 0.0
        %2956 = vmatprep.subr.mxu0 0.0
        %2957 = vmatpush1.msra.mxu0 0.0
        %2958 = vmatprep.subr.mxu0 0.0
        %2959 = vmatpush1.msra.mxu0 0.0
        %2960 = vmatprep.subr.mxu0 0.0
        %2961 = vmatpush1.msra.mxu0 0.0
        %2962 = vmatprep.subr.mxu0 0.0
        %2963 = vmatpush1.msra.mxu0 0.0
        %2964 = vmatprep.subr.mxu0 0.0
        %2965 = vmatpush1.msra.mxu0 0.0
        %2966 = vmatprep.subr.mxu0 0.0
        %2967 = vmatpush1.msra.mxu0 0.0
        %2968 = vmatprep.subr.mxu0 0.0
        %2969 = vmatpush1.msra.mxu0 0.0
        %2970 = vmatprep.subr.mxu0 0.0
        %2971 = vmatpush1.msra.mxu0 0.0
        %2972 = vmatprep.subr.mxu0 0.0
        %2973 = vmatpush1.msra.mxu0 0.0
        %2974 = vmatprep.subr.mxu0 0.0
        %2975 = vmatpush1.msra.mxu0 0.0
        %2976 = vmatprep.subr.mxu0 0.0
        %2977 = vmatpush1.msra.mxu0 0.0
        %2978 = vmatprep.subr.mxu0 0.0
        %2979 = vmatpush1.msra.mxu0 0.0
        %2980 = vmatprep.subr.mxu0 0.0
        %2981 = vmatpush1.msra.mxu0 0.0
        %2982 = vmatprep.subr.mxu0 0.0
        %2983 = vmatpush1.msra.mxu0 0.0
        %2984 = vmatprep.subr.mxu0 0.0
        %2985 = vmatpush1.msra.mxu0 0.0
        %2986 = vmatprep.subr.mxu0 0.0
        %2987 = vmatpush1.msra.mxu0 0.0
        %2988 = vmatprep.subr.mxu0 0.0
        %2989 = vmatpush1.msra.mxu0 0.0
        %2990 = vmatprep.subr.mxu0 0.0
        %2991 = vmatpush1.msra.mxu0 0.0
        %2992 = vmatprep.subr.mxu0 0.0
        %2993 = vmatpush1.msra.mxu0 0.0
        %2994 = vmatprep.subr.mxu0 0.0
        %2995 = vmatpush1.msra.mxu0 0.0
        %2996 = vmatprep.subr.mxu0 0.0
        %2997 = vmatpush1.msra.mxu0 0.0
        %2998 = vmatprep.subr.mxu0 0.0
        %2999 = vmatpush1.msra.mxu0 0.0
        %3000 = vmatprep.subr.mxu0 0.0
        %3001 = vmatpush1.msra.mxu0 0.0
        %3002 = vmatprep.subr.mxu0 0.0
        %3003 = vmatpush1.msra.mxu0 0.0
        %3004 = vmatprep.subr.mxu0 0.0
        %3005 = vmatpush1.msra.mxu0 0.0
        %3006 = vmatprep.mubr.f32.mxu0 0.0
        %3007 = vmatmul.mubr.f32.gmra.mrb[0].mxu0 %v2937
        %v3008 = vpop.f32.mrb[0].mxu0
        %v3009 = vadd.f32 0.0, %v3008
        %v3010 = vpop.f32.mrb[0].mxu0
        %3011 = vmatprep.mubr.f32.mxu0 0.0
        %3012 = vmatmul.mubr.f32.gmra.mrb[0].mxu0 %v2940
        %v3013 = vpop.f32.mrb[0].mxu0
        %v3014 = vadd.f32 0.0, %v3013
        %v3015 = vpop.f32.mrb[0].mxu0
        %3016 = vdwg.mxu0
        %v3018 = vsel %vm799, %v2922, 0
        %v3021 = vsel %vm799, %v2927, 0
        %3023 = vmatprep.subr.mxu0 0.0
        %3024 = vmatpush1.msra.mxu0 %v2468
        %3025 = vmatprep.subr.mxu0 0.0
        %3026 = vmatpush1.msra.mxu0 %v2469
        %3027 = vmatprep.subr.mxu0 0.0
        %3028 = vmatpush1.msra.mxu0 0.0
        %3029 = vmatprep.subr.mxu0 0.0
        %3030 = vmatpush1.msra.mxu0 0.0
        %3031 = vmatprep.subr.mxu0 0.0
        %3032 = vmatpush1.msra.mxu0 0.0
        %3033 = vmatprep.subr.mxu0 0.0
        %3034 = vmatpush1.msra.mxu0 0.0
        %3035 = vmatprep.subr.mxu0 0.0
        %3036 = vmatpush1.msra.mxu0 0.0
        %3037 = vmatprep.subr.mxu0 0.0
        %3038 = vmatpush1.msra.mxu0 0.0
        %3039 = vmatprep.subr.mxu0 0.0
        %3040 = vmatpush1.msra.mxu0 0.0
        %3041 = vmatprep.subr.mxu0 0.0
        %3042 = vmatpush1.msra.mxu0 0.0
        %3043 = vmatprep.subr.mxu0 0.0
        %3044 = vmatpush1.msra.mxu0 0.0
        %3045 = vmatprep.subr.mxu0 0.0
        %3046 = vmatpush1.msra.mxu0 0.0
        %3047 = vmatprep.subr.mxu0 0.0
        %3048 = vmatpush1.msra.mxu0 0.0
        %3049 = vmatprep.subr.mxu0 0.0
        %3050 = vmatpush1.msra.mxu0 0.0
        %3051 = vmatprep.subr.mxu0 0.0
        %3052 = vmatpush1.msra.mxu0 0.0
        %3053 = vmatprep.subr.mxu0 0.0
        %3054 = vmatpush1.msra.mxu0 0.0
        %3055 = vmatprep.subr.mxu0 0.0
        %3056 = vmatpush1.msra.mxu0 0.0
        %3057 = vmatprep.subr.mxu0 0.0
        %3058 = vmatpush1.msra.mxu0 0.0
        %3059 = vmatprep.subr.mxu0 0.0
        %3060 = vmatpush1.msra.mxu0 0.0
        %3061 = vmatprep.subr.mxu0 0.0
        %3062 = vmatpush1.msra.mxu0 0.0
        %3063 = vmatprep.subr.mxu0 0.0
        %3064 = vmatpush1.msra.mxu0 0.0
        %3065 = vmatprep.subr.mxu0 0.0
        %3066 = vmatpush1.msra.mxu0 0.0
        %3067 = vmatprep.subr.mxu0 0.0
        %3068 = vmatpush1.msra.mxu0 0.0
        %3069 = vmatprep.subr.mxu0 0.0
        %3070 = vmatpush1.msra.mxu0 0.0
        %3071 = vmatprep.subr.mxu0 0.0
        %3072 = vmatpush1.msra.mxu0 0.0
        %3073 = vmatprep.subr.mxu0 0.0
        %3074 = vmatpush1.msra.mxu0 0.0
        %3075 = vmatprep.subr.mxu0 0.0
        %3076 = vmatpush1.msra.mxu0 0.0
        %3077 = vmatprep.subr.mxu0 0.0
        %3078 = vmatpush1.msra.mxu0 0.0
        %3079 = vmatprep.subr.mxu0 0.0
        %3080 = vmatpush1.msra.mxu0 0.0
        %3081 = vmatprep.subr.mxu0 0.0
        %3082 = vmatpush1.msra.mxu0 0.0
        %3083 = vmatprep.subr.mxu0 0.0
        %3084 = vmatpush1.msra.mxu0 0.0
        %3085 = vmatprep.subr.mxu0 0.0
        %3086 = vmatpush1.msra.mxu0 0.0
        %3087 = vmatprep.mubr.f32.mxu0 0.0
        %3088 = vmatmul.mubr.f32.gmra.mrb[0].mxu0 %v3018
        %v3089 = vpop.f32.mrb[0].mxu0
        %v3090 = vadd.f32 0.0, %v3089
        %v3091 = vpop.f32.mrb[0].mxu0
        %3092 = vmatprep.mubr.f32.mxu0 0.0
        %3093 = vmatmul.mubr.f32.gmra.mrb[0].mxu0 %v3021
        %v3094 = vpop.f32.mrb[0].mxu0
        %v3095 = vadd.f32 0.0, %v3094
        %v3096 = vpop.f32.mrb[0].mxu0
        %3097 = vdwg.mxu0
        %v3099 = vsel %vm799, %v3009, 0
        %v3102 = vsel %vm799, %v3014, 0
        %3104 = vmatprep.subr.mxu0 0.0
        %3105 = vmatpush1.msra.mxu0 %v2470
        %3106 = vmatprep.subr.mxu0 0.0
        %3107 = vmatpush1.msra.mxu0 %v2471
        %3108 = vmatprep.subr.mxu0 0.0
        %3109 = vmatpush1.msra.mxu0 0.0
        %3110 = vmatprep.subr.mxu0 0.0
        %3111 = vmatpush1.msra.mxu0 0.0
        %3112 = vmatprep.subr.mxu0 0.0
        %3113 = vmatpush1.msra.mxu0 0.0
        %3114 = vmatprep.subr.mxu0 0.0
        %3115 = vmatpush1.msra.mxu0 0.0
        %3116 = vmatprep.subr.mxu0 0.0
        %3117 = vmatpush1.msra.mxu0 0.0
        %3118 = vmatprep.subr.mxu0 0.0
        %3119 = vmatpush1.msra.mxu0 0.0
        %3120 = vmatprep.subr.mxu0 0.0
        %3121 = vmatpush1.msra.mxu0 0.0
        %3122 = vmatprep.subr.mxu0 0.0
        %3123 = vmatpush1.msra.mxu0 0.0
        %3124 = vmatprep.subr.mxu0 0.0
        %3125 = vmatpush1.msra.mxu0 0.0
        %3126 = vmatprep.subr.mxu0 0.0
        %3127 = vmatpush1.msra.mxu0 0.0
        %3128 = vmatprep.subr.mxu0 0.0
        %3129 = vmatpush1.msra.mxu0 0.0
        %3130 = vmatprep.subr.mxu0 0.0
        %3131 = vmatpush1.msra.mxu0 0.0
        %3132 = vmatprep.subr.mxu0 0.0
        %3133 = vmatpush1.msra.mxu0 0.0
        %3134 = vmatprep.subr.mxu0 0.0
        %3135 = vmatpush1.msra.mxu0 0.0
        %3136 = vmatprep.subr.mxu0 0.0
        %3137 = vmatpush1.msra.mxu0 0.0
        %3138 = vmatprep.subr.mxu0 0.0
        %3139 = vmatpush1.msra.mxu0 0.0
        %3140 = vmatprep.subr.mxu0 0.0
        %3141 = vmatpush1.msra.mxu0 0.0
        %3142 = vmatprep.subr.mxu0 0.0
        %3143 = vmatpush1.msra.mxu0 0.0
        %3144 = vmatprep.subr.mxu0 0.0
        %3145 = vmatpush1.msra.mxu0 0.0
        %3146 = vmatprep.subr.mxu0 0.0
        %3147 = vmatpush1.msra.mxu0 0.0
        %3148 = vmatprep.subr.mxu0 0.0
        %3149 = vmatpush1.msra.mxu0 0.0
        %3150 = vmatprep.subr.mxu0 0.0
        %3151 = vmatpush1.msra.mxu0 0.0
        %3152 = vmatprep.subr.mxu0 0.0
        %3153 = vmatpush1.msra.mxu0 0.0
        %3154 = vmatprep.subr.mxu0 0.0
        %3155 = vmatpush1.msra.mxu0 0.0
        %3156 = vmatprep.subr.mxu0 0.0
        %3157 = vmatpush1.msra.mxu0 0.0
        %3158 = vmatprep.subr.mxu0 0.0
        %3159 = vmatpush1.msra.mxu0 0.0
        %3160 = vmatprep.subr.mxu0 0.0
        %3161 = vmatpush1.msra.mxu0 0.0
        %3162 = vmatprep.subr.mxu0 0.0
        %3163 = vmatpush1.msra.mxu0 0.0
        %3164 = vmatprep.subr.mxu0 0.0
        %3165 = vmatpush1.msra.mxu0 0.0
        %3166 = vmatprep.subr.mxu0 0.0
        %3167 = vmatpush1.msra.mxu0 0.0
        %3168 = vmatprep.mubr.f32.mxu0 0.0
        %3169 = vmatmul.mubr.f32.gmra.mrb[0].mxu0 %v3099
        %v3170 = vpop.f32.mrb[0].mxu0
        %v3171 = vadd.f32 0.0, %v3170
        %v3172 = vpop.f32.mrb[0].mxu0
        %3173 = vmatprep.mubr.f32.mxu0 0.0
        %3174 = vmatmul.mubr.f32.gmra.mrb[0].mxu0 %v3102
        %v3175 = vpop.f32.mrb[0].mxu0
        %v3176 = vadd.f32 0.0, %v3175
        %v3177 = vpop.f32.mrb[0].mxu0
        %3178 = vdwg.mxu0
        %v3179 = vsel %vm662, %v3090, 0.0
        %v3180 = vsel %vm662, %v3171, 0.0
        %v3181 = vadd.f32 %v3179, %v3180
        %v3182 = vsel %vm662, %v3095, 0.0
        %v3183 = vsel %vm662, %v3176, 0.0
        %v3184 = vadd.f32 %v3182, %v3183
        %v3185 = vadd.f32 %v3181, %v2460
        %v3186 = vadd.f32 %v3184, %v2461
        %v3187 = vsel %vm662, %v3185, 0.0
        %3188 = vadd.xlane.f32.xlu0 %v3187
        %v3189 = vpop.xlane.xlu0 %3188
        %v3190 = vsel %vm662, %v3186, 0.0
        %3191 = vadd.xlane.f32.xlu0 %v3190
        %v3192 = vpop.xlane.xlu0 %3191
        %v3193 = vmul.f32 %v3189, %v669
        %v3194 = vmul.f32 %v3192, %v669
        %v3195 = vsub.f32 %v3185, %v3193
        %v3196 = vsub.f32 %v3186, %v3194
        %v3197 = vmul.f32 %v3195, %v3195
        %v3198 = vmul.f32 %v3196, %v3196
        %v3199 = vsel %vm662, %v3197, 0.0
        %3200 = vadd.xlane.f32.xlu0 %v3199
        %v3201 = vpop.xlane.xlu0 %3200
        %v3202 = vsel %vm662, %v3198, 0.0
        %3203 = vadd.xlane.f32.xlu0 %v3202
        %v3204 = vpop.xlane.xlu0 %3203
        %v3205 = vmul.f32 %v3201, %v669
        %v3206 = vmul.f32 %v3204, %v669
        %v3207 = vadd.f32 %v3205, 1e-06
        %v3208 = vadd.f32 %v3206, 1e-06
        %v3209 = vrsqrt.pop %v3207
        %v3210 = vrsqrt.pop %v3208
        %v3211 = vmul.f32 %v3195, %v3209
        %v3212 = vmul.f32 %v3196, %v3210
        %v3213 = vlaneseq
        %v3214 = vshrl.u32 %v3213, 7
        %v3215 = vsub.s32 2, %v3214
        %v3216 = vrot.slane %v2489, %v3215
        %v3217 = vmul.f32 %v3211, %v3216
        %v3218 = vmul.f32 %v3212, %v3216
        %v3219 = vlaneseq
        %v3220 = vshrl.u32 %v3219, 7
        %v3221 = vsub.s32 3, %v3220
        %v3222 = vrot.slane %v2489, %v3221
        %v3223 = vadd.f32 %v3217, %v3222
        %v3224 = vadd.f32 %v3218, %v3222
        %v3226 = vlaneseq
        %v3227 = vshrl.u32 %v3226, 7
        %v3228 = vsub.s32 0, %v3227
        %v3229 = vrot.slane %v2478, %v3228
        %v3232 = vsel %vm662, %v3223, 0
        %v3235 = vsel %vm662, %v3224, 0
        %3237 = vmatprep.subr.mxu0 0.0
        %3238 = vmatpush1.msra.mxu0 %v2473
        %3239 = vmatprep.subr.mxu0 0.0
        %3240 = vmatpush1.msra.mxu0 %v2474
        %3241 = vmatprep.subr.mxu0 0.0
        %3242 = vmatpush1.msra.mxu0 %v2475
        %3243 = vmatprep.subr.mxu0 0.0
        %3244 = vmatpush1.msra.mxu0 %v2476
        %3245 = vmatprep.subr.mxu0 0.0
        %3246 = vmatpush1.msra.mxu0 0.0
        %3247 = vmatprep.subr.mxu0 0.0
        %3248 = vmatpush1.msra.mxu0 0.0
        %3249 = vmatprep.subr.mxu0 0.0
        %3250 = vmatpush1.msra.mxu0 0.0
        %3251 = vmatprep.subr.mxu0 0.0
        %3252 = vmatpush1.msra.mxu0 0.0
        %3253 = vmatprep.subr.mxu0 0.0
        %3254 = vmatpush1.msra.mxu0 0.0
        %3255 = vmatprep.subr.mxu0 0.0
        %3256 = vmatpush1.msra.mxu0 0.0
        %3257 = vmatprep.subr.mxu0 0.0
        %3258 = vmatpush1.msra.mxu0 0.0
        %3259 = vmatprep.subr.mxu0 0.0
        %3260 = vmatpush1.msra.mxu0 0.0
        %3261 = vmatprep.subr.mxu0 0.0
        %3262 = vmatpush1.msra.mxu0 0.0
        %3263 = vmatprep.subr.mxu0 0.0
        %3264 = vmatpush1.msra.mxu0 0.0
        %3265 = vmatprep.subr.mxu0 0.0
        %3266 = vmatpush1.msra.mxu0 0.0
        %3267 = vmatprep.subr.mxu0 0.0
        %3268 = vmatpush1.msra.mxu0 0.0
        %3269 = vmatprep.subr.mxu0 0.0
        %3270 = vmatpush1.msra.mxu0 0.0
        %3271 = vmatprep.subr.mxu0 0.0
        %3272 = vmatpush1.msra.mxu0 0.0
        %3273 = vmatprep.subr.mxu0 0.0
        %3274 = vmatpush1.msra.mxu0 0.0
        %3275 = vmatprep.subr.mxu0 0.0
        %3276 = vmatpush1.msra.mxu0 0.0
        %3277 = vmatprep.subr.mxu0 0.0
        %3278 = vmatpush1.msra.mxu0 0.0
        %3279 = vmatprep.subr.mxu0 0.0
        %3280 = vmatpush1.msra.mxu0 0.0
        %3281 = vmatprep.subr.mxu0 0.0
        %3282 = vmatpush1.msra.mxu0 0.0
        %3283 = vmatprep.subr.mxu0 0.0
        %3284 = vmatpush1.msra.mxu0 0.0
        %3285 = vmatprep.subr.mxu0 0.0
        %3286 = vmatpush1.msra.mxu0 0.0
        %3287 = vmatprep.subr.mxu0 0.0
        %3288 = vmatpush1.msra.mxu0 0.0
        %3289 = vmatprep.subr.mxu0 0.0
        %3290 = vmatpush1.msra.mxu0 0.0
        %3291 = vmatprep.subr.mxu0 0.0
        %3292 = vmatpush1.msra.mxu0 0.0
        %3293 = vmatprep.subr.mxu0 0.0
        %3294 = vmatpush1.msra.mxu0 0.0
        %3295 = vmatprep.subr.mxu0 0.0
        %3296 = vmatpush1.msra.mxu0 0.0
        %3297 = vmatprep.subr.mxu0 0.0
        %3298 = vmatpush1.msra.mxu0 0.0
        %3299 = vmatprep.subr.mxu0 0.0
        %3300 = vmatpush1.msra.mxu0 0.0
        %3301 = vmatprep.mubr.f32.mxu0 0.0
        %3302 = vmatmul.mubr.f32.gmra.mrb[0].mxu0 %v3232
        %v3303 = vpop.f32.mrb[0].mxu0
        %v3304 = vadd.f32 %v3229, %v3303
        %v3305 = vpop.f32.mrb[0].mxu0
        %3306 = vmatprep.mubr.f32.mxu0 0.0
        %3307 = vmatmul.mubr.f32.gmra.mrb[0].mxu0 %v3235
        %v3308 = vpop.f32.mrb[0].mxu0
        %v3309 = vadd.f32 %v3229, %v3308
        %v3310 = vpop.f32.mrb[0].mxu0
        %3311 = vdwg.mxu0
        %v3312 = vmax.f32 %v3304, 0.0
        %v3313 = vmax.f32 %v3309, 0.0
        %v3314 = vlaneseq
        %v3315 = vshrl.u32 %v3314, 7
        %v3316 = vsub.s32 4, %v3315
        %v3317 = vrot.slane %v2489, %v3316
        %v3319 = vsel %vm1493, %v3312, 0
        %v3322 = vsel %vm1493, %v3313, 0
        %3324 = vmatprep.subr.mxu0 0.0
        %3325 = vmatpush1.msra.mxu0 %v2480
        %3326 = vmatprep.subr.mxu0 0.0
        %3327 = vmatpush1.msra.mxu0 %v2481
        %3328 = vmatprep.subr.mxu0 0.0
        %3329 = vmatpush1.msra.mxu0 %v2482
        %3330 = vmatprep.subr.mxu0 0.0
        %3331 = vmatpush1.msra.mxu0 %v2483
        %3332 = vmatprep.subr.mxu0 0.0
        %3333 = vmatpush1.msra.mxu0 %v2484
        %3334 = vmatprep.subr.mxu0 0.0
        %3335 = vmatpush1.msra.mxu0 %v2485
        %3336 = vmatprep.subr.mxu0 0.0
        %3337 = vmatpush1.msra.mxu0 %v2486
        %3338 = vmatprep.subr.mxu0 0.0
        %3339 = vmatpush1.msra.mxu0 %v2487
        %3340 = vmatprep.subr.mxu0 0.0
        %3341 = vmatpush1.msra.mxu0 0.0
        %3342 = vmatprep.subr.mxu0 0.0
        %3343 = vmatpush1.msra.mxu0 0.0
        %3344 = vmatprep.subr.mxu0 0.0
        %3345 = vmatpush1.msra.mxu0 0.0
        %3346 = vmatprep.subr.mxu0 0.0
        %3347 = vmatpush1.msra.mxu0 0.0
        %3348 = vmatprep.subr.mxu0 0.0
        %3349 = vmatpush1.msra.mxu0 0.0
        %3350 = vmatprep.subr.mxu0 0.0
        %3351 = vmatpush1.msra.mxu0 0.0
        %3352 = vmatprep.subr.mxu0 0.0
        %3353 = vmatpush1.msra.mxu0 0.0
        %3354 = vmatprep.subr.mxu0 0.0
        %3355 = vmatpush1.msra.mxu0 0.0
        %3356 = vmatprep.subr.mxu0 0.0
        %3357 = vmatpush1.msra.mxu0 0.0
        %3358 = vmatprep.subr.mxu0 0.0
        %3359 = vmatpush1.msra.mxu0 0.0
        %3360 = vmatprep.subr.mxu0 0.0
        %3361 = vmatpush1.msra.mxu0 0.0
        %3362 = vmatprep.subr.mxu0 0.0
        %3363 = vmatpush1.msra.mxu0 0.0
        %3364 = vmatprep.subr.mxu0 0.0
        %3365 = vmatpush1.msra.mxu0 0.0
        %3366 = vmatprep.subr.mxu0 0.0
        %3367 = vmatpush1.msra.mxu0 0.0
        %3368 = vmatprep.subr.mxu0 0.0
        %3369 = vmatpush1.msra.mxu0 0.0
        %3370 = vmatprep.subr.mxu0 0.0
        %3371 = vmatpush1.msra.mxu0 0.0
        %3372 = vmatprep.subr.mxu0 0.0
        %3373 = vmatpush1.msra.mxu0 0.0
        %3374 = vmatprep.subr.mxu0 0.0
        %3375 = vmatpush1.msra.mxu0 0.0
        %3376 = vmatprep.subr.mxu0 0.0
        %3377 = vmatpush1.msra.mxu0 0.0
        %3378 = vmatprep.subr.mxu0 0.0
        %3379 = vmatpush1.msra.mxu0 0.0
        %3380 = vmatprep.subr.mxu0 0.0
        %3381 = vmatpush1.msra.mxu0 0.0
        %3382 = vmatprep.subr.mxu0 0.0
        %3383 = vmatpush1.msra.mxu0 0.0
        %3384 = vmatprep.subr.mxu0 0.0
        %3385 = vmatpush1.msra.mxu0 0.0
        %3386 = vmatprep.subr.mxu0 0.0
        %3387 = vmatpush1.msra.mxu0 0.0
        %3388 = vmatprep.mubr.f32.mxu0 0.0
        %3389 = vmatmul.mubr.f32.gmra.mrb[0].mxu0 %v3319
        %v3390 = vpop.f32.mrb[0].mxu0
        %v3391 = vadd.f32 %v3317, %v3390
        %v3392 = vpop.f32.mrb[0].mxu0
        %3393 = vmatprep.mubr.f32.mxu0 0.0
        %3394 = vmatmul.mubr.f32.gmra.mrb[0].mxu0 %v3322
        %v3395 = vpop.f32.mrb[0].mxu0
        %v3396 = vadd.f32 %v3317, %v3395
        %v3397 = vpop.f32.mrb[0].mxu0
        %3398 = vdwg.mxu0
        %v3399 = vadd.f32 %v3391, %v3185
        %v3400 = vadd.f32 %v3396, %v3186
        %v3401 = vsel %vm662, %v3399, 0.0
        %3402 = vadd.xlane.f32.xlu0 %v3401
        %v3403 = vpop.xlane.xlu0 %3402
        %v3404 = vsel %vm662, %v3400, 0.0
        %3405 = vadd.xlane.f32.xlu0 %v3404
        %v3406 = vpop.xlane.xlu0 %3405
        %v3407 = vmul.f32 %v3403, %v669
        %v3408 = vmul.f32 %v3406, %v669
        %v3409 = vsub.f32 %v3399, %v3407
        %v3410 = vsub.f32 %v3400, %v3408
        %v3411 = vmul.f32 %v3409, %v3409
        %v3412 = vmul.f32 %v3410, %v3410
        %v3413 = vsel %vm662, %v3411, 0.0
        %3414 = vadd.xlane.f32.xlu0 %v3413
        %v3415 = vpop.xlane.xlu0 %3414
        %v3416 = vsel %vm662, %v3412, 0.0
        %3417 = vadd.xlane.f32.xlu0 %v3416
        %v3418 = vpop.xlane.xlu0 %3417
        %v3419 = vmul.f32 %v3415, %v669
        %v3420 = vmul.f32 %v3418, %v669
        %v3421 = vadd.f32 %v3419, 1e-05
        %v3422 = vadd.f32 %v3420, 1e-05
        %v3423 = vrsqrt.pop %v3421
        %v3424 = vrsqrt.pop %v3422
        %v3425 = vmul.f32 %v3409, %v3423
        %v3426 = vmul.f32 %v3410, %v3424
        %v3427 = vmul.f32 %v3425, %v2519
        %v3428 = vmul.f32 %v3426, %v2519
        %v3429 = vadd.f32 %v3427, %v2525
        %v3430 = vadd.f32 %v3428, %v2525
        %v3432 = vsel %vm662, %v3429, 0
        %v3435 = vsel %vm662, %v3430, 0
        %3437 = vmatprep.subr.mxu0 0.0
        %3438 = vmatpush1.msra.mxu0 %v2463
        %3439 = vmatprep.subr.mxu0 0.0
        %3440 = vmatpush1.msra.mxu0 %v2464
        %3441 = vmatprep.subr.mxu0 0.0
        %3442 = vmatpush1.msra.mxu0 %v2465
        %3443 = vmatprep.subr.mxu0 0.0
        %3444 = vmatpush1.msra.mxu0 %v2466
        %3445 = vmatprep.subr.mxu0 0.0
        %3446 = vmatpush1.msra.mxu0 0.0
        %3447 = vmatprep.subr.mxu0 0.0
        %3448 = vmatpush1.msra.mxu0 0.0
        %3449 = vmatprep.subr.mxu0 0.0
        %3450 = vmatpush1.msra.mxu0 0.0
        %3451 = vmatprep.subr.mxu0 0.0
        %3452 = vmatpush1.msra.mxu0 0.0
        %3453 = vmatprep.subr.mxu0 0.0
        %3454 = vmatpush1.msra.mxu0 0.0
        %3455 = vmatprep.subr.mxu0 0.0
        %3456 = vmatpush1.msra.mxu0 0.0
        %3457 = vmatprep.subr.mxu0 0.0
        %3458 = vmatpush1.msra.mxu0 0.0
        %3459 = vmatprep.subr.mxu0 0.0
        %3460 = vmatpush1.msra.mxu0 0.0
        %3461 = vmatprep.subr.mxu0 0.0
        %3462 = vmatpush1.msra.mxu0 0.0
        %3463 = vmatprep.subr.mxu0 0.0
        %3464 = vmatpush1.msra.mxu0 0.0
        %3465 = vmatprep.subr.mxu0 0.0
        %3466 = vmatpush1.msra.mxu0 0.0
        %3467 = vmatprep.subr.mxu0 0.0
        %3468 = vmatpush1.msra.mxu0 0.0
        %3469 = vmatprep.subr.mxu0 0.0
        %3470 = vmatpush1.msra.mxu0 0.0
        %3471 = vmatprep.subr.mxu0 0.0
        %3472 = vmatpush1.msra.mxu0 0.0
        %3473 = vmatprep.subr.mxu0 0.0
        %3474 = vmatpush1.msra.mxu0 0.0
        %3475 = vmatprep.subr.mxu0 0.0
        %3476 = vmatpush1.msra.mxu0 0.0
        %3477 = vmatprep.subr.mxu0 0.0
        %3478 = vmatpush1.msra.mxu0 0.0
        %3479 = vmatprep.subr.mxu0 0.0
        %3480 = vmatpush1.msra.mxu0 0.0
        %3481 = vmatprep.subr.mxu0 0.0
        %3482 = vmatpush1.msra.mxu0 0.0
        %3483 = vmatprep.subr.mxu0 0.0
        %3484 = vmatpush1.msra.mxu0 0.0
        %3485 = vmatprep.subr.mxu0 0.0
        %3486 = vmatpush1.msra.mxu0 0.0
        %3487 = vmatprep.subr.mxu0 0.0
        %3488 = vmatpush1.msra.mxu0 0.0
        %3489 = vmatprep.subr.mxu0 0.0
        %3490 = vmatpush1.msra.mxu0 0.0
        %3491 = vmatprep.subr.mxu0 0.0
        %3492 = vmatpush1.msra.mxu0 0.0
        %3493 = vmatprep.subr.mxu0 0.0
        %3494 = vmatpush1.msra.mxu0 0.0
        %3495 = vmatprep.subr.mxu0 0.0
        %3496 = vmatpush1.msra.mxu0 0.0
        %3497 = vmatprep.subr.mxu0 0.0
        %3498 = vmatpush1.msra.mxu0 0.0
        %3499 = vmatprep.subr.mxu0 0.0
        %3500 = vmatpush1.msra.mxu0 0.0
        %3501 = vmatprep.mubr.f32.mxu0 0.0
        %3502 = vmatmul.mubr.f32.gmra.mrb[0].mxu0 %v3432
        %v3503 = vpop.f32.mrb[0].mxu0
        %v3504 = vadd.f32 0.0, %v3503
        %v3505 = vpop.f32.mrb[0].mxu0
        %3506 = vmatprep.mubr.f32.mxu0 0.0
        %3507 = vmatmul.mubr.f32.gmra.mrb[0].mxu0 %v3435
        %v3508 = vpop.f32.mrb[0].mxu0
        %v3509 = vadd.f32 0.0, %v3508
        %v3510 = vpop.f32.mrb[0].mxu0
        %3511 = vdwg.mxu0
        %3514 = vrot.lane.b32.xlu0 %v3504, 112
        %v3515 = vpop.permute.xlu0 %3514
        %3516 = vrot.lane.b32.xlu0 %v3509, 112
        %v3517 = vpop.permute.xlu0 %3516
        %v3520 = vmul.f32 %v3504, 0.25
        %v3521 = vmul.f32 %v3509, 0.25
        %v3522 = vmul.f32 %v3515, 0.25
        %v3523 = vmul.f32 %v3517, 0.25
        %3524 = vrot.lane.b32.xlu0 %v3504, 96
        %v3525 = vpop.permute.xlu0 %3524
        %3526 = vrot.lane.b32.xlu0 %v3509, 96
        %v3527 = vpop.permute.xlu0 %3526
        %v3529 = vsel %vm799, %v3520, 0
        %v3532 = vsel %vm799, %v3521, 0
        %v3534 = vsel %vm799, %v3525, 0
        %v3536 = vsel %vm799, %v3527, 0
        %3538 = vmatprep.subr.mxu0 0.0
        %3539 = vmatpush1.xpose.msra.mxu0 %v3534
        %3540 = vmatprep.subr.mxu0 0.0
        %3541 = vmatpush1.xpose.msra.mxu0 %v3536
        %3542 = vmatprep.subr.mxu0 0.0
        %3543 = vmatpush1.xpose.msra.mxu0 0.0
        %3544 = vmatprep.subr.mxu0 0.0
        %3545 = vmatpush1.xpose.msra.mxu0 0.0
        %3546 = vmatprep.subr.mxu0 0.0
        %3547 = vmatpush1.xpose.msra.mxu0 0.0
        %3548 = vmatprep.subr.mxu0 0.0
        %3549 = vmatpush1.xpose.msra.mxu0 0.0
        %3550 = vmatprep.subr.mxu0 0.0
        %3551 = vmatpush1.xpose.msra.mxu0 0.0
        %3552 = vmatprep.subr.mxu0 0.0
        %3553 = vmatpush1.xpose.msra.mxu0 0.0
        %3554 = vmatprep.subr.mxu0 0.0
        %3555 = vmatpush1.xpose.msra.mxu0 0.0
        %3556 = vmatprep.subr.mxu0 0.0
        %3557 = vmatpush1.xpose.msra.mxu0 0.0
        %3558 = vmatprep.subr.mxu0 0.0
        %3559 = vmatpush1.xpose.msra.mxu0 0.0
        %3560 = vmatprep.subr.mxu0 0.0
        %3561 = vmatpush1.xpose.msra.mxu0 0.0
        %3562 = vmatprep.subr.mxu0 0.0
        %3563 = vmatpush1.xpose.msra.mxu0 0.0
        %3564 = vmatprep.subr.mxu0 0.0
        %3565 = vmatpush1.xpose.msra.mxu0 0.0
        %3566 = vmatprep.subr.mxu0 0.0
        %3567 = vmatpush1.xpose.msra.mxu0 0.0
        %3568 = vmatprep.subr.mxu0 0.0
        %3569 = vmatpush1.xpose.msra.mxu0 0.0
        %3570 = vmatprep.subr.mxu0 0.0
        %3571 = vmatpush1.xpose.msra.mxu0 0.0
        %3572 = vmatprep.subr.mxu0 0.0
        %3573 = vmatpush1.xpose.msra.mxu0 0.0
        %3574 = vmatprep.subr.mxu0 0.0
        %3575 = vmatpush1.xpose.msra.mxu0 0.0
        %3576 = vmatprep.subr.mxu0 0.0
        %3577 = vmatpush1.xpose.msra.mxu0 0.0
        %3578 = vmatprep.subr.mxu0 0.0
        %3579 = vmatpush1.xpose.msra.mxu0 0.0
        %3580 = vmatprep.subr.mxu0 0.0
        %3581 = vmatpush1.xpose.msra.mxu0 0.0
        %3582 = vmatprep.subr.mxu0 0.0
        %3583 = vmatpush1.xpose.msra.mxu0 0.0
        %3584 = vmatprep.subr.mxu0 0.0
        %3585 = vmatpush1.xpose.msra.mxu0 0.0
        %3586 = vmatprep.subr.mxu0 0.0
        %3587 = vmatpush1.xpose.msra.mxu0 0.0
        %3588 = vmatprep.subr.mxu0 0.0
        %3589 = vmatpush1.xpose.msra.mxu0 0.0
        %3590 = vmatprep.subr.mxu0 0.0
        %3591 = vmatpush1.xpose.msra.mxu0 0.0
        %3592 = vmatprep.subr.mxu0 0.0
        %3593 = vmatpush1.xpose.msra.mxu0 0.0
        %3594 = vmatprep.subr.mxu0 0.0
        %3595 = vmatpush1.xpose.msra.mxu0 0.0
        %3596 = vmatprep.subr.mxu0 0.0
        %3597 = vmatpush1.xpose.msra.mxu0 0.0
        %3598 = vmatprep.subr.mxu0 0.0
        %3599 = vmatpush1.xpose.msra.mxu0 0.0
        %3600 = vmatprep.subr.mxu0 0.0
        %3601 = vmatpush1.xpose.msra.mxu0 0.0
        %3602 = vmatprep.mubr.f32.mxu0 0.0
        %3603 = vmatmul.mubr.f32.gmra.mrb[0].mxu0 %v3529
        %v3604 = vpop.f32.mrb[0].mxu0
        %v3605 = vadd.f32 %v638, %v3604
        %v3606 = vpop.f32.mrb[0].mxu0
        %3607 = vmatprep.mubr.f32.mxu0 0.0
        %3608 = vmatmul.mubr.f32.gmra.mrb[0].mxu0 %v3532
        %v3609 = vpop.f32.mrb[0].mxu0
        %v3610 = vadd.f32 %v639, %v3609
        %v3611 = vpop.f32.mrb[0].mxu0
        %3612 = vdwg.mxu0
        %3613 = vrot.lane.b32.xlu0 %v3515, 96
        %v3614 = vpop.permute.xlu0 %3613
        %3615 = vrot.lane.b32.xlu0 %v3517, 96
        %v3616 = vpop.permute.xlu0 %3615
        %v3618 = vsel %vm799, %v3522, 0
        %v3621 = vsel %vm799, %v3523, 0
        %v3623 = vsel %vm799, %v3614, 0
        %v3625 = vsel %vm799, %v3616, 0
        %3627 = vmatprep.subr.mxu0 0.0
        %3628 = vmatpush1.xpose.msra.mxu0 %v3623
        %3629 = vmatprep.subr.mxu0 0.0
        %3630 = vmatpush1.xpose.msra.mxu0 %v3625
        %3631 = vmatprep.subr.mxu0 0.0
        %3632 = vmatpush1.xpose.msra.mxu0 0.0
        %3633 = vmatprep.subr.mxu0 0.0
        %3634 = vmatpush1.xpose.msra.mxu0 0.0
        %3635 = vmatprep.subr.mxu0 0.0
        %3636 = vmatpush1.xpose.msra.mxu0 0.0
        %3637 = vmatprep.subr.mxu0 0.0
        %3638 = vmatpush1.xpose.msra.mxu0 0.0
        %3639 = vmatprep.subr.mxu0 0.0
        %3640 = vmatpush1.xpose.msra.mxu0 0.0
        %3641 = vmatprep.subr.mxu0 0.0
        %3642 = vmatpush1.xpose.msra.mxu0 0.0
        %3643 = vmatprep.subr.mxu0 0.0
        %3644 = vmatpush1.xpose.msra.mxu0 0.0
        %3645 = vmatprep.subr.mxu0 0.0
        %3646 = vmatpush1.xpose.msra.mxu0 0.0
        %3647 = vmatprep.subr.mxu0 0.0
        %3648 = vmatpush1.xpose.msra.mxu0 0.0
        %3649 = vmatprep.subr.mxu0 0.0
        %3650 = vmatpush1.xpose.msra.mxu0 0.0
        %3651 = vmatprep.subr.mxu0 0.0
        %3652 = vmatpush1.xpose.msra.mxu0 0.0
        %3653 = vmatprep.subr.mxu0 0.0
        %3654 = vmatpush1.xpose.msra.mxu0 0.0
        %3655 = vmatprep.subr.mxu0 0.0
        %3656 = vmatpush1.xpose.msra.mxu0 0.0
        %3657 = vmatprep.subr.mxu0 0.0
        %3658 = vmatpush1.xpose.msra.mxu0 0.0
        %3659 = vmatprep.subr.mxu0 0.0
        %3660 = vmatpush1.xpose.msra.mxu0 0.0
        %3661 = vmatprep.subr.mxu0 0.0
        %3662 = vmatpush1.xpose.msra.mxu0 0.0
        %3663 = vmatprep.subr.mxu0 0.0
        %3664 = vmatpush1.xpose.msra.mxu0 0.0
        %3665 = vmatprep.subr.mxu0 0.0
        %3666 = vmatpush1.xpose.msra.mxu0 0.0
        %3667 = vmatprep.subr.mxu0 0.0
        %3668 = vmatpush1.xpose.msra.mxu0 0.0
        %3669 = vmatprep.subr.mxu0 0.0
        %3670 = vmatpush1.xpose.msra.mxu0 0.0
        %3671 = vmatprep.subr.mxu0 0.0
        %3672 = vmatpush1.xpose.msra.mxu0 0.0
        %3673 = vmatprep.subr.mxu0 0.0
        %3674 = vmatpush1.xpose.msra.mxu0 0.0
        %3675 = vmatprep.subr.mxu0 0.0
        %3676 = vmatpush1.xpose.msra.mxu0 0.0
        %3677 = vmatprep.subr.mxu0 0.0
        %3678 = vmatpush1.xpose.msra.mxu0 0.0
        %3679 = vmatprep.subr.mxu0 0.0
        %3680 = vmatpush1.xpose.msra.mxu0 0.0
        %3681 = vmatprep.subr.mxu0 0.0
        %3682 = vmatpush1.xpose.msra.mxu0 0.0
        %3683 = vmatprep.subr.mxu0 0.0
        %3684 = vmatpush1.xpose.msra.mxu0 0.0
        %3685 = vmatprep.subr.mxu0 0.0
        %3686 = vmatpush1.xpose.msra.mxu0 0.0
        %3687 = vmatprep.subr.mxu0 0.0
        %3688 = vmatpush1.xpose.msra.mxu0 0.0
        %3689 = vmatprep.subr.mxu0 0.0
        %3690 = vmatpush1.xpose.msra.mxu0 0.0
        %3691 = vmatprep.mubr.f32.mxu0 0.0
        %3692 = vmatmul.mubr.f32.gmra.mrb[0].mxu0 %v3618
        %v3693 = vpop.f32.mrb[0].mxu0
        %v3694 = vadd.f32 %v638, %v3693
        %v3695 = vpop.f32.mrb[0].mxu0
        %3696 = vmatprep.mubr.f32.mxu0 0.0
        %3697 = vmatmul.mubr.f32.gmra.mrb[0].mxu0 %v3621
        %v3698 = vpop.f32.mrb[0].mxu0
        %v3699 = vadd.f32 %v639, %v3698
        %v3700 = vpop.f32.mrb[0].mxu0
        %3701 = vdwg.mxu0
        %v3702 = vsel %vm799, %v3605, -inf
        %3703 = vmax.xlane.f32.xlu0 %v3702
        %v3704 = vpop.xlane.xlu0 %3703
        %v3705 = vsel %vm799, %v3610, -inf
        %3706 = vmax.xlane.f32.xlu0 %v3705
        %v3707 = vpop.xlane.xlu0 %3706
        %v3708 = vsel %vm799, %v3694, -inf
        %3709 = vmax.xlane.f32.xlu0 %v3708
        %v3710 = vpop.xlane.xlu0 %3709
        %v3711 = vsel %vm799, %v3699, -inf
        %3712 = vmax.xlane.f32.xlu0 %v3711
        %v3713 = vpop.xlane.xlu0 %3712
        %v3714 = vsub.f32 %v3605, %v3704
        %v3715 = vsub.f32 %v3610, %v3707
        %v3716 = vsub.f32 %v3694, %v3710
        %v3717 = vsub.f32 %v3699, %v3713
        %v3718 = vmul.f32 %v3714, 1.442695
        %v3719 = vpow.pop %v3718
        %v3720 = vmul.f32 %v3715, 1.442695
        %v3721 = vpow.pop %v3720
        %v3722 = vmul.f32 %v3716, 1.442695
        %v3723 = vpow.pop %v3722
        %v3724 = vmul.f32 %v3717, 1.442695
        %v3725 = vpow.pop %v3724
        %v3726 = vsel %vm799, %v3719, 0.0
        %3727 = vadd.xlane.f32.xlu0 %v3726
        %v3728 = vpop.xlane.xlu0 %3727
        %v3729 = vsel %vm799, %v3721, 0.0
        %3730 = vadd.xlane.f32.xlu0 %v3729
        %v3731 = vpop.xlane.xlu0 %3730
        %v3732 = vsel %vm799, %v3723, 0.0
        %3733 = vadd.xlane.f32.xlu0 %v3732
        %v3734 = vpop.xlane.xlu0 %3733
        %v3735 = vsel %vm799, %v3725, 0.0
        %3736 = vadd.xlane.f32.xlu0 %v3735
        %v3737 = vpop.xlane.xlu0 %3736
        %v3738 = vrcp.pop %v3728
        %v3739 = vrcp.pop %v3731
        %v3740 = vrcp.pop %v3734
        %v3741 = vrcp.pop %v3737
        %v3742 = vmul.f32 %v3719, %v3738
        %v3743 = vmul.f32 %v3721, %v3739
        %v3744 = vmul.f32 %v3723, %v3740
        %v3745 = vmul.f32 %v3725, %v3741
        %3746 = vst.msk [vmem:[%s432] sm:$0xff] %vm799, %v3742
        %3747 = vst.msk [vmem:[%s432 + $0x8] sm:$0xff] %vm799, %v3743
        %3748 = vst.msk [vmem:[%s432 + $0x10] sm:$0xff] %vm799, %v3744
        %3749 = vst.msk [vmem:[%s432 + $0x18] sm:$0xff] %vm799, %v3745
        %3750 = vrot.lane.b32.xlu0 %v3504, 64
        %v3751 = vpop.permute.xlu0 %3750
        %3752 = vrot.lane.b32.xlu0 %v3509, 64
        %v3753 = vpop.permute.xlu0 %3752
        %v3757 = vsel %vm799, %v3742, 0
        %v3760 = vsel %vm799, %v3743, 0
        %3762 = vmatprep.subr.mxu0 0.0
        %3763 = vmatpush1.msra.mxu0 %v3751
        %3764 = vmatprep.subr.mxu0 0.0
        %3765 = vmatpush1.msra.mxu0 %v3753
        %3766 = vmatprep.subr.mxu0 0.0
        %3767 = vmatpush1.msra.mxu0 0.0
        %3768 = vmatprep.subr.mxu0 0.0
        %3769 = vmatpush1.msra.mxu0 0.0
        %3770 = vmatprep.subr.mxu0 0.0
        %3771 = vmatpush1.msra.mxu0 0.0
        %3772 = vmatprep.subr.mxu0 0.0
        %3773 = vmatpush1.msra.mxu0 0.0
        %3774 = vmatprep.subr.mxu0 0.0
        %3775 = vmatpush1.msra.mxu0 0.0
        %3776 = vmatprep.subr.mxu0 0.0
        %3777 = vmatpush1.msra.mxu0 0.0
        %3778 = vmatprep.subr.mxu0 0.0
        %3779 = vmatpush1.msra.mxu0 0.0
        %3780 = vmatprep.subr.mxu0 0.0
        %3781 = vmatpush1.msra.mxu0 0.0
        %3782 = vmatprep.subr.mxu0 0.0
        %3783 = vmatpush1.msra.mxu0 0.0
        %3784 = vmatprep.subr.mxu0 0.0
        %3785 = vmatpush1.msra.mxu0 0.0
        %3786 = vmatprep.subr.mxu0 0.0
        %3787 = vmatpush1.msra.mxu0 0.0
        %3788 = vmatprep.subr.mxu0 0.0
        %3789 = vmatpush1.msra.mxu0 0.0
        %3790 = vmatprep.subr.mxu0 0.0
        %3791 = vmatpush1.msra.mxu0 0.0
        %3792 = vmatprep.subr.mxu0 0.0
        %3793 = vmatpush1.msra.mxu0 0.0
        %3794 = vmatprep.subr.mxu0 0.0
        %3795 = vmatpush1.msra.mxu0 0.0
        %3796 = vmatprep.subr.mxu0 0.0
        %3797 = vmatpush1.msra.mxu0 0.0
        %3798 = vmatprep.subr.mxu0 0.0
        %3799 = vmatpush1.msra.mxu0 0.0
        %3800 = vmatprep.subr.mxu0 0.0
        %3801 = vmatpush1.msra.mxu0 0.0
        %3802 = vmatprep.subr.mxu0 0.0
        %3803 = vmatpush1.msra.mxu0 0.0
        %3804 = vmatprep.subr.mxu0 0.0
        %3805 = vmatpush1.msra.mxu0 0.0
        %3806 = vmatprep.subr.mxu0 0.0
        %3807 = vmatpush1.msra.mxu0 0.0
        %3808 = vmatprep.subr.mxu0 0.0
        %3809 = vmatpush1.msra.mxu0 0.0
        %3810 = vmatprep.subr.mxu0 0.0
        %3811 = vmatpush1.msra.mxu0 0.0
        %3812 = vmatprep.subr.mxu0 0.0
        %3813 = vmatpush1.msra.mxu0 0.0
        %3814 = vmatprep.subr.mxu0 0.0
        %3815 = vmatpush1.msra.mxu0 0.0
        %3816 = vmatprep.subr.mxu0 0.0
        %3817 = vmatpush1.msra.mxu0 0.0
        %3818 = vmatprep.subr.mxu0 0.0
        %3819 = vmatpush1.msra.mxu0 0.0
        %3820 = vmatprep.subr.mxu0 0.0
        %3821 = vmatpush1.msra.mxu0 0.0
        %3822 = vmatprep.subr.mxu0 0.0
        %3823 = vmatpush1.msra.mxu0 0.0
        %3824 = vmatprep.subr.mxu0 0.0
        %3825 = vmatpush1.msra.mxu0 0.0
        %3826 = vmatprep.mubr.f32.mxu0 0.0
        %3827 = vmatmul.mubr.f32.gmra.mrb[0].mxu0 %v3757
        %v3828 = vpop.f32.mrb[0].mxu0
        %v3829 = vadd.f32 0.0, %v3828
        %v3830 = vpop.f32.mrb[0].mxu0
        %3831 = vmatprep.mubr.f32.mxu0 0.0
        %3832 = vmatmul.mubr.f32.gmra.mrb[0].mxu0 %v3760
        %v3833 = vpop.f32.mrb[0].mxu0
        %v3834 = vadd.f32 0.0, %v3833
        %v3835 = vpop.f32.mrb[0].mxu0
        %3836 = vdwg.mxu0
        %3837 = vrot.lane.b32.xlu0 %v3515, 64
        %v3838 = vpop.permute.xlu0 %3837
        %3839 = vrot.lane.b32.xlu0 %v3517, 64
        %v3840 = vpop.permute.xlu0 %3839
        %v3844 = vsel %vm799, %v3744, 0
        %v3847 = vsel %vm799, %v3745, 0
        %3849 = vmatprep.subr.mxu0 0.0
        %3850 = vmatpush1.msra.mxu0 %v3838
        %3851 = vmatprep.subr.mxu0 0.0
        %3852 = vmatpush1.msra.mxu0 %v3840
        %3853 = vmatprep.subr.mxu0 0.0
        %3854 = vmatpush1.msra.mxu0 0.0
        %3855 = vmatprep.subr.mxu0 0.0
        %3856 = vmatpush1.msra.mxu0 0.0
        %3857 = vmatprep.subr.mxu0 0.0
        %3858 = vmatpush1.msra.mxu0 0.0
        %3859 = vmatprep.subr.mxu0 0.0
        %3860 = vmatpush1.msra.mxu0 0.0
        %3861 = vmatprep.subr.mxu0 0.0
        %3862 = vmatpush1.msra.mxu0 0.0
        %3863 = vmatprep.subr.mxu0 0.0
        %3864 = vmatpush1.msra.mxu0 0.0
        %3865 = vmatprep.subr.mxu0 0.0
        %3866 = vmatpush1.msra.mxu0 0.0
        %3867 = vmatprep.subr.mxu0 0.0
        %3868 = vmatpush1.msra.mxu0 0.0
        %3869 = vmatprep.subr.mxu0 0.0
        %3870 = vmatpush1.msra.mxu0 0.0
        %3871 = vmatprep.subr.mxu0 0.0
        %3872 = vmatpush1.msra.mxu0 0.0
        %3873 = vmatprep.subr.mxu0 0.0
        %3874 = vmatpush1.msra.mxu0 0.0
        %3875 = vmatprep.subr.mxu0 0.0
        %3876 = vmatpush1.msra.mxu0 0.0
        %3877 = vmatprep.subr.mxu0 0.0
        %3878 = vmatpush1.msra.mxu0 0.0
        %3879 = vmatprep.subr.mxu0 0.0
        %3880 = vmatpush1.msra.mxu0 0.0
        %3881 = vmatprep.subr.mxu0 0.0
        %3882 = vmatpush1.msra.mxu0 0.0
        %3883 = vmatprep.subr.mxu0 0.0
        %3884 = vmatpush1.msra.mxu0 0.0
        %3885 = vmatprep.subr.mxu0 0.0
        %3886 = vmatpush1.msra.mxu0 0.0
        %3887 = vmatprep.subr.mxu0 0.0
        %3888 = vmatpush1.msra.mxu0 0.0
        %3889 = vmatprep.subr.mxu0 0.0
        %3890 = vmatpush1.msra.mxu0 0.0
        %3891 = vmatprep.subr.mxu0 0.0
        %3892 = vmatpush1.msra.mxu0 0.0
        %3893 = vmatprep.subr.mxu0 0.0
        %3894 = vmatpush1.msra.mxu0 0.0
        %3895 = vmatprep.subr.mxu0 0.0
        %3896 = vmatpush1.msra.mxu0 0.0
        %3897 = vmatprep.subr.mxu0 0.0
        %3898 = vmatpush1.msra.mxu0 0.0
        %3899 = vmatprep.subr.mxu0 0.0
        %3900 = vmatpush1.msra.mxu0 0.0
        %3901 = vmatprep.subr.mxu0 0.0
        %3902 = vmatpush1.msra.mxu0 0.0
        %3903 = vmatprep.subr.mxu0 0.0
        %3904 = vmatpush1.msra.mxu0 0.0
        %3905 = vmatprep.subr.mxu0 0.0
        %3906 = vmatpush1.msra.mxu0 0.0
        %3907 = vmatprep.subr.mxu0 0.0
        %3908 = vmatpush1.msra.mxu0 0.0
        %3909 = vmatprep.subr.mxu0 0.0
        %3910 = vmatpush1.msra.mxu0 0.0
        %3911 = vmatprep.subr.mxu0 0.0
        %3912 = vmatpush1.msra.mxu0 0.0
        %3913 = vmatprep.mubr.f32.mxu0 0.0
        %3914 = vmatmul.mubr.f32.gmra.mrb[0].mxu0 %v3844
        %v3915 = vpop.f32.mrb[0].mxu0
        %v3916 = vadd.f32 0.0, %v3915
        %v3917 = vpop.f32.mrb[0].mxu0
        %3918 = vmatprep.mubr.f32.mxu0 0.0
        %3919 = vmatmul.mubr.f32.gmra.mrb[0].mxu0 %v3847
        %v3920 = vpop.f32.mrb[0].mxu0
        %v3921 = vadd.f32 0.0, %v3920
        %v3922 = vpop.f32.mrb[0].mxu0
        %3923 = vdwg.mxu0
        %v3925 = vsel %vm799, %v3829, 0
        %v3928 = vsel %vm799, %v3834, 0
        %3930 = vmatprep.subr.mxu0 0.0
        %3931 = vmatpush1.msra.mxu0 %v2468
        %3932 = vmatprep.subr.mxu0 0.0
        %3933 = vmatpush1.msra.mxu0 %v2469
        %3934 = vmatprep.subr.mxu0 0.0
        %3935 = vmatpush1.msra.mxu0 0.0
        %3936 = vmatprep.subr.mxu0 0.0
        %3937 = vmatpush1.msra.mxu0 0.0
        %3938 = vmatprep.subr.mxu0 0.0
        %3939 = vmatpush1.msra.mxu0 0.0
        %3940 = vmatprep.subr.mxu0 0.0
        %3941 = vmatpush1.msra.mxu0 0.0
        %3942 = vmatprep.subr.mxu0 0.0
        %3943 = vmatpush1.msra.mxu0 0.0
        %3944 = vmatprep.subr.mxu0 0.0
        %3945 = vmatpush1.msra.mxu0 0.0
        %3946 = vmatprep.subr.mxu0 0.0
        %3947 = vmatpush1.msra.mxu0 0.0
        %3948 = vmatprep.subr.mxu0 0.0
        %3949 = vmatpush1.msra.mxu0 0.0
        %3950 = vmatprep.subr.mxu0 0.0
        %3951 = vmatpush1.msra.mxu0 0.0
        %3952 = vmatprep.subr.mxu0 0.0
        %3953 = vmatpush1.msra.mxu0 0.0
        %3954 = vmatprep.subr.mxu0 0.0
        %3955 = vmatpush1.msra.mxu0 0.0
        %3956 = vmatprep.subr.mxu0 0.0
        %3957 = vmatpush1.msra.mxu0 0.0
        %3958 = vmatprep.subr.mxu0 0.0
        %3959 = vmatpush1.msra.mxu0 0.0
        %3960 = vmatprep.subr.mxu0 0.0
        %3961 = vmatpush1.msra.mxu0 0.0
        %3962 = vmatprep.subr.mxu0 0.0
        %3963 = vmatpush1.msra.mxu0 0.0
        %3964 = vmatprep.subr.mxu0 0.0
        %3965 = vmatpush1.msra.mxu0 0.0
        %3966 = vmatprep.subr.mxu0 0.0
        %3967 = vmatpush1.msra.mxu0 0.0
        %3968 = vmatprep.subr.mxu0 0.0
        %3969 = vmatpush1.msra.mxu0 0.0
        %3970 = vmatprep.subr.mxu0 0.0
        %3971 = vmatpush1.msra.mxu0 0.0
        %3972 = vmatprep.subr.mxu0 0.0
        %3973 = vmatpush1.msra.mxu0 0.0
        %3974 = vmatprep.subr.mxu0 0.0
        %3975 = vmatpush1.msra.mxu0 0.0
        %3976 = vmatprep.subr.mxu0 0.0
        %3977 = vmatpush1.msra.mxu0 0.0
        %3978 = vmatprep.subr.mxu0 0.0
        %3979 = vmatpush1.msra.mxu0 0.0
        %3980 = vmatprep.subr.mxu0 0.0
        %3981 = vmatpush1.msra.mxu0 0.0
        %3982 = vmatprep.subr.mxu0 0.0
        %3983 = vmatpush1.msra.mxu0 0.0
        %3984 = vmatprep.subr.mxu0 0.0
        %3985 = vmatpush1.msra.mxu0 0.0
        %3986 = vmatprep.subr.mxu0 0.0
        %3987 = vmatpush1.msra.mxu0 0.0
        %3988 = vmatprep.subr.mxu0 0.0
        %3989 = vmatpush1.msra.mxu0 0.0
        %3990 = vmatprep.subr.mxu0 0.0
        %3991 = vmatpush1.msra.mxu0 0.0
        %3992 = vmatprep.subr.mxu0 0.0
        %3993 = vmatpush1.msra.mxu0 0.0
        %3994 = vmatprep.mubr.f32.mxu0 0.0
        %3995 = vmatmul.mubr.f32.gmra.mrb[0].mxu0 %v3925
        %v3996 = vpop.f32.mrb[0].mxu0
        %v3997 = vadd.f32 0.0, %v3996
        %v3998 = vpop.f32.mrb[0].mxu0
        %3999 = vmatprep.mubr.f32.mxu0 0.0
        %4000 = vmatmul.mubr.f32.gmra.mrb[0].mxu0 %v3928
        %v4001 = vpop.f32.mrb[0].mxu0
        %v4002 = vadd.f32 0.0, %v4001
        %v4003 = vpop.f32.mrb[0].mxu0
        %4004 = vdwg.mxu0
        %v4006 = vsel %vm799, %v3916, 0
        %v4009 = vsel %vm799, %v3921, 0
        %4011 = vmatprep.subr.mxu0 0.0
        %4012 = vmatpush1.msra.mxu0 %v2470
        %4013 = vmatprep.subr.mxu0 0.0
        %4014 = vmatpush1.msra.mxu0 %v2471
        %4015 = vmatprep.subr.mxu0 0.0
        %4016 = vmatpush1.msra.mxu0 0.0
        %4017 = vmatprep.subr.mxu0 0.0
        %4018 = vmatpush1.msra.mxu0 0.0
        %4019 = vmatprep.subr.mxu0 0.0
        %4020 = vmatpush1.msra.mxu0 0.0
        %4021 = vmatprep.subr.mxu0 0.0
        %4022 = vmatpush1.msra.mxu0 0.0
        %4023 = vmatprep.subr.mxu0 0.0
        %4024 = vmatpush1.msra.mxu0 0.0
        %4025 = vmatprep.subr.mxu0 0.0
        %4026 = vmatpush1.msra.mxu0 0.0
        %4027 = vmatprep.subr.mxu0 0.0
        %4028 = vmatpush1.msra.mxu0 0.0
        %4029 = vmatprep.subr.mxu0 0.0
        %4030 = vmatpush1.msra.mxu0 0.0
        %4031 = vmatprep.subr.mxu0 0.0
        %4032 = vmatpush1.msra.mxu0 0.0
        %4033 = vmatprep.subr.mxu0 0.0
        %4034 = vmatpush1.msra.mxu0 0.0
        %4035 = vmatprep.subr.mxu0 0.0
        %4036 = vmatpush1.msra.mxu0 0.0
        %4037 = vmatprep.subr.mxu0 0.0
        %4038 = vmatpush1.msra.mxu0 0.0
        %4039 = vmatprep.subr.mxu0 0.0
        %4040 = vmatpush1.msra.mxu0 0.0
        %4041 = vmatprep.subr.mxu0 0.0
        %4042 = vmatpush1.msra.mxu0 0.0
        %4043 = vmatprep.subr.mxu0 0.0
        %4044 = vmatpush1.msra.mxu0 0.0
        %4045 = vmatprep.subr.mxu0 0.0
        %4046 = vmatpush1.msra.mxu0 0.0
        %4047 = vmatprep.subr.mxu0 0.0
        %4048 = vmatpush1.msra.mxu0 0.0
        %4049 = vmatprep.subr.mxu0 0.0
        %4050 = vmatpush1.msra.mxu0 0.0
        %4051 = vmatprep.subr.mxu0 0.0
        %4052 = vmatpush1.msra.mxu0 0.0
        %4053 = vmatprep.subr.mxu0 0.0
        %4054 = vmatpush1.msra.mxu0 0.0
        %4055 = vmatprep.subr.mxu0 0.0
        %4056 = vmatpush1.msra.mxu0 0.0
        %4057 = vmatprep.subr.mxu0 0.0
        %4058 = vmatpush1.msra.mxu0 0.0
        %4059 = vmatprep.subr.mxu0 0.0
        %4060 = vmatpush1.msra.mxu0 0.0
        %4061 = vmatprep.subr.mxu0 0.0
        %4062 = vmatpush1.msra.mxu0 0.0
        %4063 = vmatprep.subr.mxu0 0.0
        %4064 = vmatpush1.msra.mxu0 0.0
        %4065 = vmatprep.subr.mxu0 0.0
        %4066 = vmatpush1.msra.mxu0 0.0
        %4067 = vmatprep.subr.mxu0 0.0
        %4068 = vmatpush1.msra.mxu0 0.0
        %4069 = vmatprep.subr.mxu0 0.0
        %4070 = vmatpush1.msra.mxu0 0.0
        %4071 = vmatprep.subr.mxu0 0.0
        %4072 = vmatpush1.msra.mxu0 0.0
        %4073 = vmatprep.subr.mxu0 0.0
        %4074 = vmatpush1.msra.mxu0 0.0
        %4075 = vmatprep.mubr.f32.mxu0 0.0
        %4076 = vmatmul.mubr.f32.gmra.mrb[0].mxu0 %v4006
        %v4077 = vpop.f32.mrb[0].mxu0
        %v4078 = vadd.f32 0.0, %v4077
        %v4079 = vpop.f32.mrb[0].mxu0
        %4080 = vmatprep.mubr.f32.mxu0 0.0
        %4081 = vmatmul.mubr.f32.gmra.mrb[0].mxu0 %v4009
        %v4082 = vpop.f32.mrb[0].mxu0
        %v4083 = vadd.f32 0.0, %v4082
        %v4084 = vpop.f32.mrb[0].mxu0
        %4085 = vdwg.mxu0
        %v4086 = vsel %vm662, %v3997, 0.0
        %v4087 = vsel %vm662, %v4078, 0.0
        %v4088 = vadd.f32 %v4086, %v4087
        %v4089 = vsel %vm662, %v4002, 0.0
        %v4090 = vsel %vm662, %v4083, 0.0
        %v4091 = vadd.f32 %v4089, %v4090
        %v4092 = vadd.f32 %v4088, %v3399
        %v4093 = vadd.f32 %v4091, %v3400
        %v4094 = vsel %vm662, %v4092, 0.0
        %4095 = vadd.xlane.f32.xlu0 %v4094
        %v4096 = vpop.xlane.xlu0 %4095
        %v4097 = vsel %vm662, %v4093, 0.0
        %4098 = vadd.xlane.f32.xlu0 %v4097
        %v4099 = vpop.xlane.xlu0 %4098
        %v4100 = vmul.f32 %v4096, %v669
        %v4101 = vmul.f32 %v4099, %v669
        %v4102 = vsub.f32 %v4092, %v4100
        %v4103 = vsub.f32 %v4093, %v4101
        %v4104 = vmul.f32 %v4102, %v4102
        %v4105 = vmul.f32 %v4103, %v4103
        %v4106 = vsel %vm662, %v4104, 0.0
        %4107 = vadd.xlane.f32.xlu0 %v4106
        %v4108 = vpop.xlane.xlu0 %4107
        %v4109 = vsel %vm662, %v4105, 0.0
        %4110 = vadd.xlane.f32.xlu0 %v4109
        %v4111 = vpop.xlane.xlu0 %4110
        %v4112 = vmul.f32 %v4108, %v669
        %v4113 = vmul.f32 %v4111, %v669
        %v4114 = vadd.f32 %v4112, 1e-06
        %v4115 = vadd.f32 %v4113, 1e-06
        %v4116 = vrsqrt.pop %v4114
        %v4117 = vrsqrt.pop %v4115
        %v4118 = vmul.f32 %v4102, %v4116
        %v4119 = vmul.f32 %v4103, %v4117
        %v4120 = vmul.f32 %v4118, %v3216
        %v4121 = vmul.f32 %v4119, %v3216
        %v4122 = vadd.f32 %v4120, %v3222
        %v4123 = vadd.f32 %v4121, %v3222
        %v4125 = vsel %vm662, %v4122, 0
        %v4128 = vsel %vm662, %v4123, 0
        %4130 = vmatprep.subr.mxu0 0.0
        %4131 = vmatpush1.msra.mxu0 %v2473
        %4132 = vmatprep.subr.mxu0 0.0
        %4133 = vmatpush1.msra.mxu0 %v2474
        %4134 = vmatprep.subr.mxu0 0.0
        %4135 = vmatpush1.msra.mxu0 %v2475
        %4136 = vmatprep.subr.mxu0 0.0
        %4137 = vmatpush1.msra.mxu0 %v2476
        %4138 = vmatprep.subr.mxu0 0.0
        %4139 = vmatpush1.msra.mxu0 0.0
        %4140 = vmatprep.subr.mxu0 0.0
        %4141 = vmatpush1.msra.mxu0 0.0
        %4142 = vmatprep.subr.mxu0 0.0
        %4143 = vmatpush1.msra.mxu0 0.0
        %4144 = vmatprep.subr.mxu0 0.0
        %4145 = vmatpush1.msra.mxu0 0.0
        %4146 = vmatprep.subr.mxu0 0.0
        %4147 = vmatpush1.msra.mxu0 0.0
        %4148 = vmatprep.subr.mxu0 0.0
        %4149 = vmatpush1.msra.mxu0 0.0
        %4150 = vmatprep.subr.mxu0 0.0
        %4151 = vmatpush1.msra.mxu0 0.0
        %4152 = vmatprep.subr.mxu0 0.0
        %4153 = vmatpush1.msra.mxu0 0.0
        %4154 = vmatprep.subr.mxu0 0.0
        %4155 = vmatpush1.msra.mxu0 0.0
        %4156 = vmatprep.subr.mxu0 0.0
        %4157 = vmatpush1.msra.mxu0 0.0
        %4158 = vmatprep.subr.mxu0 0.0
        %4159 = vmatpush1.msra.mxu0 0.0
        %4160 = vmatprep.subr.mxu0 0.0
        %4161 = vmatpush1.msra.mxu0 0.0
        %4162 = vmatprep.subr.mxu0 0.0
        %4163 = vmatpush1.msra.mxu0 0.0
        %4164 = vmatprep.subr.mxu0 0.0
        %4165 = vmatpush1.msra.mxu0 0.0
        %4166 = vmatprep.subr.mxu0 0.0
        %4167 = vmatpush1.msra.mxu0 0.0
        %4168 = vmatprep.subr.mxu0 0.0
        %4169 = vmatpush1.msra.mxu0 0.0
        %4170 = vmatprep.subr.mxu0 0.0
        %4171 = vmatpush1.msra.mxu0 0.0
        %4172 = vmatprep.subr.mxu0 0.0
        %4173 = vmatpush1.msra.mxu0 0.0
        %4174 = vmatprep.subr.mxu0 0.0
        %4175 = vmatpush1.msra.mxu0 0.0
        %4176 = vmatprep.subr.mxu0 0.0
        %4177 = vmatpush1.msra.mxu0 0.0
        %4178 = vmatprep.subr.mxu0 0.0
        %4179 = vmatpush1.msra.mxu0 0.0
        %4180 = vmatprep.subr.mxu0 0.0
        %4181 = vmatpush1.msra.mxu0 0.0
        %4182 = vmatprep.subr.mxu0 0.0
        %4183 = vmatpush1.msra.mxu0 0.0
        %4184 = vmatprep.subr.mxu0 0.0
        %4185 = vmatpush1.msra.mxu0 0.0
        %4186 = vmatprep.subr.mxu0 0.0
        %4187 = vmatpush1.msra.mxu0 0.0
        %4188 = vmatprep.subr.mxu0 0.0
        %4189 = vmatpush1.msra.mxu0 0.0
        %4190 = vmatprep.subr.mxu0 0.0
        %4191 = vmatpush1.msra.mxu0 0.0
        %4192 = vmatprep.subr.mxu0 0.0
        %4193 = vmatpush1.msra.mxu0 0.0
        %4194 = vmatprep.mubr.f32.mxu0 0.0
        %4195 = vmatmul.mubr.f32.gmra.mrb[0].mxu0 %v4125
        %v4196 = vpop.f32.mrb[0].mxu0
        %v4197 = vadd.f32 %v3229, %v4196
        %v4198 = vpop.f32.mrb[0].mxu0
        %4199 = vmatprep.mubr.f32.mxu0 0.0
        %4200 = vmatmul.mubr.f32.gmra.mrb[0].mxu0 %v4128
        %v4201 = vpop.f32.mrb[0].mxu0
        %v4202 = vadd.f32 %v3229, %v4201
        %v4203 = vpop.f32.mrb[0].mxu0
        %4204 = vdwg.mxu0
        %v4205 = vmax.f32 %v4197, 0.0
        %v4206 = vmax.f32 %v4202, 0.0
        %v4208 = vsel %vm1493, %v4205, 0
        %v4211 = vsel %vm1493, %v4206, 0
        %4213 = vmatprep.subr.mxu0 0.0
        %4214 = vmatpush1.msra.mxu0 %v2480
        %4215 = vmatprep.subr.mxu0 0.0
        %4216 = vmatpush1.msra.mxu0 %v2481
        %4217 = vmatprep.subr.mxu0 0.0
        %4218 = vmatpush1.msra.mxu0 %v2482
        %4219 = vmatprep.subr.mxu0 0.0
        %4220 = vmatpush1.msra.mxu0 %v2483
        %4221 = vmatprep.subr.mxu0 0.0
        %4222 = vmatpush1.msra.mxu0 %v2484
        %4223 = vmatprep.subr.mxu0 0.0
        %4224 = vmatpush1.msra.mxu0 %v2485
        %4225 = vmatprep.subr.mxu0 0.0
        %4226 = vmatpush1.msra.mxu0 %v2486
        %4227 = vmatprep.subr.mxu0 0.0
        %4228 = vmatpush1.msra.mxu0 %v2487
        %4229 = vmatprep.subr.mxu0 0.0
        %4230 = vmatpush1.msra.mxu0 0.0
        %4231 = vmatprep.subr.mxu0 0.0
        %4232 = vmatpush1.msra.mxu0 0.0
        %4233 = vmatprep.subr.mxu0 0.0
        %4234 = vmatpush1.msra.mxu0 0.0
        %4235 = vmatprep.subr.mxu0 0.0
        %4236 = vmatpush1.msra.mxu0 0.0
        %4237 = vmatprep.subr.mxu0 0.0
        %4238 = vmatpush1.msra.mxu0 0.0
        %4239 = vmatprep.subr.mxu0 0.0
        %4240 = vmatpush1.msra.mxu0 0.0
        %4241 = vmatprep.subr.mxu0 0.0
        %4242 = vmatpush1.msra.mxu0 0.0
        %4243 = vmatprep.subr.mxu0 0.0
        %4244 = vmatpush1.msra.mxu0 0.0
        %4245 = vmatprep.subr.mxu0 0.0
        %4246 = vmatpush1.msra.mxu0 0.0
        %4247 = vmatprep.subr.mxu0 0.0
        %4248 = vmatpush1.msra.mxu0 0.0
        %4249 = vmatprep.subr.mxu0 0.0
        %4250 = vmatpush1.msra.mxu0 0.0
        %4251 = vmatprep.subr.mxu0 0.0
        %4252 = vmatpush1.msra.mxu0 0.0
        %4253 = vmatprep.subr.mxu0 0.0
        %4254 = vmatpush1.msra.mxu0 0.0
        %4255 = vmatprep.subr.mxu0 0.0
        %4256 = vmatpush1.msra.mxu0 0.0
        %4257 = vmatprep.subr.mxu0 0.0
        %4258 = vmatpush1.msra.mxu0 0.0
        %4259 = vmatprep.subr.mxu0 0.0
        %4260 = vmatpush1.msra.mxu0 0.0
        %4261 = vmatprep.subr.mxu0 0.0
        %4262 = vmatpush1.msra.mxu0 0.0
        %4263 = vmatprep.subr.mxu0 0.0
        %4264 = vmatpush1.msra.mxu0 0.0
        %4265 = vmatprep.subr.mxu0 0.0
        %4266 = vmatpush1.msra.mxu0 0.0
        %4267 = vmatprep.subr.mxu0 0.0
        %4268 = vmatpush1.msra.mxu0 0.0
        %4269 = vmatprep.subr.mxu0 0.0
        %4270 = vmatpush1.msra.mxu0 0.0
        %4271 = vmatprep.subr.mxu0 0.0
        %4272 = vmatpush1.msra.mxu0 0.0
        %4273 = vmatprep.subr.mxu0 0.0
        %4274 = vmatpush1.msra.mxu0 0.0
        %4275 = vmatprep.subr.mxu0 0.0
        %4276 = vmatpush1.msra.mxu0 0.0
        %4277 = vmatprep.mubr.f32.mxu0 0.0
        %4278 = vmatmul.mubr.f32.gmra.mrb[0].mxu0 %v4208
        %v4279 = vpop.f32.mrb[0].mxu0
        %v4280 = vadd.f32 %v3317, %v4279
        %v4281 = vpop.f32.mrb[0].mxu0
        %4282 = vmatprep.mubr.f32.mxu0 0.0
        %4283 = vmatmul.mubr.f32.gmra.mrb[0].mxu0 %v4211
        %v4284 = vpop.f32.mrb[0].mxu0
        %v4285 = vadd.f32 %v3317, %v4284
        %v4286 = vpop.f32.mrb[0].mxu0
        %4287 = vdwg.mxu0
        %v4288 = vadd.f32 %v4280, %v4092
        %v4289 = vadd.f32 %v4285, %v4093
        %4290 = vst.msk [vmem:[%s425] sm:$0xff] %vm662, %v4288
        %4291 = vst.msk [vmem:[%s425 + $0x8] sm:$0xff] %vm662, %v4289
        %s4292 = sand.u32 %s279, 1
        %s4293 = scalar_lea.sflag [#allocation3], %s4292
        %s4294 = sand.u32 %s279, 1
        %s4295 = smul.addr %s4294, 16
        %s4296 = scalar_lea.vmem [#allocation2], %s4295
        %s4297 = sand.u32 %s305, 1
        %s4298 = scalar_lea.sflag [#allocation5], %s4297
        %s4299 = sand.u32 %s305, 1
        %s4300 = smul.addr %s4299, 32
        %s4301 = scalar_lea.vmem [#allocation4], %s4300
        // Predicated region
        $region65: #{tpu_custom_call.1} parent=63 // pred_check
          %p4302 = pneg %p289
        $region66: #{tpu_custom_call.1} parent=63 // pred_check_branch
          %4304 = sbr.rel (%p4302) target = $region68
        $region67: #{tpu_custom_call.1} parent=63 // pred_region
          %s4306 = ssub.s32 256, 256
          %4307 = vsyncadd %s4293, %s4306
          %s4308 = smul.addr %s30, 2
          %s4309 = smul.addr %s4308, 128
          %s4310 = scalar_lea.hbm %s11, %s4309
          %s4311 = sshll.u32 %s4296, 4
          %s4312 = int_to_ptr.vmem [resolvable:$true] %s4311
          %4317 = dma.vmem_to_hbm [thread:$0]  %s4312, 256, %s4310, %s4293, 128, 128, 8
        $region68: #{tpu_custom_call.1} parent=63 // pred_fallthru
          _
        // Predicated region
        $region69: #{tpu_custom_call.1} parent=63 // pred_check
          %p4318 = pneg %p315
        $region70: #{tpu_custom_call.1} parent=63 // pred_check_branch
          %4320 = sbr.rel (%p4318) target = $region72
        $region71: #{tpu_custom_call.1} parent=63 // pred_region
          %s4322 = ssub.s32 512, 512
          %4323 = vsyncadd %s4298, %s4322
          %s4324 = smul.addr %s30, 4
          %s4325 = smul.addr %s4324, 128
          %s4326 = scalar_lea.hbm %s12, %s4325
          %s4327 = sshll.u32 %s4301, 4
          %s4328 = int_to_ptr.vmem [resolvable:$true] %s4327
          %4333 = dma.vmem_to_hbm [thread:$0]  %s4328, 512, %s4326, %s4298, 128, 128, 8
        $region72: #{tpu_custom_call.1} parent=63 // pred_fallthru
          _
      $region64: #{tpu_custom_call.1} parent=5 // pred_fallthru
        _
      %p4334 = scmp.le.s32.totalorder 2, %s25
      // Predicated region
      $region73: #{tpu_custom_call.1} parent=5 // pred_check
        %p4335 = pneg %p4334
      $region74: #{tpu_custom_call.1} parent=5 // pred_check_branch
        %4337 = sbr.rel (%p4335) target = $region76
      $region75: #{tpu_custom_call.1} parent=5 // pred_region
        %s4338 = ssub.s32 %s25, 2
        // Predicated region
        $region77: #{tpu_custom_call.1} parent=75 // pred_check
          %p4339 = pneg %p295
        $region78: #{tpu_custom_call.1} parent=75 // pred_check_branch
          %4341 = sbr.rel (%p4339) target = $region80
        $region79: #{tpu_custom_call.1} parent=75 // pred_region
          %s4342 = sand.u32 %s280, 1
          %s4343 = scalar_lea.sflag [#allocation3], %s4342
          %s4344 = sand.u32 %s280, 1
          %s4345 = smul.addr %s4344, 16
          %s4346 = scalar_lea.vmem [#allocation2], %s4345
          %4347 = dma.done %s4343, 256
        $region80: #{tpu_custom_call.1} parent=75 // pred_fallthru
          _
        // Predicated region
        $region81: #{tpu_custom_call.1} parent=75 // pred_check
          %p4348 = pneg %p321
        $region82: #{tpu_custom_call.1} parent=75 // pred_check_branch
          %4350 = sbr.rel (%p4348) target = $region84
        $region83: #{tpu_custom_call.1} parent=75 // pred_region
          %s4351 = sand.u32 %s306, 1
          %s4352 = scalar_lea.sflag [#allocation5], %s4351
          %s4353 = sand.u32 %s306, 1
          %s4354 = smul.addr %s4353, 32
          %s4355 = scalar_lea.vmem [#allocation4], %s4354
          %4356 = dma.done %s4352, 512
        $region84: #{tpu_custom_call.1} parent=75 // pred_fallthru
          _
      $region76: #{tpu_custom_call.1} parent=5 // pred_fallthru
        _
    $region6: #{tpu_custom_call.1} parent=1 // loop_footer
      %s29 = sadd.s32 1, %s25
    $region7: #{tpu_custom_call.1} parent=1 // loop_footer_branch
      %24 = sbr.rel target = $region3
    $region8: #{tpu_custom_call.1} parent=1 // loop_exit
      _
    %4357 = vsyncpa [#allocation3], 1
    %s4358 = scalar_lea.sflag [#allocation3], 1
    %4359 = vsyncpa %s4358, 1
    %4360 = vsyncpa [#allocation5], 1
    %s4361 = scalar_lea.sflag [#allocation5], 1
    %4362 = vsyncpa %s4361, 1

</llo_original>
